<compile_context>
chip_gen: v7x
topology: tpu7x:2x2x1
jax: 0.10.0
libtpu: 0.0.40
codegen_flags: <defaults>
</compile_context>

<pallas_src>
import functools

import jax
import jax.numpy as jnp
from jax import lax
from jax.experimental import pallas as pl
from jax.experimental.pallas import tpu as pltpu


# ----------------------------- Pallas kernel --------------------------------

def _vq_kernel(x_ref, e_ref, et_ref, e2_ref,
               q_ref, idx_ref, sq_ref, cnt_ref, dw_ref,
               *, m_valid, tm, tiles_per_core, num_embeddings):
    """Fused VQ step for one tile of tm flattened input rows.

    x_ref  : (tm, D)        input rows (unpadded; trailing OOB rows masked)
    e_ref  : (K, D)         codebook (grid-invariant)
    et_ref : (D, K)         codebook pre-transposed for the distance matmul
    e2_ref : (1, K)         per-code squared norms
    q_ref  : (tm, D)        quantized rows                      [per-tile output]
    idx_ref: (tm, 1) int32  argmin code index per row           [per-tile output]
    sq_ref : (1, 1, D)      per-lane partial sum of (q - x)^2   [per-core accum]
    cnt_ref: (1, 1, K)      per-code assignment counts          [per-core accum]
    dw_ref : (1, K, D)      encodings^T @ x                     [per-core accum]
    """
    c = pl.program_id(0)          # core-split axis ("parallel", v7x dual-TC)
    i = pl.program_id(1)          # row-tile axis within this core ("arbitrary")

    @pl.when(i == 0)
    def _():
        sq_ref[...] = jnp.zeros_like(sq_ref)
        cnt_ref[...] = jnp.zeros_like(cnt_ref)
        dw_ref[...] = jnp.zeros_like(dw_ref)

    x = x_ref[...]                                                 # (tm, D)

    # distance (up to a per-row constant): ||e||^2 - 2 x.e^T   (MXU, f32 acc)
    scores = jnp.dot(x, et_ref[...], preferred_element_type=jnp.float32)  # (tm, K)
    d = e2_ref[...] - 2.0 * scores                                 # (tm, K)

    # argmin with first-min tie-break (matches torch.argmin / jnp.argmin)
    dmin = jnp.min(d, axis=-1, keepdims=True)
    lane = lax.broadcasted_iota(jnp.int32, d.shape, 1)
    first = jnp.min(jnp.where(d == dmin, lane, num_embeddings),
                    axis=-1, keepdims=True)                        # (tm, 1) int32

    # Mask rows that are only grid padding so they never touch the statistics.
    tile = c * tiles_per_core + i
    row = lax.broadcasted_iota(jnp.int32, (tm, 1), 0) + tile * tm
    valid = row < m_valid                                          # (tm, 1) bool

    # One-hot encodings live only in vregs/VMEM — never written to HBM.
    enc = jnp.where((lane == first) & valid, 1.0, 0.0)             # (tm, K)

    # quantized = encodings @ codebook  (exactly the PyTorch formulation, MXU)
    q = jnp.dot(enc, e_ref[...], preferred_element_type=jnp.float32)  # (tm, D)

    q_ref[...] = q
    idx_ref[...] = first

    # ---- fused statistics epilogue (no extra HBM passes over x / q / enc) ---
    diff = jnp.where(valid, q - x, 0.0)
    sq_ref[...] += jnp.sum(diff * diff, axis=0, keepdims=True)[None]   # (1,1,D)
    cnt_ref[...] += jnp.sum(enc, axis=0, keepdims=True)[None]          # (1,1,K)
    dw_ref[...] += lax.dot_general(                                    # (1,K,D)
        enc, x, (((0,), (0,)), ((), ())),
        preferred_element_type=jnp.float32)[None]


# ------------------------------ host wrapper ---------------------------------

def _round_up(v, m):
    return ((v + m - 1) // m) * m


def _cdiv(a, b):
    return (a + b - 1) // b


def vq_ema_forward(inputs_nchw, embedding_w, ema_cluster_size, ema_w,
                   commitment_cost, decay, epsilon=1e-5, training=True,
                   row_tile=1024):
    """Forward of VectorQuantizerEMA.

    Returns (loss, quantized_nchw, perplexity, encodings, new_state) where
    new_state = (ema_cluster_size, ema_w, embedding_weight) after the EMA
    update (unchanged when training=False).  Matches the PyTorch forward.
    """
    x_nhwc = jnp.transpose(inputs_nchw, (0, 2, 3, 1)).astype(jnp.float32)
    N, H, W, D = x_nhwc.shape
    K = embedding_w.shape[0]
    flat = x_nhwc.reshape(-1, D)                 # (M, D) — fed to the kernel as-is
    M = flat.shape[0]

    # Row tiling: big tiles (grid-step overhead amortization) but no bigger
    # than needed for small problems.
    tm = min(row_tile, max(256, _round_up(M, 256)))
    n_tiles = _cdiv(M, tm)
    n_cores = 2 if n_tiles >= 2 else 1           # v7x: 2 TCs; harmless on v5e/v6e
    tpc = _cdiv(n_tiles, n_cores)                # row tiles per core
    n_total = n_cores * tpc                      # noqa: F841 (documentation)

    e = embedding_w.astype(jnp.float32)          # (K, D)  for quantize / dw
    e_t = e.T                                    # (D, K)  pre-transposed distances
    e2 = jnp.sum(e * e, axis=-1).reshape(1, K)   # (1, K)

    kern = functools.partial(_vq_kernel, m_valid=M, tm=tm,
                             tiles_per_core=tpc, num_embeddings=K)

    q, idx, sq_p, cnt_p, dw_p = pl.pallas_call(
        kern,
        out_shape=(
            jax.ShapeDtypeStruct((M, D), jnp.float32),           # quantized
            jax.ShapeDtypeStruct((M, 1), jnp.int32),             # argmin indices
            jax.ShapeDtypeStruct((n_cores, 1, D), jnp.float32),  # sum (q-x)^2
            jax.ShapeDtypeStruct((n_cores, 1, K), jnp.float32),  # counts
            jax.ShapeDtypeStruct((n_cores, K, D), jnp.float32),  # dw = enc^T @ x
        ),
        grid_spec=pltpu.PrefetchScalarGridSpec(
            num_scalar_prefetch=0,
            grid=(n_cores, tpc),
            in_specs=[
                pl.BlockSpec((tm, D), lambda c, i: (c * tpc + i, 0)),   # x tile
                pl.BlockSpec((K, D), lambda c, i: (0, 0)),              # codebook
                pl.BlockSpec((D, K), lambda c, i: (0, 0)),              # codebook^T
                pl.BlockSpec((1, K), lambda c, i: (0, 0)),              # ||e||^2
            ],
            out_specs=(
                pl.BlockSpec((tm, D), lambda c, i: (c * tpc + i, 0)),
                pl.BlockSpec((tm, 1), lambda c, i: (c * tpc + i, 0)),
                pl.BlockSpec((1, 1, D), lambda c, i: (c, 0, 0)),   # per-core accum
                pl.BlockSpec((1, 1, K), lambda c, i: (c, 0, 0)),   # per-core accum
                pl.BlockSpec((1, K, D), lambda c, i: (c, 0, 0)),   # per-core accum
            ),
        ),
        compiler_params=pltpu.CompilerParams(
            dimension_semantics=("parallel", "arbitrary"),
            # Footprint here is < 1 MiB; raise if tm / D / K are scaled up.
            vmem_limit_bytes=32 * 1024 * 1024),
    )(flat, e, e_t, e2)

    counts = jnp.sum(cnt_p, axis=(0, 1))          # (K,)   summed over core partials
    dw = jnp.sum(dw_p, axis=0)                    # (K, D)
    sq_sum = jnp.sum(sq_p)

    # TODO(synk): forward-only — gradients of the commitment loss w.r.t. the
    # inputs would need a custom_vjp (or recomputing the MSE in the wrapper
    # from stop_gradient(quantized) and x).
    e_latent_loss = sq_sum / (M * D)              # == F.mse_loss(quantized, x)
    loss = commitment_cost * e_latent_loss

    quantized_nhwc = q.reshape(N, H, W, D)
    # Straight-through estimator: forward value == quantized.
    quantized_st = x_nhwc + lax.stop_gradient(quantized_nhwc - x_nhwc)
    quantized_out = jnp.transpose(quantized_st, (0, 3, 1, 2))

    # Dense one-hot only materialized here, because the module returns it.
    encodings = jax.nn.one_hot(idx[:, 0], K, dtype=jnp.float32)

    avg_probs = counts / M
    perplexity = jnp.exp(-jnp.sum(avg_probs * jnp.log(avg_probs + 1e-10)))

    if training:
        new_cs = ema_cluster_size * decay + (1.0 - decay) * counts
        n = jnp.sum(new_cs)
        new_cs = (new_cs + epsilon) / (n + K * epsilon) * n
        new_ema_w = ema_w * decay + (1.0 - decay) * dw
        new_emb = new_ema_w / new_cs[:, None]
        new_state = (new_cs, new_ema_w, new_emb)
    else:
        new_state = (ema_cluster_size, ema_w, embedding_w)

    return loss, quantized_out, perplexity, encodings, new_state


# ------------------------------- reference -----------------------------------

def vq_ema_reference(inputs_nchw, embedding_w, ema_cluster_size, ema_w,
                     commitment_cost, decay, epsilon=1e-5, training=True):
    inputs = jnp.transpose(inputs_nchw, (0, 2, 3, 1)).astype(jnp.float32)
    input_shape = inputs.shape
    K, D = embedding_w.shape
    flat = inputs.reshape(-1, D)
    distances = (jnp.sum(flat ** 2, axis=1, keepdims=True)
                 + jnp.sum(embedding_w ** 2, axis=1)
                 - 2.0 * flat @ embedding_w.T)
    idx = jnp.argmin(distances, axis=1)
    encodings = jax.nn.one_hot(idx, K, dtype=jnp.float32)
    quantized = (encodings @ embedding_w).reshape(input_shape)
    e_latent_loss = jnp.mean((quantized - inputs) ** 2)
    loss = commitment_cost * e_latent_loss
    quantized = inputs + (quantized - inputs)
    avg_probs = jnp.mean(encodings, axis=0)
    perplexity = jnp.exp(-jnp.sum(avg_probs * jnp.log(avg_probs + 1e-10)))
    if training:
        cs = ema_cluster_size * decay + (1.0 - decay) * jnp.sum(encodings, 0)
        n = jnp.sum(cs)
        cs = (cs + epsilon) / (n + K * epsilon) * n
        dw = encodings.T @ flat
        ema_w_new = ema_w * decay + (1.0 - decay) * dw
        state = (cs, ema_w_new, ema_w_new / cs[:, None])
    else:
        state = (ema_cluster_size, ema_w, embedding_w)
    return loss, jnp.transpose(quantized, (0, 3, 1, 2)), perplexity, encodings, state


# ---------------------------------- main --------------------------------------

if __name__ == "__main__":
    key = jax.random.PRNGKey(0)
    kx, ke, kw = jax.random.split(key, 3)

    # Small shapes consistent with the module: embedding_dim = channels = 16.
    N, C, H, W = 2, 16, 16, 16
    num_embeddings = 32
    commitment_cost = 0.25
    decay = 0.99

    x = jax.random.normal(kx, (N, C, H, W), jnp.float32)
    embedding_w = jax.random.normal(ke, (num_embeddings, C), jnp.float32)
    ema_w = jax.random.normal(kw, (num_embeddings, C), jnp.float32)
    ema_cluster_size = jnp.zeros((num_embeddings,), jnp.float32)

    out = vq_ema_forward(x, embedding_w, ema_cluster_size, ema_w,
                         commitment_cost, decay, training=True)
    loss, quantized, perplexity, encodings, state = jax.block_until_ready(out)

    r_loss, r_q, r_ppl, r_enc, r_state = vq_ema_reference(
        x, embedding_w, ema_cluster_size, ema_w, commitment_cost, decay,
        training=True)

    assert quantized.shape == (N, C, H, W), quantized.shape
    assert encodings.shape == (N * H * W, num_embeddings), encodings.shape
    assert float(jnp.max(jnp.abs(quantized - r_q))) < 1e-4
    assert float(jnp.abs(loss - r_loss)) < 1e-5
    assert float(jnp.abs(perplexity - r_ppl)) < 1e-3
    assert float(jnp.max(jnp.abs(encodings - r_enc))) < 1e-6
    assert float(jnp.max(jnp.abs(state[0] - r_state[0]))) < 1e-4   # cluster size
    assert float(jnp.max(jnp.abs(state[1] - r_state[1]))) < 1e-4   # ema_w
    assert float(jnp.max(jnp.abs(state[2] - r_state[2]))) < 1e-3   # new embedding

    print("KERNEL_OK")
</pallas_src>

<mosaic_0001>
module attributes {stable_mosaic.version = 11 : i64} {
  func.func @_vq_kernel(%arg0: i32, %arg1: i32, %arg2: memref<512x16xf32, #tpu.memory_space<vmem>>, %arg3: memref<32x16xf32, #tpu.memory_space<vmem>>, %arg4: memref<16x32xf32, #tpu.memory_space<vmem>>, %arg5: memref<1x32xf32, #tpu.memory_space<vmem>>, %arg6: memref<512x16xf32, #tpu.memory_space<vmem>>, %arg7: memref<512x1xi32, #tpu.memory_space<vmem>>, %arg8: memref<1x1x16xf32, #tpu.memory_space<vmem>>, %arg9: memref<1x1x32xf32, #tpu.memory_space<vmem>>, %arg10: memref<1x32x16xf32, #tpu.memory_space<vmem>>) attributes {dimension_semantics = [#tpu.dimension_semantics<parallel>, #tpu.dimension_semantics<arbitrary>], iteration_bounds = array<i64: 1, 1>, scalar_prefetch = 0 : i64, scratch_operands = 0 : i64, tpu.core_type = #tpu.core_type<tc>, window_params = [{transform_indices = @transform_0, window_bounds = array<i64: 512, 16>}, {pipeline_mode = #tpu.pipeline_mode<synchronous>, transform_indices = @transform_1, window_bounds = array<i64: 32, 16>}, {pipeline_mode = #tpu.pipeline_mode<synchronous>, transform_indices = @transform_2, window_bounds = array<i64: 16, 32>}, {pipeline_mode = #tpu.pipeline_mode<synchronous>, transform_indices = @transform_3, window_bounds = array<i64: 1, 32>}, {transform_indices = @transform_4, window_bounds = array<i64: 512, 16>}, {transform_indices = @transform_5, window_bounds = array<i64: 512, 1>}, {transform_indices = @transform_6, window_bounds = array<i64: 1, 1, 16>}, {transform_indices = @transform_7, window_bounds = array<i64: 1, 1, 32>}, {transform_indices = @transform_8, window_bounds = array<i64: 1, 32, 16>}]} {
    %c0_i32 = arith.constant 0 : i32
    %0 = arith.cmpi eq, %arg1, %c0_i32 : i32
    %1 = arith.extui %0 : i1 to i32
    %c0_i32_0 = arith.constant 0 : i32
    %2 = arith.cmpi ne, %1, %c0_i32_0 : i32
    scf.if %2 {
      %cst_41 = arith.constant 0.000000e+00 : f32
      %62 = vector.broadcast %cst_41 : f32 to vector<1x1x16xf32>
      %c0_42 = arith.constant 0 : index
      %c0_43 = arith.constant 0 : index
      %c0_44 = arith.constant 0 : index
      %63 = vector.load %arg8[%c0_42, %c0_43, %c0_44] : memref<1x1x16xf32, #tpu.memory_space<vmem>>, vector<1x1x16xf32>
      tpu.vector_store %arg8[%c0_42, %c0_43, %c0_44], %62 {strides = array<i32>} : memref<1x1x16xf32, #tpu.memory_space<vmem>>, vector<1x1x16xf32>,
      %cst_45 = arith.constant 0.000000e+00 : f32
      %64 = vector.broadcast %cst_45 : f32 to vector<1x1x32xf32>
      %c0_46 = arith.constant 0 : index
      %c0_47 = arith.constant 0 : index
      %c0_48 = arith.constant 0 : index
      %65 = vector.load %arg9[%c0_46, %c0_47, %c0_48] : memref<1x1x32xf32, #tpu.memory_space<vmem>>, vector<1x1x32xf32>
      tpu.vector_store %arg9[%c0_46, %c0_47, %c0_48], %64 {strides = array<i32>} : memref<1x1x32xf32, #tpu.memory_space<vmem>>, vector<1x1x32xf32>,
      %cst_49 = arith.constant 0.000000e+00 : f32
      %66 = vector.broadcast %cst_49 : f32 to vector<1x32x16xf32>
      %c0_50 = arith.constant 0 : index
      %c0_51 = arith.constant 0 : index
      %c0_52 = arith.constant 0 : index
      %67 = vector.load %arg10[%c0_50, %c0_51, %c0_52] : memref<1x32x16xf32, #tpu.memory_space<vmem>>, vector<1x32x16xf32>
      tpu.vector_store %arg10[%c0_50, %c0_51, %c0_52], %66 {strides = array<i32>} : memref<1x32x16xf32, #tpu.memory_space<vmem>>, vector<1x32x16xf32>,
    } else {
    }
    %c0 = arith.constant 0 : index
    %c0_1 = arith.constant 0 : index
    %3 = vector.load %arg2[%c0, %c0_1] : memref<512x16xf32, #tpu.memory_space<vmem>>, vector<512x16xf32>
    %c0_2 = arith.constant 0 : index
    %c0_3 = arith.constant 0 : index
    %4 = vector.load %arg4[%c0_2, %c0_3] : memref<16x32xf32, #tpu.memory_space<vmem>>, vector<16x32xf32>
    %cst = arith.constant dense<0.000000e+00> : vector<512x32xf32>
    %5 = tpu.matmul %3, %4, %cst {dimension_numbers = #tpu.dot_dimension_numbers<[1], [0], [0], [1], [0, 0, 1, 1], [], []>} : vector<512x16xf32>, vector<16x32xf32>, vector<512x32xf32> -> vector<512x32xf32>
    %c0_4 = arith.constant 0 : index
    %c0_5 = arith.constant 0 : index
    %6 = vector.load %arg5[%c0_4, %c0_5] : memref<1x32xf32, #tpu.memory_space<vmem>>, vector<1x32xf32>
    %cst_6 = arith.constant 2.000000e+00 : f32
    %7 = vector.broadcast %cst_6 : f32 to vector<512x32xf32>
    %8 = arith.mulf %7, %5 : vector<512x32xf32>
    %9 = vector.broadcast %6 : vector<1x32xf32> to vector<512x32xf32>
    %10 = arith.subf %9, %8 : vector<512x32xf32>
    %cst_7 = arith.constant dense<0x7F800000> : vector<512xf32>
    %11 = vector.multi_reduction <minimumf>, %10, %cst_7 [1] : vector<512x32xf32> to vector<512xf32>
    %12 = vector.shape_cast %11 : vector<512xf32> to vector<512x1xf32>
    %13 = tpu.iota {dimensions = array<i32: 1>} : vector<512x32xi32>
    %14 = vector.broadcast %12 : vector<512x1xf32> to vector<512x32xf32>
    %15 = arith.cmpf oeq, %10, %14 : vector<512x32xf32>
    %c32_i32 = arith.constant 32 : i32
    %16 = vector.broadcast %c32_i32 : i32 to vector<512x32xi32>
    %17 = arith.select %15, %13, %16 : vector<512x32xi1>, vector<512x32xi32>
    %cst_8 = arith.constant dense<2147483647> : vector<512xi32>
    %18 = vector.multi_reduction <minsi>, %17, %cst_8 [1] : vector<512x32xi32> to vector<512xi32>
    %19 = vector.shape_cast %18 : vector<512xi32> to vector<512x1xi32>
    %c1_i32 = arith.constant 1 : i32
    %20 = arith.muli %arg0, %c1_i32 : i32
    %21 = arith.addi %20, %arg1 : i32
    %22 = tpu.iota {dimensions = array<i32: 0>} : vector<512x1xi32>
    %c512_i32 = arith.constant 512 : i32
    %23 = arith.muli %21, %c512_i32 : i32
    %24 = vector.broadcast %23 : i32 to vector<512x1xi32>
    %25 = arith.addi %22, %24 : vector<512x1xi32>
    %c512_i32_9 = arith.constant 512 : i32
    %26 = vector.broadcast %c512_i32_9 : i32 to vector<512x1xi32>
    %27 = arith.cmpi slt, %25, %26 : vector<512x1xi32>
    %28 = vector.broadcast %19 : vector<512x1xi32> to vector<512x32xi32>
    %29 = arith.cmpi eq, %13, %28 : vector<512x32xi32>
    %30 = vector.broadcast %27 : vector<512x1xi1> to vector<512x32xi1>
    %31 = arith.andi %29, %30 : vector<512x32xi1>
    %cst_10 = arith.constant 1.000000e+00 : f32
    %cst_11 = arith.constant 0.000000e+00 : f32
    %32 = vector.broadcast %cst_10 : f32 to vector<512x32xf32>
    %33 = vector.broadcast %cst_11 : f32 to vector<512x32xf32>
    %34 = arith.select %31, %32, %33 : vector<512x32xi1>, vector<512x32xf32>
    %c0_12 = arith.constant 0 : index
    %c0_13 = arith.constant 0 : index
    %35 = vector.load %arg3[%c0_12, %c0_13] : memref<32x16xf32, #tpu.memory_space<vmem>>, vector<32x16xf32>
    %cst_14 = arith.constant dense<0.000000e+00> : vector<512x16xf32>
    %36 = tpu.matmul %34, %35, %cst_14 {dimension_numbers = #tpu.dot_dimension_numbers<[1], [0], [0], [1], [0, 0, 1, 1], [], []>} : vector<512x32xf32>, vector<32x16xf32>, vector<512x16xf32> -> vector<512x16xf32>
    %c0_15 = arith.constant 0 : index
    %c0_16 = arith.constant 0 : index
    %37 = vector.load %arg6[%c0_15, %c0_16] : memref<512x16xf32, #tpu.memory_space<vmem>>, vector<512x16xf32>
    tpu.vector_store %arg6[%c0_15, %c0_16], %36 {strides = array<i32>} : memref<512x16xf32, #tpu.memory_space<vmem>>, vector<512x16xf32>,
    %c0_17 = arith.constant 0 : index
    %c0_18 = arith.constant 0 : index
    %38 = vector.load %arg7[%c0_17, %c0_18] : memref<512x1xi32, #tpu.memory_space<vmem>>, vector<512x1xi32>
    tpu.vector_store %arg7[%c0_17, %c0_18], %19 {strides = array<i32>} : memref<512x1xi32, #tpu.memory_space<vmem>>, vector<512x1xi32>,
    %39 = arith.subf %36, %3 : vector<512x16xf32>
    %cst_19 = arith.constant 0.000000e+00 : f32
    %40 = vector.shape_cast %27 : vector<512x1xi1> to vector<512x1xi1>
    %41 = vector.broadcast %40 : vector<512x1xi1> to vector<512x16xi1>
    %42 = vector.broadcast %cst_19 : f32 to vector<512x16xf32>
    %43 = arith.select %41, %39, %42 : vector<512x16xi1>, vector<512x16xf32>
    %c0_20 = arith.constant 0 : index
    %c0_21 = arith.constant 0 : index
    %c0_22 = arith.constant 0 : index
    %44 = vector.load %arg8[%c0_20, %c0_21, %c0_22] : memref<1x1x16xf32, #tpu.memory_space<vmem>>, vector<1x1x16xf32>
    %45 = arith.mulf %43, %43 : vector<512x16xf32>
    %cst_23 = arith.constant dense<0.000000e+00> : vector<16xf32>
    %46 = vector.multi_reduction <add>, %45, %cst_23 [0] : vector<512x16xf32> to vector<16xf32>
    %47 = vector.shape_cast %46 : vector<16xf32> to vector<1x16xf32>
    %48 = vector.shape_cast %47 : vector<1x16xf32> to vector<1x1x16xf32>
    %49 = arith.addf %44, %48 : vector<1x1x16xf32>
    %c0_24 = arith.constant 0 : index
    %c0_25 = arith.constant 0 : index
    %c0_26 = arith.constant 0 : index
    %50 = vector.load %arg8[%c0_24, %c0_25, %c0_26] : memref<1x1x16xf32, #tpu.memory_space<vmem>>, vector<1x1x16xf32>
    tpu.vector_store %arg8[%c0_24, %c0_25, %c0_26], %49 {strides = array<i32>} : memref<1x1x16xf32, #tpu.memory_space<vmem>>, vector<1x1x16xf32>,
    %c0_27 = arith.constant 0 : index
    %c0_28 = arith.constant 0 : index
    %c0_29 = arith.constant 0 : index
    %51 = vector.load %arg9[%c0_27, %c0_28, %c0_29] : memref<1x1x32xf32, #tpu.memory_space<vmem>>, vector<1x1x32xf32>
    %cst_30 = arith.constant dense<0.000000e+00> : vector<32xf32>
    %52 = vector.multi_reduction <add>, %34, %cst_30 [0] : vector<512x32xf32> to vector<32xf32>
    %53 = vector.shape_cast %52 : vector<32xf32> to vector<1x32xf32>
    %54 = vector.shape_cast %53 : vector<1x32xf32> to vector<1x1x32xf32>
    %55 = arith.addf %51, %54 : vector<1x1x32xf32>
    %c0_31 = arith.constant 0 : index
    %c0_32 = arith.constant 0 : index
    %c0_33 = arith.constant 0 : index
    %56 = vector.load %arg9[%c0_31, %c0_32, %c0_33] : memref<1x1x32xf32, #tpu.memory_space<vmem>>, vector<1x1x32xf32>
    tpu.vector_store %arg9[%c0_31, %c0_32, %c0_33], %55 {strides = array<i32>} : memref<1x1x32xf32, #tpu.memory_space<vmem>>, vector<1x1x32xf32>,
    %c0_34 = arith.constant 0 : index
    %c0_35 = arith.constant 0 : index
    %c0_36 = arith.constant 0 : index
    %57 = vector.load %arg10[%c0_34, %c0_35, %c0_36] : memref<1x32x16xf32, #tpu.memory_space<vmem>>, vector<1x32x16xf32>
    %cst_37 = arith.constant dense<0.000000e+00> : vector<32x16xf32>
    %58 = tpu.matmul %34, %3, %cst_37 {dimension_numbers = #tpu.dot_dimension_numbers<[0], [0], [1], [1], [0, 1, 1, 1], [], []>} : vector<512x32xf32>, vector<512x16xf32>, vector<32x16xf32> -> vector<32x16xf32>
    %59 = vector.shape_cast %58 : vector<32x16xf32> to vector<1x32x16xf32>
    %60 = arith.addf %57, %59 : vector<1x32x16xf32>
    %c0_38 = arith.constant 0 : index
    %c0_39 = arith.constant 0 : index
    %c0_40 = arith.constant 0 : index
    %61 = vector.load %arg10[%c0_38, %c0_39, %c0_40] : memref<1x32x16xf32, #tpu.memory_space<vmem>>, vector<1x32x16xf32>
    tpu.vector_store %arg10[%c0_38, %c0_39, %c0_40], %60 {strides = array<i32>} : memref<1x32x16xf32, #tpu.memory_space<vmem>>, vector<1x32x16xf32>,
    return
  }
  func.func @transform_0(%arg0: i32, %arg1: i32) -> (i32, i32) {
    %c1_i32 = arith.constant 1 : i32
    %0 = arith.muli %arg0, %c1_i32 : i32
    %1 = arith.addi %0, %arg1 : i32
    %c0_i32 = arith.constant 0 : i32
    %c0_i32_0 = arith.constant 0 : i32
    return %1, %c0_i32 : i32, i32
  }
  func.func @transform_1(%arg0: i32, %arg1: i32) -> (i32, i32) {
    %c0_i32 = arith.constant 0 : i32
    %c0_i32_0 = arith.constant 0 : i32
    %c0_i32_1 = arith.constant 0 : i32
    return %c0_i32, %c0_i32_0 : i32, i32
  }
  func.func @transform_2(%arg0: i32, %arg1: i32) -> (i32, i32) {
    %c0_i32 = arith.constant 0 : i32
    %c0_i32_0 = arith.constant 0 : i32
    %c0_i32_1 = arith.constant 0 : i32
    return %c0_i32, %c0_i32_0 : i32, i32
  }
  func.func @transform_3(%arg0: i32, %arg1: i32) -> (i32, i32) {
    %c0_i32 = arith.constant 0 : i32
    %c0_i32_0 = arith.constant 0 : i32
    %c0_i32_1 = arith.constant 0 : i32
    return %c0_i32, %c0_i32_0 : i32, i32
  }
  func.func @transform_4(%arg0: i32, %arg1: i32) -> (i32, i32) {
    %c1_i32 = arith.constant 1 : i32
    %0 = arith.muli %arg0, %c1_i32 : i32
    %1 = arith.addi %0, %arg1 : i32
    %c0_i32 = arith.constant 0 : i32
    %c0_i32_0 = arith.constant 0 : i32
    return %1, %c0_i32 : i32, i32
  }
  func.func @transform_5(%arg0: i32, %arg1: i32) -> (i32, i32) {
    %c1_i32 = arith.constant 1 : i32
    %0 = arith.muli %arg0, %c1_i32 : i32
    %1 = arith.addi %0, %arg1 : i32
    %c0_i32 = arith.constant 0 : i32
    %c0_i32_0 = arith.constant 0 : i32
    return %1, %c0_i32 : i32, i32
  }
  func.func @transform_6(%arg0: i32, %arg1: i32) -> (i32, i32, i32) {
    %c0_i32 = arith.constant 0 : i32
    %c0_i32_0 = arith.constant 0 : i32
    %c0_i32_1 = arith.constant 0 : i32
    return %arg0, %c0_i32, %c0_i32_0 : i32, i32, i32
  }
  func.func @transform_7(%arg0: i32, %arg1: i32) -> (i32, i32, i32) {
    %c0_i32 = arith.constant 0 : i32
    %c0_i32_0 = arith.constant 0 : i32
    %c0_i32_1 = arith.constant 0 : i32
    return %arg0, %c0_i32, %c0_i32_0 : i32, i32, i32
  }
  func.func @transform_8(%arg0: i32, %arg1: i32) -> (i32, i32, i32) {
    %c0_i32 = arith.constant 0 : i32
    %c0_i32_0 = arith.constant 0 : i32
    %c0_i32_1 = arith.constant 0 : i32
    return %arg0, %c0_i32, %c0_i32_0 : i32, i32, i32
  }
}

</mosaic_0001>

<llo_original>
// kernel: tpu_custom_call.1
$region0: #{tpu_custom_call.1}
  #allocation0 [shape = 'u32[]', space=smem, size = 0x4, offset = 0x4, fixed_abs, tag = 'smem constant byte address 0x4 - core index']
  #allocation1 [shape = 'u32[144,128]{1,0:T(1,128)}', space=vmem, size = 0x12000, scoped, tag = 'internal scratch']
  %s0 = inlined_call_operand.vmem [shape: f32[512,16], index: 0, kind: input, shape index: {}]
  %s1 = inlined_call_operand.vmem [shape: f32[32,16], index: 1, kind: input, shape index: {}]
  %s2 = inlined_call_operand.vmem [shape: f32[16,32], index: 2, kind: input, shape index: {}]
  %s3 = inlined_call_operand.vmem [shape: f32[1,32], index: 3, kind: input, shape index: {}]
  %s4 = inlined_call_operand.vmem [shape: f32[512,16], index: 4, kind: output, shape index: {0}]
  %s5 = inlined_call_operand.vmem [shape: s32[512,1], index: 5, kind: output, shape index: {1}]
  %s6 = inlined_call_operand.hbm [shape: f32[1,1,16], index: 6, kind: output, shape index: {2}]
  %s7 = inlined_call_operand.hbm [shape: f32[1,1,32], index: 7, kind: output, shape index: {3}]
  %s8 = inlined_call_operand.vmem [shape: f32[1,32,16], index: 8, kind: output, shape index: {4}]
  %9 = xla_tuple %s4, %s5, %s6, %s7, %s8
  %s10 = sld [smem:[#allocation0]]
  $region62: #{tpu_custom_call.1} parent=0
    _
  %s12 = ssub.s32 1, %s10
  %s13 = scalar_select 0, %s12, %s10
  $region1: #{tpu_custom_call.1} parent=0
    #allocation2 [shape = 'u8[512]{0}', space=vmem, size = 0x400, scoped, tag = 'output window, operand 2, single buffered']
    #allocation3 [shape = 's32[1]{0}', space=sflag, size = 0x4, scoped, tag = 'scoped memory for tpu_custom_call.1']
    #allocation4 [shape = 'u8[512]{0}', space=vmem, size = 0x400, scoped, tag = 'output window, operand 3, single buffered']
    #allocation5 [shape = 's32[1]{0}', space=sflag, size = 0x4, scoped, tag = 'scoped memory for tpu_custom_call.1']
    %14 = vsyncpa [#allocation3], 0
    %15 = vsyncpa [#allocation5], 0
    // Predicated region
    $region2: #{tpu_custom_call.1} parent=1 // pred_check
      _
    $region3: #{tpu_custom_call.1} parent=1 // pred_check_branch
      %17 = sbr.rel (0) target = $region5
    $region4: #{tpu_custom_call.1} parent=1 // pred_region
      %s18 = sadd.s32 0, 0
      %s19 = smul.u32 64, %s18
      %p20 = scmp.lt.s32.totalorder %s19, 63
      %s21 = scalar_select %p20, %s19, 63
      %s22 = smul.addr %s21, 8
      %s23 = scalar_lea.vmem %s0, %s22
      %s24 = sadd.s32 0, 0
      %s25 = smul.u32 64, %s24
    $region5: #{tpu_custom_call.1} parent=1 // pred_fallthru
      _
    // Predicated region
    $region6: #{tpu_custom_call.1} parent=1 // pred_check
      _
    $region7: #{tpu_custom_call.1} parent=1 // pred_check_branch
      %27 = sbr.rel (0) target = $region9
    $region8: #{tpu_custom_call.1} parent=1 // pred_region
      _
    $region9: #{tpu_custom_call.1} parent=1 // pred_fallthru
      _
    // Predicated region
    $region10: #{tpu_custom_call.1} parent=1 // pred_check
      _
    $region11: #{tpu_custom_call.1} parent=1 // pred_check_branch
      %29 = sbr.rel (0) target = $region13
    $region12: #{tpu_custom_call.1} parent=1 // pred_region
      _
    $region13: #{tpu_custom_call.1} parent=1 // pred_fallthru
      _
    // Predicated region
    $region14: #{tpu_custom_call.1} parent=1 // pred_check
      _
    $region15: #{tpu_custom_call.1} parent=1 // pred_check_branch
      %31 = sbr.rel (0) target = $region17
    $region16: #{tpu_custom_call.1} parent=1 // pred_region
      _
    $region17: #{tpu_custom_call.1} parent=1 // pred_fallthru
      _
    %s32 = sadd.s32 0, 0
    %s33 = smul.u32 64, %s32
    %p34 = scmp.lt.s32.totalorder %s33, 63
    %s35 = scalar_select %p34, %s33, 63
    %s36 = smul.addr %s35, 8
    %s37 = scalar_lea.vmem %s0, %s36
    %s38 = sadd.s32 0, 0
    %s39 = smul.u32 64, %s38
    %p40 = scmp.lt.s32.totalorder %s39, 63
    %s41 = scalar_select %p40, %s39, 63
    %s42 = smul.addr %s41, 8
    %s43 = scalar_lea.vmem %s4, %s42
    %s44 = sadd.s32 0, 0
    %s45 = smul.u32 64, %s44
    %p46 = scmp.lt.s32.totalorder %s45, 63
    %s47 = scalar_select %p46, %s45, 63
    %s48 = smul.addr %s47, 8
    %s49 = scalar_lea.vmem %s5, %s48
    %s50 = sadd.s32 0, 0
    %s51 = smul.u32 64, %s50
    %p52 = scmp.lt.s32.totalorder %s51, 63
    %s53 = scalar_select %p52, %s51, 63
    %s54 = smul.addr %s53, 8
    %s55 = scalar_lea.vmem %s0, %s54
    %s56 = sadd.s32 0, 0
    %s57 = smul.u32 64, %s56
    %s58 = sadd.s32 0, 0
    %s59 = smul.u32 64, %s58
    %p60 = scmp.lt.s32.totalorder %s59, 63
    %s61 = scalar_select %p60, %s59, 63
    %s62 = smul.addr %s61, 8
    %s63 = scalar_lea.vmem %s4, %s62
    %s64 = sadd.s32 0, 0
    %s65 = smul.u32 64, %s64
    %s66 = sadd.s32 0, 0
    %s67 = smul.u32 64, %s66
    %p68 = scmp.lt.s32.totalorder %s67, 63
    %s69 = scalar_select %p68, %s67, 63
    %s70 = smul.addr %s69, 8
    %s71 = scalar_lea.vmem %s5, %s70
    %s72 = sadd.s32 0, 0
    %s73 = smul.u32 64, %s72
    %p74 = scmp.eq.s32.totalorder 0, 0
    // Predicated region
    $region18: #{tpu_custom_call.1} parent=1 // pred_check
      %p75 = pneg %p74
    $region19: #{tpu_custom_call.1} parent=1 // pred_check_branch
      %77 = sbr.rel (%p75) target = $region21
    $region20: #{tpu_custom_call.1} parent=1 // pred_region
      %vm78 = vcmask 122880
      %79 = vst.msk [vmem:[#allocation2] sm:$0x1] %vm78, 0.0
      %vm80 = vcmask 253952
      %81 = vst.msk [vmem:[#allocation4] sm:$0x1] %vm80, 0.0
      %vm82 = vcmask 130048
      %83 = vst.msk [vmem:[%s8] sm:$0xff] %vm82, 0.0
      %84 = vst.msk [vmem:[%s8 + $0x8] sm:$0xff] %vm82, 0.0
      %85 = vst.msk [vmem:[%s8 + $0x10] sm:$0xff] %vm82, 0.0
      %86 = vst.msk [vmem:[%s8 + $0x18] sm:$0xff] %vm82, 0.0
    $region21: #{tpu_custom_call.1} parent=1 // pred_fallthru
      _
    %v87 = vld [vmem:[%s55] sm:$0xff]
    %v88 = vld [vmem:[%s55 + $0x8] sm:$0xff]
    %v89 = vld [vmem:[%s55 + $0x10] sm:$0xff]
    %v90 = vld [vmem:[%s55 + $0x18] sm:$0xff]
    %v91 = vld [vmem:[%s55 + $0x20] sm:$0xff]
    %v92 = vld [vmem:[%s55 + $0x28] sm:$0xff]
    %v93 = vld [vmem:[%s55 + $0x30] sm:$0xff]
    %v94 = vld [vmem:[%s55 + $0x38] sm:$0xff]
    %v95 = vld [vmem:[%s55 + $0x40] sm:$0xff]
    %v96 = vld [vmem:[%s55 + $0x48] sm:$0xff]
    %v97 = vld [vmem:[%s55 + $0x50] sm:$0xff]
    %v98 = vld [vmem:[%s55 + $0x58] sm:$0xff]
    %v99 = vld [vmem:[%s55 + $0x60] sm:$0xff]
    %v100 = vld [vmem:[%s55 + $0x68] sm:$0xff]
    %v101 = vld [vmem:[%s55 + $0x70] sm:$0xff]
    %v102 = vld [vmem:[%s55 + $0x78] sm:$0xff]
    %v103 = vld [vmem:[%s55 + $0x80] sm:$0xff]
    %v104 = vld [vmem:[%s55 + $0x88] sm:$0xff]
    %v105 = vld [vmem:[%s55 + $0x90] sm:$0xff]
    %v106 = vld [vmem:[%s55 + $0x98] sm:$0xff]
    %v107 = vld [vmem:[%s55 + $0xa0] sm:$0xff]
    %v108 = vld [vmem:[%s55 + $0xa8] sm:$0xff]
    %v109 = vld [vmem:[%s55 + $0xb0] sm:$0xff]
    %v110 = vld [vmem:[%s55 + $0xb8] sm:$0xff]
    %v111 = vld [vmem:[%s55 + $0xc0] sm:$0xff]
    %v112 = vld [vmem:[%s55 + $0xc8] sm:$0xff]
    %v113 = vld [vmem:[%s55 + $0xd0] sm:$0xff]
    %v114 = vld [vmem:[%s55 + $0xd8] sm:$0xff]
    %v115 = vld [vmem:[%s55 + $0xe0] sm:$0xff]
    %v116 = vld [vmem:[%s55 + $0xe8] sm:$0xff]
    %v117 = vld [vmem:[%s55 + $0xf0] sm:$0xff]
    %v118 = vld [vmem:[%s55 + $0xf8] sm:$0xff]
    %v119 = vld [vmem:[%s55 + $0x100] sm:$0xff]
    %v120 = vld [vmem:[%s55 + $0x108] sm:$0xff]
    %v121 = vld [vmem:[%s55 + $0x110] sm:$0xff]
    %v122 = vld [vmem:[%s55 + $0x118] sm:$0xff]
    %v123 = vld [vmem:[%s55 + $0x120] sm:$0xff]
    %v124 = vld [vmem:[%s55 + $0x128] sm:$0xff]
    %v125 = vld [vmem:[%s55 + $0x130] sm:$0xff]
    %v126 = vld [vmem:[%s55 + $0x138] sm:$0xff]
    %v127 = vld [vmem:[%s55 + $0x140] sm:$0xff]
    %v128 = vld [vmem:[%s55 + $0x148] sm:$0xff]
    %v129 = vld [vmem:[%s55 + $0x150] sm:$0xff]
    %v130 = vld [vmem:[%s55 + $0x158] sm:$0xff]
    %v131 = vld [vmem:[%s55 + $0x160] sm:$0xff]
    %v132 = vld [vmem:[%s55 + $0x168] sm:$0xff]
    %v133 = vld [vmem:[%s55 + $0x170] sm:$0xff]
    %v134 = vld [vmem:[%s55 + $0x178] sm:$0xff]
    %v135 = vld [vmem:[%s55 + $0x180] sm:$0xff]
    %v136 = vld [vmem:[%s55 + $0x188] sm:$0xff]
    %v137 = vld [vmem:[%s55 + $0x190] sm:$0xff]
    %v138 = vld [vmem:[%s55 + $0x198] sm:$0xff]
    %v139 = vld [vmem:[%s55 + $0x1a0] sm:$0xff]
    %v140 = vld [vmem:[%s55 + $0x1a8] sm:$0xff]
    %v141 = vld [vmem:[%s55 + $0x1b0] sm:$0xff]
    %v142 = vld [vmem:[%s55 + $0x1b8] sm:$0xff]
    %v143 = vld [vmem:[%s55 + $0x1c0] sm:$0xff]
    %v144 = vld [vmem:[%s55 + $0x1c8] sm:$0xff]
    %v145 = vld [vmem:[%s55 + $0x1d0] sm:$0xff]
    %v146 = vld [vmem:[%s55 + $0x1d8] sm:$0xff]
    %v147 = vld [vmem:[%s55 + $0x1e0] sm:$0xff]
    %v148 = vld [vmem:[%s55 + $0x1e8] sm:$0xff]
    %v149 = vld [vmem:[%s55 + $0x1f0] sm:$0xff]
    %v150 = vld [vmem:[%s55 + $0x1f8] sm:$0xff]
    %v151 = vld [vmem:[%s2] sm:$0xff]
    %v152 = vld [vmem:[%s2 + $0x8] sm:$0xff]
    %vm153 = vcmask 130048
    %v155 = vsel %vm153, %v87, 0
    %v158 = vsel %vm153, %v88, 0
    %v161 = vsel %vm153, %v89, 0
    %v164 = vsel %vm153, %v90, 0
    %v167 = vsel %vm153, %v91, 0
    %v170 = vsel %vm153, %v92, 0
    %v173 = vsel %vm153, %v93, 0
    %v176 = vsel %vm153, %v94, 0
    %v179 = vsel %vm153, %v95, 0
    %v182 = vsel %vm153, %v96, 0
    %v185 = vsel %vm153, %v97, 0
    %v188 = vsel %vm153, %v98, 0
    %v191 = vsel %vm153, %v99, 0
    %v194 = vsel %vm153, %v100, 0
    %v197 = vsel %vm153, %v101, 0
    %v200 = vsel %vm153, %v102, 0
    %v203 = vsel %vm153, %v103, 0
    %v206 = vsel %vm153, %v104, 0
    %v209 = vsel %vm153, %v105, 0
    %v212 = vsel %vm153, %v106, 0
    %v215 = vsel %vm153, %v107, 0
    %v218 = vsel %vm153, %v108, 0
    %v221 = vsel %vm153, %v109, 0
    %v224 = vsel %vm153, %v110, 0
    %v227 = vsel %vm153, %v111, 0
    %v230 = vsel %vm153, %v112, 0
    %v233 = vsel %vm153, %v113, 0
    %v236 = vsel %vm153, %v114, 0
    %v239 = vsel %vm153, %v115, 0
    %v242 = vsel %vm153, %v116, 0
    %v245 = vsel %vm153, %v117, 0
    %v248 = vsel %vm153, %v118, 0
    %v251 = vsel %vm153, %v119, 0
    %v254 = vsel %vm153, %v120, 0
    %v257 = vsel %vm153, %v121, 0
    %v260 = vsel %vm153, %v122, 0
    %v263 = vsel %vm153, %v123, 0
    %v266 = vsel %vm153, %v124, 0
    %v269 = vsel %vm153, %v125, 0
    %v272 = vsel %vm153, %v126, 0
    %v275 = vsel %vm153, %v127, 0
    %v278 = vsel %vm153, %v128, 0
    %v281 = vsel %vm153, %v129, 0
    %v284 = vsel %vm153, %v130, 0
    %v287 = vsel %vm153, %v131, 0
    %v290 = vsel %vm153, %v132, 0
    %v293 = vsel %vm153, %v133, 0
    %v296 = vsel %vm153, %v134, 0
    %v299 = vsel %vm153, %v135, 0
    %v302 = vsel %vm153, %v136, 0
    %v305 = vsel %vm153, %v137, 0
    %v308 = vsel %vm153, %v138, 0
    %v311 = vsel %vm153, %v139, 0
    %v314 = vsel %vm153, %v140, 0
    %v317 = vsel %vm153, %v141, 0
    %v320 = vsel %vm153, %v142, 0
    %v323 = vsel %vm153, %v143, 0
    %v326 = vsel %vm153, %v144, 0
    %v329 = vsel %vm153, %v145, 0
    %v332 = vsel %vm153, %v146, 0
    %v335 = vsel %vm153, %v147, 0
    %v338 = vsel %vm153, %v148, 0
    %v341 = vsel %vm153, %v149, 0
    %v344 = vsel %vm153, %v150, 0
    %346 = vmatprep.subr.mxu0 0.0
    %347 = vmatpush1.msra.mxu0 %v151
    %348 = vmatprep.subr.mxu0 0.0
    %349 = vmatpush1.msra.mxu0 %v152
    %350 = vmatprep.subr.mxu0 0.0
    %351 = vmatpush1.msra.mxu0 0.0
    %352 = vmatprep.subr.mxu0 0.0
    %353 = vmatpush1.msra.mxu0 0.0
    %354 = vmatprep.subr.mxu0 0.0
    %355 = vmatpush1.msra.mxu0 0.0
    %356 = vmatprep.subr.mxu0 0.0
    %357 = vmatpush1.msra.mxu0 0.0
    %358 = vmatprep.subr.mxu0 0.0
    %359 = vmatpush1.msra.mxu0 0.0
    %360 = vmatprep.subr.mxu0 0.0
    %361 = vmatpush1.msra.mxu0 0.0
    %362 = vmatprep.subr.mxu0 0.0
    %363 = vmatpush1.msra.mxu0 0.0
    %364 = vmatprep.subr.mxu0 0.0
    %365 = vmatpush1.msra.mxu0 0.0
    %366 = vmatprep.subr.mxu0 0.0
    %367 = vmatpush1.msra.mxu0 0.0
    %368 = vmatprep.subr.mxu0 0.0
    %369 = vmatpush1.msra.mxu0 0.0
    %370 = vmatprep.subr.mxu0 0.0
    %371 = vmatpush1.msra.mxu0 0.0
    %372 = vmatprep.subr.mxu0 0.0
    %373 = vmatpush1.msra.mxu0 0.0
    %374 = vmatprep.subr.mxu0 0.0
    %375 = vmatpush1.msra.mxu0 0.0
    %376 = vmatprep.subr.mxu0 0.0
    %377 = vmatpush1.msra.mxu0 0.0
    %378 = vmatprep.subr.mxu0 0.0
    %379 = vmatpush1.msra.mxu0 0.0
    %380 = vmatprep.subr.mxu0 0.0
    %381 = vmatpush1.msra.mxu0 0.0
    %382 = vmatprep.subr.mxu0 0.0
    %383 = vmatpush1.msra.mxu0 0.0
    %384 = vmatprep.subr.mxu0 0.0
    %385 = vmatpush1.msra.mxu0 0.0
    %386 = vmatprep.subr.mxu0 0.0
    %387 = vmatpush1.msra.mxu0 0.0
    %388 = vmatprep.subr.mxu0 0.0
    %389 = vmatpush1.msra.mxu0 0.0
    %390 = vmatprep.subr.mxu0 0.0
    %391 = vmatpush1.msra.mxu0 0.0
    %392 = vmatprep.subr.mxu0 0.0
    %393 = vmatpush1.msra.mxu0 0.0
    %394 = vmatprep.subr.mxu0 0.0
    %395 = vmatpush1.msra.mxu0 0.0
    %396 = vmatprep.subr.mxu0 0.0
    %397 = vmatpush1.msra.mxu0 0.0
    %398 = vmatprep.subr.mxu0 0.0
    %399 = vmatpush1.msra.mxu0 0.0
    %400 = vmatprep.subr.mxu0 0.0
    %401 = vmatpush1.msra.mxu0 0.0
    %402 = vmatprep.subr.mxu0 0.0
    %403 = vmatpush1.msra.mxu0 0.0
    %404 = vmatprep.subr.mxu0 0.0
    %405 = vmatpush1.msra.mxu0 0.0
    %406 = vmatprep.subr.mxu0 0.0
    %407 = vmatpush1.msra.mxu0 0.0
    %408 = vmatprep.subr.mxu0 0.0
    %409 = vmatpush1.msra.mxu0 0.0
    %410 = vmatprep.mubr.f32.mxu0 0.0
    %411 = vmatmul.mubr.f32.gmra.mrb[0].mxu0 %v155
    %v412 = vpop.f32.mrb[0].mxu0
    %v413 = vadd.f32 0.0, %v412
    %v414 = vpop.f32.mrb[0].mxu0
    %415 = vmatprep.mubr.f32.mxu0 0.0
    %416 = vmatmul.mubr.f32.gmra.mrb[0].mxu0 %v158
    %v417 = vpop.f32.mrb[0].mxu0
    %v418 = vadd.f32 0.0, %v417
    %v419 = vpop.f32.mrb[0].mxu0
    %420 = vmatprep.mubr.f32.mxu0 0.0
    %421 = vmatmul.mubr.f32.gmra.mrb[0].mxu0 %v161
    %v422 = vpop.f32.mrb[0].mxu0
    %v423 = vadd.f32 0.0, %v422
    %v424 = vpop.f32.mrb[0].mxu0
    %425 = vmatprep.mubr.f32.mxu0 0.0
    %426 = vmatmul.mubr.f32.gmra.mrb[0].mxu0 %v164
    %v427 = vpop.f32.mrb[0].mxu0
    %v428 = vadd.f32 0.0, %v427
    %v429 = vpop.f32.mrb[0].mxu0
    %430 = vmatprep.mubr.f32.mxu0 0.0
    %431 = vmatmul.mubr.f32.gmra.mrb[0].mxu0 %v167
    %v432 = vpop.f32.mrb[0].mxu0
    %v433 = vadd.f32 0.0, %v432
    %v434 = vpop.f32.mrb[0].mxu0
    %435 = vmatprep.mubr.f32.mxu0 0.0
    %436 = vmatmul.mubr.f32.gmra.mrb[0].mxu0 %v170
    %v437 = vpop.f32.mrb[0].mxu0
    %v438 = vadd.f32 0.0, %v437
    %v439 = vpop.f32.mrb[0].mxu0
    %440 = vmatprep.mubr.f32.mxu0 0.0
    %441 = vmatmul.mubr.f32.gmra.mrb[0].mxu0 %v173
    %v442 = vpop.f32.mrb[0].mxu0
    %v443 = vadd.f32 0.0, %v442
    %v444 = vpop.f32.mrb[0].mxu0
    %445 = vmatprep.mubr.f32.mxu0 0.0
    %446 = vmatmul.mubr.f32.gmra.mrb[0].mxu0 %v176
    %v447 = vpop.f32.mrb[0].mxu0
    %v448 = vadd.f32 0.0, %v447
    %v449 = vpop.f32.mrb[0].mxu0
    %450 = vmatprep.mubr.f32.mxu0 0.0
    %451 = vmatmul.mubr.f32.gmra.mrb[0].mxu0 %v179
    %v452 = vpop.f32.mrb[0].mxu0
    %v453 = vadd.f32 0.0, %v452
    %v454 = vpop.f32.mrb[0].mxu0
    %455 = vmatprep.mubr.f32.mxu0 0.0
    %456 = vmatmul.mubr.f32.gmra.mrb[0].mxu0 %v182
    %v457 = vpop.f32.mrb[0].mxu0
    %v458 = vadd.f32 0.0, %v457
    %v459 = vpop.f32.mrb[0].mxu0
    %460 = vmatprep.mubr.f32.mxu0 0.0
    %461 = vmatmul.mubr.f32.gmra.mrb[0].mxu0 %v185
    %v462 = vpop.f32.mrb[0].mxu0
    %v463 = vadd.f32 0.0, %v462
    %v464 = vpop.f32.mrb[0].mxu0
    %465 = vmatprep.mubr.f32.mxu0 0.0
    %466 = vmatmul.mubr.f32.gmra.mrb[0].mxu0 %v188
    %v467 = vpop.f32.mrb[0].mxu0
    %v468 = vadd.f32 0.0, %v467
    %v469 = vpop.f32.mrb[0].mxu0
    %470 = vmatprep.mubr.f32.mxu0 0.0
    %471 = vmatmul.mubr.f32.gmra.mrb[0].mxu0 %v191
    %v472 = vpop.f32.mrb[0].mxu0
    %v473 = vadd.f32 0.0, %v472
    %v474 = vpop.f32.mrb[0].mxu0
    %475 = vmatprep.mubr.f32.mxu0 0.0
    %476 = vmatmul.mubr.f32.gmra.mrb[0].mxu0 %v194
    %v477 = vpop.f32.mrb[0].mxu0
    %v478 = vadd.f32 0.0, %v477
    %v479 = vpop.f32.mrb[0].mxu0
    %480 = vmatprep.mubr.f32.mxu0 0.0
    %481 = vmatmul.mubr.f32.gmra.mrb[0].mxu0 %v197
    %v482 = vpop.f32.mrb[0].mxu0
    %v483 = vadd.f32 0.0, %v482
    %v484 = vpop.f32.mrb[0].mxu0
    %485 = vmatprep.mubr.f32.mxu0 0.0
    %486 = vmatmul.mubr.f32.gmra.mrb[0].mxu0 %v200
    %v487 = vpop.f32.mrb[0].mxu0
    %v488 = vadd.f32 0.0, %v487
    %v489 = vpop.f32.mrb[0].mxu0
    %490 = vmatprep.mubr.f32.mxu0 0.0
    %491 = vmatmul.mubr.f32.gmra.mrb[0].mxu0 %v203
    %v492 = vpop.f32.mrb[0].mxu0
    %v493 = vadd.f32 0.0, %v492
    %v494 = vpop.f32.mrb[0].mxu0
    %495 = vmatprep.mubr.f32.mxu0 0.0
    %496 = vmatmul.mubr.f32.gmra.mrb[0].mxu0 %v206
    %v497 = vpop.f32.mrb[0].mxu0
    %v498 = vadd.f32 0.0, %v497
    %v499 = vpop.f32.mrb[0].mxu0
    %500 = vmatprep.mubr.f32.mxu0 0.0
    %501 = vmatmul.mubr.f32.gmra.mrb[0].mxu0 %v209
    %v502 = vpop.f32.mrb[0].mxu0
    %v503 = vadd.f32 0.0, %v502
    %v504 = vpop.f32.mrb[0].mxu0
    %505 = vmatprep.mubr.f32.mxu0 0.0
    %506 = vmatmul.mubr.f32.gmra.mrb[0].mxu0 %v212
    %v507 = vpop.f32.mrb[0].mxu0
    %v508 = vadd.f32 0.0, %v507
    %v509 = vpop.f32.mrb[0].mxu0
    %510 = vmatprep.mubr.f32.mxu0 0.0
    %511 = vmatmul.mubr.f32.gmra.mrb[0].mxu0 %v215
    %v512 = vpop.f32.mrb[0].mxu0
    %v513 = vadd.f32 0.0, %v512
    %v514 = vpop.f32.mrb[0].mxu0
    %515 = vmatprep.mubr.f32.mxu0 0.0
    %516 = vmatmul.mubr.f32.gmra.mrb[0].mxu0 %v218
    %v517 = vpop.f32.mrb[0].mxu0
    %v518 = vadd.f32 0.0, %v517
    %v519 = vpop.f32.mrb[0].mxu0
    %520 = vmatprep.mubr.f32.mxu0 0.0
    %521 = vmatmul.mubr.f32.gmra.mrb[0].mxu0 %v221
    %v522 = vpop.f32.mrb[0].mxu0
    %v523 = vadd.f32 0.0, %v522
    %v524 = vpop.f32.mrb[0].mxu0
    %525 = vmatprep.mubr.f32.mxu0 0.0
    %526 = vmatmul.mubr.f32.gmra.mrb[0].mxu0 %v224
    %v527 = vpop.f32.mrb[0].mxu0
    %v528 = vadd.f32 0.0, %v527
    %v529 = vpop.f32.mrb[0].mxu0
    %530 = vmatprep.mubr.f32.mxu0 0.0
    %531 = vmatmul.mubr.f32.gmra.mrb[0].mxu0 %v227
    %v532 = vpop.f32.mrb[0].mxu0
    %v533 = vadd.f32 0.0, %v532
    %v534 = vpop.f32.mrb[0].mxu0
    %535 = vmatprep.mubr.f32.mxu0 0.0
    %536 = vmatmul.mubr.f32.gmra.mrb[0].mxu0 %v230
    %v537 = vpop.f32.mrb[0].mxu0
    %v538 = vadd.f32 0.0, %v537
    %v539 = vpop.f32.mrb[0].mxu0
    %540 = vmatprep.mubr.f32.mxu0 0.0
    %541 = vmatmul.mubr.f32.gmra.mrb[0].mxu0 %v233
    %v542 = vpop.f32.mrb[0].mxu0
    %v543 = vadd.f32 0.0, %v542
    %v544 = vpop.f32.mrb[0].mxu0
    %545 = vmatprep.mubr.f32.mxu0 0.0
    %546 = vmatmul.mubr.f32.gmra.mrb[0].mxu0 %v236
    %v547 = vpop.f32.mrb[0].mxu0
    %v548 = vadd.f32 0.0, %v547
    %v549 = vpop.f32.mrb[0].mxu0
    %550 = vmatprep.mubr.f32.mxu0 0.0
    %551 = vmatmul.mubr.f32.gmra.mrb[0].mxu0 %v239
    %v552 = vpop.f32.mrb[0].mxu0
    %v553 = vadd.f32 0.0, %v552
    %v554 = vpop.f32.mrb[0].mxu0
    %555 = vmatprep.mubr.f32.mxu0 0.0
    %556 = vmatmul.mubr.f32.gmra.mrb[0].mxu0 %v242
    %v557 = vpop.f32.mrb[0].mxu0
    %v558 = vadd.f32 0.0, %v557
    %v559 = vpop.f32.mrb[0].mxu0
    %560 = vmatprep.mubr.f32.mxu0 0.0
    %561 = vmatmul.mubr.f32.gmra.mrb[0].mxu0 %v245
    %v562 = vpop.f32.mrb[0].mxu0
    %v563 = vadd.f32 0.0, %v562
    %v564 = vpop.f32.mrb[0].mxu0
    %565 = vmatprep.mubr.f32.mxu0 0.0
    %566 = vmatmul.mubr.f32.gmra.mrb[0].mxu0 %v248
    %v567 = vpop.f32.mrb[0].mxu0
    %v568 = vadd.f32 0.0, %v567
    %v569 = vpop.f32.mrb[0].mxu0
    %570 = vmatprep.mubr.f32.mxu0 0.0
    %571 = vmatmul.mubr.f32.gmra.mrb[0].mxu0 %v251
    %v572 = vpop.f32.mrb[0].mxu0
    %v573 = vadd.f32 0.0, %v572
    %v574 = vpop.f32.mrb[0].mxu0
    %575 = vmatprep.mubr.f32.mxu0 0.0
    %576 = vmatmul.mubr.f32.gmra.mrb[0].mxu0 %v254
    %v577 = vpop.f32.mrb[0].mxu0
    %v578 = vadd.f32 0.0, %v577
    %v579 = vpop.f32.mrb[0].mxu0
    %580 = vmatprep.mubr.f32.mxu0 0.0
    %581 = vmatmul.mubr.f32.gmra.mrb[0].mxu0 %v257
    %v582 = vpop.f32.mrb[0].mxu0
    %v583 = vadd.f32 0.0, %v582
    %v584 = vpop.f32.mrb[0].mxu0
    %585 = vmatprep.mubr.f32.mxu0 0.0
    %586 = vmatmul.mubr.f32.gmra.mrb[0].mxu0 %v260
    %v587 = vpop.f32.mrb[0].mxu0
    %v588 = vadd.f32 0.0, %v587
    %v589 = vpop.f32.mrb[0].mxu0
    %590 = vmatprep.mubr.f32.mxu0 0.0
    %591 = vmatmul.mubr.f32.gmra.mrb[0].mxu0 %v263
    %v592 = vpop.f32.mrb[0].mxu0
    %v593 = vadd.f32 0.0, %v592
    %v594 = vpop.f32.mrb[0].mxu0
    %595 = vmatprep.mubr.f32.mxu0 0.0
    %596 = vmatmul.mubr.f32.gmra.mrb[0].mxu0 %v266
    %v597 = vpop.f32.mrb[0].mxu0
    %v598 = vadd.f32 0.0, %v597
    %v599 = vpop.f32.mrb[0].mxu0
    %600 = vmatprep.mubr.f32.mxu0 0.0
    %601 = vmatmul.mubr.f32.gmra.mrb[0].mxu0 %v269
    %v602 = vpop.f32.mrb[0].mxu0
    %v603 = vadd.f32 0.0, %v602
    %v604 = vpop.f32.mrb[0].mxu0
    %605 = vmatprep.mubr.f32.mxu0 0.0
    %606 = vmatmul.mubr.f32.gmra.mrb[0].mxu0 %v272
    %v607 = vpop.f32.mrb[0].mxu0
    %v608 = vadd.f32 0.0, %v607
    %v609 = vpop.f32.mrb[0].mxu0
    %610 = vmatprep.mubr.f32.mxu0 0.0
    %611 = vmatmul.mubr.f32.gmra.mrb[0].mxu0 %v275
    %v612 = vpop.f32.mrb[0].mxu0
    %v613 = vadd.f32 0.0, %v612
    %v614 = vpop.f32.mrb[0].mxu0
    %615 = vmatprep.mubr.f32.mxu0 0.0
    %616 = vmatmul.mubr.f32.gmra.mrb[0].mxu0 %v278
    %v617 = vpop.f32.mrb[0].mxu0
    %v618 = vadd.f32 0.0, %v617
    %v619 = vpop.f32.mrb[0].mxu0
    %620 = vmatprep.mubr.f32.mxu0 0.0
    %621 = vmatmul.mubr.f32.gmra.mrb[0].mxu0 %v281
    %v622 = vpop.f32.mrb[0].mxu0
    %v623 = vadd.f32 0.0, %v622
    %v624 = vpop.f32.mrb[0].mxu0
    %625 = vmatprep.mubr.f32.mxu0 0.0
    %626 = vmatmul.mubr.f32.gmra.mrb[0].mxu0 %v284
    %v627 = vpop.f32.mrb[0].mxu0
    %v628 = vadd.f32 0.0, %v627
    %v629 = vpop.f32.mrb[0].mxu0
    %630 = vmatprep.mubr.f32.mxu0 0.0
    %631 = vmatmul.mubr.f32.gmra.mrb[0].mxu0 %v287
    %v632 = vpop.f32.mrb[0].mxu0
    %v633 = vadd.f32 0.0, %v632
    %v634 = vpop.f32.mrb[0].mxu0
    %635 = vmatprep.mubr.f32.mxu0 0.0
    %636 = vmatmul.mubr.f32.gmra.mrb[0].mxu0 %v290
    %v637 = vpop.f32.mrb[0].mxu0
    %v638 = vadd.f32 0.0, %v637
    %v639 = vpop.f32.mrb[0].mxu0
    %640 = vmatprep.mubr.f32.mxu0 0.0
    %641 = vmatmul.mubr.f32.gmra.mrb[0].mxu0 %v293
    %v642 = vpop.f32.mrb[0].mxu0
    %v643 = vadd.f32 0.0, %v642
    %v644 = vpop.f32.mrb[0].mxu0
    %645 = vmatprep.mubr.f32.mxu0 0.0
    %646 = vmatmul.mubr.f32.gmra.mrb[0].mxu0 %v296
    %v647 = vpop.f32.mrb[0].mxu0
    %v648 = vadd.f32 0.0, %v647
    %v649 = vpop.f32.mrb[0].mxu0
    %650 = vmatprep.mubr.f32.mxu0 0.0
    %651 = vmatmul.mubr.f32.gmra.mrb[0].mxu0 %v299
    %v652 = vpop.f32.mrb[0].mxu0
    %v653 = vadd.f32 0.0, %v652
    %v654 = vpop.f32.mrb[0].mxu0
    %655 = vmatprep.mubr.f32.mxu0 0.0
    %656 = vmatmul.mubr.f32.gmra.mrb[0].mxu0 %v302
    %v657 = vpop.f32.mrb[0].mxu0
    %v658 = vadd.f32 0.0, %v657
    %v659 = vpop.f32.mrb[0].mxu0
    %660 = vmatprep.mubr.f32.mxu0 0.0
    %661 = vmatmul.mubr.f32.gmra.mrb[0].mxu0 %v305
    %v662 = vpop.f32.mrb[0].mxu0
    %v663 = vadd.f32 0.0, %v662
    %v664 = vpop.f32.mrb[0].mxu0
    %665 = vmatprep.mubr.f32.mxu0 0.0
    %666 = vmatmul.mubr.f32.gmra.mrb[0].mxu0 %v308
    %v667 = vpop.f32.mrb[0].mxu0
    %v668 = vadd.f32 0.0, %v667
    %v669 = vpop.f32.mrb[0].mxu0
    %670 = vmatprep.mubr.f32.mxu0 0.0
    %671 = vmatmul.mubr.f32.gmra.mrb[0].mxu0 %v311
    %v672 = vpop.f32.mrb[0].mxu0
    %v673 = vadd.f32 0.0, %v672
    %v674 = vpop.f32.mrb[0].mxu0
    %675 = vmatprep.mubr.f32.mxu0 0.0
    %676 = vmatmul.mubr.f32.gmra.mrb[0].mxu0 %v314
    %v677 = vpop.f32.mrb[0].mxu0
    %v678 = vadd.f32 0.0, %v677
    %v679 = vpop.f32.mrb[0].mxu0
    %680 = vmatprep.mubr.f32.mxu0 0.0
    %681 = vmatmul.mubr.f32.gmra.mrb[0].mxu0 %v317
    %v682 = vpop.f32.mrb[0].mxu0
    %v683 = vadd.f32 0.0, %v682
    %v684 = vpop.f32.mrb[0].mxu0
    %685 = vmatprep.mubr.f32.mxu0 0.0
    %686 = vmatmul.mubr.f32.gmra.mrb[0].mxu0 %v320
    %v687 = vpop.f32.mrb[0].mxu0
    %v688 = vadd.f32 0.0, %v687
    %v689 = vpop.f32.mrb[0].mxu0
    %690 = vmatprep.mubr.f32.mxu0 0.0
    %691 = vmatmul.mubr.f32.gmra.mrb[0].mxu0 %v323
    %v692 = vpop.f32.mrb[0].mxu0
    %v693 = vadd.f32 0.0, %v692
    %v694 = vpop.f32.mrb[0].mxu0
    %695 = vmatprep.mubr.f32.mxu0 0.0
    %696 = vmatmul.mubr.f32.gmra.mrb[0].mxu0 %v326
    %v697 = vpop.f32.mrb[0].mxu0
    %v698 = vadd.f32 0.0, %v697
    %v699 = vpop.f32.mrb[0].mxu0
    %700 = vmatprep.mubr.f32.mxu0 0.0
    %701 = vmatmul.mubr.f32.gmra.mrb[0].mxu0 %v329
    %v702 = vpop.f32.mrb[0].mxu0
    %v703 = vadd.f32 0.0, %v702
    %v704 = vpop.f32.mrb[0].mxu0
    %705 = vmatprep.mubr.f32.mxu0 0.0
    %706 = vmatmul.mubr.f32.gmra.mrb[0].mxu0 %v332
    %v707 = vpop.f32.mrb[0].mxu0
    %v708 = vadd.f32 0.0, %v707
    %v709 = vpop.f32.mrb[0].mxu0
    %710 = vmatprep.mubr.f32.mxu0 0.0
    %711 = vmatmul.mubr.f32.gmra.mrb[0].mxu0 %v335
    %v712 = vpop.f32.mrb[0].mxu0
    %v713 = vadd.f32 0.0, %v712
    %v714 = vpop.f32.mrb[0].mxu0
    %715 = vmatprep.mubr.f32.mxu0 0.0
    %716 = vmatmul.mubr.f32.gmra.mrb[0].mxu0 %v338
    %v717 = vpop.f32.mrb[0].mxu0
    %v718 = vadd.f32 0.0, %v717
    %v719 = vpop.f32.mrb[0].mxu0
    %720 = vmatprep.mubr.f32.mxu0 0.0
    %721 = vmatmul.mubr.f32.gmra.mrb[0].mxu0 %v341
    %v722 = vpop.f32.mrb[0].mxu0
    %v723 = vadd.f32 0.0, %v722
    %v724 = vpop.f32.mrb[0].mxu0
    %725 = vmatprep.mubr.f32.mxu0 0.0
    %726 = vmatmul.mubr.f32.gmra.mrb[0].mxu0 %v344
    %v727 = vpop.f32.mrb[0].mxu0
    %v728 = vadd.f32 0.0, %v727
    %v729 = vpop.f32.mrb[0].mxu0
    %730 = vdwg.mxu0
    %v731 = vld [vmem:[%s3] sm:$0x1]
    %v732 = vmul.f32 %v413, 2.0
    %v733 = vmul.f32 %v418, 2.0
    %v734 = vmul.f32 %v423, 2.0
    %v735 = vmul.f32 %v428, 2.0
    %v736 = vmul.f32 %v433, 2.0
    %v737 = vmul.f32 %v438, 2.0
    %v738 = vmul.f32 %v443, 2.0
    %v739 = vmul.f32 %v448, 2.0
    %v740 = vmul.f32 %v453, 2.0
    %v741 = vmul.f32 %v458, 2.0
    %v742 = vmul.f32 %v463, 2.0
    %v743 = vmul.f32 %v468, 2.0
    %v744 = vmul.f32 %v473, 2.0
    %v745 = vmul.f32 %v478, 2.0
    %v746 = vmul.f32 %v483, 2.0
    %v747 = vmul.f32 %v488, 2.0
    %v748 = vmul.f32 %v493, 2.0
    %v749 = vmul.f32 %v498, 2.0
    %v750 = vmul.f32 %v503, 2.0
    %v751 = vmul.f32 %v508, 2.0
    %v752 = vmul.f32 %v513, 2.0
    %v753 = vmul.f32 %v518, 2.0
    %v754 = vmul.f32 %v523, 2.0
    %v755 = vmul.f32 %v528, 2.0
    %v756 = vmul.f32 %v533, 2.0
    %v757 = vmul.f32 %v538, 2.0
    %v758 = vmul.f32 %v543, 2.0
    %v759 = vmul.f32 %v548, 2.0
    %v760 = vmul.f32 %v553, 2.0
    %v761 = vmul.f32 %v558, 2.0
    %v762 = vmul.f32 %v563, 2.0
    %v763 = vmul.f32 %v568, 2.0
    %v764 = vmul.f32 %v573, 2.0
    %v765 = vmul.f32 %v578, 2.0
    %v766 = vmul.f32 %v583, 2.0
    %v767 = vmul.f32 %v588, 2.0
    %v768 = vmul.f32 %v593, 2.0
    %v769 = vmul.f32 %v598, 2.0
    %v770 = vmul.f32 %v603, 2.0
    %v771 = vmul.f32 %v608, 2.0
    %v772 = vmul.f32 %v613, 2.0
    %v773 = vmul.f32 %v618, 2.0
    %v774 = vmul.f32 %v623, 2.0
    %v775 = vmul.f32 %v628, 2.0
    %v776 = vmul.f32 %v633, 2.0
    %v777 = vmul.f32 %v638, 2.0
    %v778 = vmul.f32 %v643, 2.0
    %v779 = vmul.f32 %v648, 2.0
    %v780 = vmul.f32 %v653, 2.0
    %v781 = vmul.f32 %v658, 2.0
    %v782 = vmul.f32 %v663, 2.0
    %v783 = vmul.f32 %v668, 2.0
    %v784 = vmul.f32 %v673, 2.0
    %v785 = vmul.f32 %v678, 2.0
    %v786 = vmul.f32 %v683, 2.0
    %v787 = vmul.f32 %v688, 2.0
    %v788 = vmul.f32 %v693, 2.0
    %v789 = vmul.f32 %v698, 2.0
    %v790 = vmul.f32 %v703, 2.0
    %v791 = vmul.f32 %v708, 2.0
    %v792 = vmul.f32 %v713, 2.0
    %v793 = vmul.f32 %v718, 2.0
    %v794 = vmul.f32 %v723, 2.0
    %v795 = vmul.f32 %v728, 2.0
    %v797 = vlaneseq
    %v798 = vshrl.u32 %v797, 7
    %v799 = vsub.s32 0, %v798
    %v800 = vrot.slane %v731, %v799
    %v802 = vsub.f32 %v800, %v732
    %v803 = vsub.f32 %v800, %v733
    %v804 = vsub.f32 %v800, %v734
    %v805 = vsub.f32 %v800, %v735
    %v806 = vsub.f32 %v800, %v736
    %v807 = vsub.f32 %v800, %v737
    %v808 = vsub.f32 %v800, %v738
    %v809 = vsub.f32 %v800, %v739
    %v810 = vsub.f32 %v800, %v740
    %v811 = vsub.f32 %v800, %v741
    %v812 = vsub.f32 %v800, %v742
    %v813 = vsub.f32 %v800, %v743
    %v814 = vsub.f32 %v800, %v744
    %v815 = vsub.f32 %v800, %v745
    %v816 = vsub.f32 %v800, %v746
    %v817 = vsub.f32 %v800, %v747
    %v818 = vsub.f32 %v800, %v748
    %v819 = vsub.f32 %v800, %v749
    %v820 = vsub.f32 %v800, %v750
    %v821 = vsub.f32 %v800, %v751
    %v822 = vsub.f32 %v800, %v752
    %v823 = vsub.f32 %v800, %v753
    %v824 = vsub.f32 %v800, %v754
    %v825 = vsub.f32 %v800, %v755
    %v826 = vsub.f32 %v800, %v756
    %v827 = vsub.f32 %v800, %v757
    %v828 = vsub.f32 %v800, %v758
    %v829 = vsub.f32 %v800, %v759
    %v830 = vsub.f32 %v800, %v760
    %v831 = vsub.f32 %v800, %v761
    %v832 = vsub.f32 %v800, %v762
    %v833 = vsub.f32 %v800, %v763
    %v834 = vsub.f32 %v800, %v764
    %v835 = vsub.f32 %v800, %v765
    %v836 = vsub.f32 %v800, %v766
    %v837 = vsub.f32 %v800, %v767
    %v838 = vsub.f32 %v800, %v768
    %v839 = vsub.f32 %v800, %v769
    %v840 = vsub.f32 %v800, %v770
    %v841 = vsub.f32 %v800, %v771
    %v842 = vsub.f32 %v800, %v772
    %v843 = vsub.f32 %v800, %v773
    %v844 = vsub.f32 %v800, %v774
    %v845 = vsub.f32 %v800, %v775
    %v846 = vsub.f32 %v800, %v776
    %v847 = vsub.f32 %v800, %v777
    %v848 = vsub.f32 %v800, %v778
    %v849 = vsub.f32 %v800, %v779
    %v850 = vsub.f32 %v800, %v780
    %v851 = vsub.f32 %v800, %v781
    %v852 = vsub.f32 %v800, %v782
    %v853 = vsub.f32 %v800, %v783
    %v854 = vsub.f32 %v800, %v784
    %v855 = vsub.f32 %v800, %v785
    %v856 = vsub.f32 %v800, %v786
    %v857 = vsub.f32 %v800, %v787
    %v858 = vsub.f32 %v800, %v788
    %v859 = vsub.f32 %v800, %v789
    %v860 = vsub.f32 %v800, %v790
    %v861 = vsub.f32 %v800, %v791
    %v862 = vsub.f32 %v800, %v792
    %v863 = vsub.f32 %v800, %v793
    %v864 = vsub.f32 %v800, %v794
    %v865 = vsub.f32 %v800, %v795
    %vm866 = vcmask 261120
    %v867 = vsel %vm866, %v802, inf
    %868 = vmin.xlane.f32.xlu0 %v867
    %v869 = vpop.xlane.xlu0 %868
    %v870 = vsel %vm866, %v803, inf
    %871 = vmin.xlane.f32.xlu0 %v870
    %v872 = vpop.xlane.xlu0 %871
    %v873 = vsel %vm866, %v804, inf
    %874 = vmin.xlane.f32.xlu0 %v873
    %v875 = vpop.xlane.xlu0 %874
    %v876 = vsel %vm866, %v805, inf
    %877 = vmin.xlane.f32.xlu0 %v876
    %v878 = vpop.xlane.xlu0 %877
    %v879 = vsel %vm866, %v806, inf
    %880 = vmin.xlane.f32.xlu0 %v879
    %v881 = vpop.xlane.xlu0 %880
    %v882 = vsel %vm866, %v807, inf
    %883 = vmin.xlane.f32.xlu0 %v882
    %v884 = vpop.xlane.xlu0 %883
    %v885 = vsel %vm866, %v808, inf
    %886 = vmin.xlane.f32.xlu0 %v885
    %v887 = vpop.xlane.xlu0 %886
    %v888 = vsel %vm866, %v809, inf
    %889 = vmin.xlane.f32.xlu0 %v888
    %v890 = vpop.xlane.xlu0 %889
    %v891 = vsel %vm866, %v810, inf
    %892 = vmin.xlane.f32.xlu0 %v891
    %v893 = vpop.xlane.xlu0 %892
    %v894 = vsel %vm866, %v811, inf
    %895 = vmin.xlane.f32.xlu0 %v894
    %v896 = vpop.xlane.xlu0 %895
    %v897 = vsel %vm866, %v812, inf
    %898 = vmin.xlane.f32.xlu0 %v897
    %v899 = vpop.xlane.xlu0 %898
    %v900 = vsel %vm866, %v813, inf
    %901 = vmin.xlane.f32.xlu0 %v900
    %v902 = vpop.xlane.xlu0 %901
    %v903 = vsel %vm866, %v814, inf
    %904 = vmin.xlane.f32.xlu0 %v903
    %v905 = vpop.xlane.xlu0 %904
    %v906 = vsel %vm866, %v815, inf
    %907 = vmin.xlane.f32.xlu0 %v906
    %v908 = vpop.xlane.xlu0 %907
    %v909 = vsel %vm866, %v816, inf
    %910 = vmin.xlane.f32.xlu0 %v909
    %v911 = vpop.xlane.xlu0 %910
    %v912 = vsel %vm866, %v817, inf
    %913 = vmin.xlane.f32.xlu0 %v912
    %v914 = vpop.xlane.xlu0 %913
    %v915 = vsel %vm866, %v818, inf
    %916 = vmin.xlane.f32.xlu0 %v915
    %v917 = vpop.xlane.xlu0 %916
    %v918 = vsel %vm866, %v819, inf
    %919 = vmin.xlane.f32.xlu0 %v918
    %v920 = vpop.xlane.xlu0 %919
    %v921 = vsel %vm866, %v820, inf
    %922 = vmin.xlane.f32.xlu0 %v921
    %v923 = vpop.xlane.xlu0 %922
    %v924 = vsel %vm866, %v821, inf
    %925 = vmin.xlane.f32.xlu0 %v924
    %v926 = vpop.xlane.xlu0 %925
    %v927 = vsel %vm866, %v822, inf
    %928 = vmin.xlane.f32.xlu0 %v927
    %v929 = vpop.xlane.xlu0 %928
    %v930 = vsel %vm866, %v823, inf
    %931 = vmin.xlane.f32.xlu0 %v930
    %v932 = vpop.xlane.xlu0 %931
    %v933 = vsel %vm866, %v824, inf
    %934 = vmin.xlane.f32.xlu0 %v933
    %v935 = vpop.xlane.xlu0 %934
    %v936 = vsel %vm866, %v825, inf
    %937 = vmin.xlane.f32.xlu0 %v936
    %v938 = vpop.xlane.xlu0 %937
    %v939 = vsel %vm866, %v826, inf
    %940 = vmin.xlane.f32.xlu0 %v939
    %v941 = vpop.xlane.xlu0 %940
    %v942 = vsel %vm866, %v827, inf
    %943 = vmin.xlane.f32.xlu0 %v942
    %v944 = vpop.xlane.xlu0 %943
    %v945 = vsel %vm866, %v828, inf
    %946 = vmin.xlane.f32.xlu0 %v945
    %v947 = vpop.xlane.xlu0 %946
    %v948 = vsel %vm866, %v829, inf
    %949 = vmin.xlane.f32.xlu0 %v948
    %v950 = vpop.xlane.xlu0 %949
    %v951 = vsel %vm866, %v830, inf
    %952 = vmin.xlane.f32.xlu0 %v951
    %v953 = vpop.xlane.xlu0 %952
    %v954 = vsel %vm866, %v831, inf
    %955 = vmin.xlane.f32.xlu0 %v954
    %v956 = vpop.xlane.xlu0 %955
    %v957 = vsel %vm866, %v832, inf
    %958 = vmin.xlane.f32.xlu0 %v957
    %v959 = vpop.xlane.xlu0 %958
    %v960 = vsel %vm866, %v833, inf
    %961 = vmin.xlane.f32.xlu0 %v960
    %v962 = vpop.xlane.xlu0 %961
    %v963 = vsel %vm866, %v834, inf
    %964 = vmin.xlane.f32.xlu0 %v963
    %v965 = vpop.xlane.xlu0 %964
    %v966 = vsel %vm866, %v835, inf
    %967 = vmin.xlane.f32.xlu0 %v966
    %v968 = vpop.xlane.xlu0 %967
    %v969 = vsel %vm866, %v836, inf
    %970 = vmin.xlane.f32.xlu0 %v969
    %v971 = vpop.xlane.xlu0 %970
    %v972 = vsel %vm866, %v837, inf
    %973 = vmin.xlane.f32.xlu0 %v972
    %v974 = vpop.xlane.xlu0 %973
    %v975 = vsel %vm866, %v838, inf
    %976 = vmin.xlane.f32.xlu0 %v975
    %v977 = vpop.xlane.xlu0 %976
    %v978 = vsel %vm866, %v839, inf
    %979 = vmin.xlane.f32.xlu0 %v978
    %v980 = vpop.xlane.xlu0 %979
    %v981 = vsel %vm866, %v840, inf
    %982 = vmin.xlane.f32.xlu0 %v981
    %v983 = vpop.xlane.xlu0 %982
    %v984 = vsel %vm866, %v841, inf
    %985 = vmin.xlane.f32.xlu0 %v984
    %v986 = vpop.xlane.xlu0 %985
    %v987 = vsel %vm866, %v842, inf
    %988 = vmin.xlane.f32.xlu0 %v987
    %v989 = vpop.xlane.xlu0 %988
    %v990 = vsel %vm866, %v843, inf
    %991 = vmin.xlane.f32.xlu0 %v990
    %v992 = vpop.xlane.xlu0 %991
    %v993 = vsel %vm866, %v844, inf
    %994 = vmin.xlane.f32.xlu0 %v993
    %v995 = vpop.xlane.xlu0 %994
    %v996 = vsel %vm866, %v845, inf
    %997 = vmin.xlane.f32.xlu0 %v996
    %v998 = vpop.xlane.xlu0 %997
    %v999 = vsel %vm866, %v846, inf
    %1000 = vmin.xlane.f32.xlu0 %v999
    %v1001 = vpop.xlane.xlu0 %1000
    %v1002 = vsel %vm866, %v847, inf
    %1003 = vmin.xlane.f32.xlu0 %v1002
    %v1004 = vpop.xlane.xlu0 %1003
    %v1005 = vsel %vm866, %v848, inf
    %1006 = vmin.xlane.f32.xlu0 %v1005
    %v1007 = vpop.xlane.xlu0 %1006
    %v1008 = vsel %vm866, %v849, inf
    %1009 = vmin.xlane.f32.xlu0 %v1008
    %v1010 = vpop.xlane.xlu0 %1009
    %v1011 = vsel %vm866, %v850, inf
    %1012 = vmin.xlane.f32.xlu0 %v1011
    %v1013 = vpop.xlane.xlu0 %1012
    %v1014 = vsel %vm866, %v851, inf
    %1015 = vmin.xlane.f32.xlu0 %v1014
    %v1016 = vpop.xlane.xlu0 %1015
    %v1017 = vsel %vm866, %v852, inf
    %1018 = vmin.xlane.f32.xlu0 %v1017
    %v1019 = vpop.xlane.xlu0 %1018
    %v1020 = vsel %vm866, %v853, inf
    %1021 = vmin.xlane.f32.xlu0 %v1020
    %v1022 = vpop.xlane.xlu0 %1021
    %v1023 = vsel %vm866, %v854, inf
    %1024 = vmin.xlane.f32.xlu0 %v1023
    %v1025 = vpop.xlane.xlu0 %1024
    %v1026 = vsel %vm866, %v855, inf
    %1027 = vmin.xlane.f32.xlu0 %v1026
    %v1028 = vpop.xlane.xlu0 %1027
    %v1029 = vsel %vm866, %v856, inf
    %1030 = vmin.xlane.f32.xlu0 %v1029
    %v1031 = vpop.xlane.xlu0 %1030
    %v1032 = vsel %vm866, %v857, inf
    %1033 = vmin.xlane.f32.xlu0 %v1032
    %v1034 = vpop.xlane.xlu0 %1033
    %v1035 = vsel %vm866, %v858, inf
    %1036 = vmin.xlane.f32.xlu0 %v1035
    %v1037 = vpop.xlane.xlu0 %1036
    %v1038 = vsel %vm866, %v859, inf
    %1039 = vmin.xlane.f32.xlu0 %v1038
    %v1040 = vpop.xlane.xlu0 %1039
    %v1041 = vsel %vm866, %v860, inf
    %1042 = vmin.xlane.f32.xlu0 %v1041
    %v1043 = vpop.xlane.xlu0 %1042
    %v1044 = vsel %vm866, %v861, inf
    %1045 = vmin.xlane.f32.xlu0 %v1044
    %v1046 = vpop.xlane.xlu0 %1045
    %v1047 = vsel %vm866, %v862, inf
    %1048 = vmin.xlane.f32.xlu0 %v1047
    %v1049 = vpop.xlane.xlu0 %1048
    %v1050 = vsel %vm866, %v863, inf
    %1051 = vmin.xlane.f32.xlu0 %v1050
    %v1052 = vpop.xlane.xlu0 %1051
    %v1053 = vsel %vm866, %v864, inf
    %1054 = vmin.xlane.f32.xlu0 %v1053
    %v1055 = vpop.xlane.xlu0 %1054
    %v1056 = vsel %vm866, %v865, inf
    %1057 = vmin.xlane.f32.xlu0 %v1056
    %v1058 = vpop.xlane.xlu0 %1057
    %v1059 = vlaneseq
    %v1060 = vand.u32 %v1059, 127
    %vm1061 = vcmp.eq.f32.partialorder %v802, %v869
    %vm1062 = vcmp.eq.f32.partialorder %v803, %v872
    %vm1063 = vcmp.eq.f32.partialorder %v804, %v875
    %vm1064 = vcmp.eq.f32.partialorder %v805, %v878
    %vm1065 = vcmp.eq.f32.partialorder %v806, %v881
    %vm1066 = vcmp.eq.f32.partialorder %v807, %v884
    %vm1067 = vcmp.eq.f32.partialorder %v808, %v887
    %vm1068 = vcmp.eq.f32.partialorder %v809, %v890
    %vm1069 = vcmp.eq.f32.partialorder %v810, %v893
    %vm1070 = vcmp.eq.f32.partialorder %v811, %v896
    %vm1071 = vcmp.eq.f32.partialorder %v812, %v899
    %vm1072 = vcmp.eq.f32.partialorder %v813, %v902
    %vm1073 = vcmp.eq.f32.partialorder %v814, %v905
    %vm1074 = vcmp.eq.f32.partialorder %v815, %v908
    %vm1075 = vcmp.eq.f32.partialorder %v816, %v911
    %vm1076 = vcmp.eq.f32.partialorder %v817, %v914
    %vm1077 = vcmp.eq.f32.partialorder %v818, %v917
    %vm1078 = vcmp.eq.f32.partialorder %v819, %v920
    %vm1079 = vcmp.eq.f32.partialorder %v820, %v923
    %vm1080 = vcmp.eq.f32.partialorder %v821, %v926
    %vm1081 = vcmp.eq.f32.partialorder %v822, %v929
    %vm1082 = vcmp.eq.f32.partialorder %v823, %v932
    %vm1083 = vcmp.eq.f32.partialorder %v824, %v935
    %vm1084 = vcmp.eq.f32.partialorder %v825, %v938
    %vm1085 = vcmp.eq.f32.partialorder %v826, %v941
    %vm1086 = vcmp.eq.f32.partialorder %v827, %v944
    %vm1087 = vcmp.eq.f32.partialorder %v828, %v947
    %vm1088 = vcmp.eq.f32.partialorder %v829, %v950
    %vm1089 = vcmp.eq.f32.partialorder %v830, %v953
    %vm1090 = vcmp.eq.f32.partialorder %v831, %v956
    %vm1091 = vcmp.eq.f32.partialorder %v832, %v959
    %vm1092 = vcmp.eq.f32.partialorder %v833, %v962
    %vm1093 = vcmp.eq.f32.partialorder %v834, %v965
    %vm1094 = vcmp.eq.f32.partialorder %v835, %v968
    %vm1095 = vcmp.eq.f32.partialorder %v836, %v971
    %vm1096 = vcmp.eq.f32.partialorder %v837, %v974
    %vm1097 = vcmp.eq.f32.partialorder %v838, %v977
    %vm1098 = vcmp.eq.f32.partialorder %v839, %v980
    %vm1099 = vcmp.eq.f32.partialorder %v840, %v983
    %vm1100 = vcmp.eq.f32.partialorder %v841, %v986
    %vm1101 = vcmp.eq.f32.partialorder %v842, %v989
    %vm1102 = vcmp.eq.f32.partialorder %v843, %v992
    %vm1103 = vcmp.eq.f32.partialorder %v844, %v995
    %vm1104 = vcmp.eq.f32.partialorder %v845, %v998
    %vm1105 = vcmp.eq.f32.partialorder %v846, %v1001
    %vm1106 = vcmp.eq.f32.partialorder %v847, %v1004
    %vm1107 = vcmp.eq.f32.partialorder %v848, %v1007
    %vm1108 = vcmp.eq.f32.partialorder %v849, %v1010
    %vm1109 = vcmp.eq.f32.partialorder %v850, %v1013
    %vm1110 = vcmp.eq.f32.partialorder %v851, %v1016
    %vm1111 = vcmp.eq.f32.partialorder %v852, %v1019
    %vm1112 = vcmp.eq.f32.partialorder %v853, %v1022
    %vm1113 = vcmp.eq.f32.partialorder %v854, %v1025
    %vm1114 = vcmp.eq.f32.partialorder %v855, %v1028
    %vm1115 = vcmp.eq.f32.partialorder %v856, %v1031
    %vm1116 = vcmp.eq.f32.partialorder %v857, %v1034
    %vm1117 = vcmp.eq.f32.partialorder %v858, %v1037
    %vm1118 = vcmp.eq.f32.partialorder %v859, %v1040
    %vm1119 = vcmp.eq.f32.partialorder %v860, %v1043
    %vm1120 = vcmp.eq.f32.partialorder %v861, %v1046
    %vm1121 = vcmp.eq.f32.partialorder %v862, %v1049
    %vm1122 = vcmp.eq.f32.partialorder %v863, %v1052
    %vm1123 = vcmp.eq.f32.partialorder %v864, %v1055
    %vm1124 = vcmp.eq.f32.partialorder %v865, %v1058
    %v1125 = vsel %vm1061, %v1060, 32
    %v1126 = vsel %vm1062, %v1060, 32
    %v1127 = vsel %vm1063, %v1060, 32
    %v1128 = vsel %vm1064, %v1060, 32
    %v1129 = vsel %vm1065, %v1060, 32
    %v1130 = vsel %vm1066, %v1060, 32
    %v1131 = vsel %vm1067, %v1060, 32
    %v1132 = vsel %vm1068, %v1060, 32
    %v1133 = vsel %vm1069, %v1060, 32
    %v1134 = vsel %vm1070, %v1060, 32
    %v1135 = vsel %vm1071, %v1060, 32
    %v1136 = vsel %vm1072, %v1060, 32
    %v1137 = vsel %vm1073, %v1060, 32
    %v1138 = vsel %vm1074, %v1060, 32
    %v1139 = vsel %vm1075, %v1060, 32
    %v1140 = vsel %vm1076, %v1060, 32
    %v1141 = vsel %vm1077, %v1060, 32
    %v1142 = vsel %vm1078, %v1060, 32
    %v1143 = vsel %vm1079, %v1060, 32
    %v1144 = vsel %vm1080, %v1060, 32
    %v1145 = vsel %vm1081, %v1060, 32
    %v1146 = vsel %vm1082, %v1060, 32
    %v1147 = vsel %vm1083, %v1060, 32
    %v1148 = vsel %vm1084, %v1060, 32
    %v1149 = vsel %vm1085, %v1060, 32
    %v1150 = vsel %vm1086, %v1060, 32
    %v1151 = vsel %vm1087, %v1060, 32
    %v1152 = vsel %vm1088, %v1060, 32
    %v1153 = vsel %vm1089, %v1060, 32
    %v1154 = vsel %vm1090, %v1060, 32
    %v1155 = vsel %vm1091, %v1060, 32
    %v1156 = vsel %vm1092, %v1060, 32
    %v1157 = vsel %vm1093, %v1060, 32
    %v1158 = vsel %vm1094, %v1060, 32
    %v1159 = vsel %vm1095, %v1060, 32
    %v1160 = vsel %vm1096, %v1060, 32
    %v1161 = vsel %vm1097, %v1060, 32
    %v1162 = vsel %vm1098, %v1060, 32
    %v1163 = vsel %vm1099, %v1060, 32
    %v1164 = vsel %vm1100, %v1060, 32
    %v1165 = vsel %vm1101, %v1060, 32
    %v1166 = vsel %vm1102, %v1060, 32
    %v1167 = vsel %vm1103, %v1060, 32
    %v1168 = vsel %vm1104, %v1060, 32
    %v1169 = vsel %vm1105, %v1060, 32
    %v1170 = vsel %vm1106, %v1060, 32
    %v1171 = vsel %vm1107, %v1060, 32
    %v1172 = vsel %vm1108, %v1060, 32
    %v1173 = vsel %vm1109, %v1060, 32
    %v1174 = vsel %vm1110, %v1060, 32
    %v1175 = vsel %vm1111, %v1060, 32
    %v1176 = vsel %vm1112, %v1060, 32
    %v1177 = vsel %vm1113, %v1060, 32
    %v1178 = vsel %vm1114, %v1060, 32
    %v1179 = vsel %vm1115, %v1060, 32
    %v1180 = vsel %vm1116, %v1060, 32
    %v1181 = vsel %vm1117, %v1060, 32
    %v1182 = vsel %vm1118, %v1060, 32
    %v1183 = vsel %vm1119, %v1060, 32
    %v1184 = vsel %vm1120, %v1060, 32
    %v1185 = vsel %vm1121, %v1060, 32
    %v1186 = vsel %vm1122, %v1060, 32
    %v1187 = vsel %vm1123, %v1060, 32
    %v1188 = vsel %vm1124, %v1060, 32
    %v1189 = vsel %vm866, %v1125, 2147483647
    %v1190 = vand.u32 %v1189, 65535
    %v1191 = vshra.s32 %v1189, 16
    %v1192 = vcvt.s32.f32 %v1190
    %v1193 = vcvt.s32.f32 %v1191
    %1194 = vmin.xlane.f32.xlu0 %v1193
    %v1195 = vpop.xlane.xlu0 %1194
    %vm1196 = vcmp.eq.f32.partialorder %v1193, %v1195
    %v1197 = vsel %vm1196, %v1192, inf
    %1198 = vmin.xlane.f32.xlu0 %v1197
    %v1199 = vpop.xlane.xlu0 %1198
    %v1200 = vcvt.f32.s32 %v1199
    %v1201 = vcvt.f32.s32 %v1195
    %v1202 = vshll.u32 %v1201, 16
    %v1203 = vadd.s32 %v1202, %v1200
    %v1204 = vsel %vm866, %v1126, 2147483647
    %v1205 = vand.u32 %v1204, 65535
    %v1206 = vshra.s32 %v1204, 16
    %v1207 = vcvt.s32.f32 %v1205
    %v1208 = vcvt.s32.f32 %v1206
    %1209 = vmin.xlane.f32.xlu0 %v1208
    %v1210 = vpop.xlane.xlu0 %1209
    %vm1211 = vcmp.eq.f32.partialorder %v1208, %v1210
    %v1212 = vsel %vm1211, %v1207, inf
    %1213 = vmin.xlane.f32.xlu0 %v1212
    %v1214 = vpop.xlane.xlu0 %1213
    %v1215 = vcvt.f32.s32 %v1214
    %v1216 = vcvt.f32.s32 %v1210
    %v1217 = vshll.u32 %v1216, 16
    %v1218 = vadd.s32 %v1217, %v1215
    %v1219 = vsel %vm866, %v1127, 2147483647
    %v1220 = vand.u32 %v1219, 65535
    %v1221 = vshra.s32 %v1219, 16
    %v1222 = vcvt.s32.f32 %v1220
    %v1223 = vcvt.s32.f32 %v1221
    %1224 = vmin.xlane.f32.xlu0 %v1223
    %v1225 = vpop.xlane.xlu0 %1224
    %vm1226 = vcmp.eq.f32.partialorder %v1223, %v1225
    %v1227 = vsel %vm1226, %v1222, inf
    %1228 = vmin.xlane.f32.xlu0 %v1227
    %v1229 = vpop.xlane.xlu0 %1228
    %v1230 = vcvt.f32.s32 %v1229
    %v1231 = vcvt.f32.s32 %v1225
    %v1232 = vshll.u32 %v1231, 16
    %v1233 = vadd.s32 %v1232, %v1230
    %v1234 = vsel %vm866, %v1128, 2147483647
    %v1235 = vand.u32 %v1234, 65535
    %v1236 = vshra.s32 %v1234, 16
    %v1237 = vcvt.s32.f32 %v1235
    %v1238 = vcvt.s32.f32 %v1236
    %1239 = vmin.xlane.f32.xlu0 %v1238
    %v1240 = vpop.xlane.xlu0 %1239
    %vm1241 = vcmp.eq.f32.partialorder %v1238, %v1240
    %v1242 = vsel %vm1241, %v1237, inf
    %1243 = vmin.xlane.f32.xlu0 %v1242
    %v1244 = vpop.xlane.xlu0 %1243
    %v1245 = vcvt.f32.s32 %v1244
    %v1246 = vcvt.f32.s32 %v1240
    %v1247 = vshll.u32 %v1246, 16
    %v1248 = vadd.s32 %v1247, %v1245
    %v1249 = vsel %vm866, %v1129, 2147483647
    %v1250 = vand.u32 %v1249, 65535
    %v1251 = vshra.s32 %v1249, 16
    %v1252 = vcvt.s32.f32 %v1250
    %v1253 = vcvt.s32.f32 %v1251
    %1254 = vmin.xlane.f32.xlu0 %v1253
    %v1255 = vpop.xlane.xlu0 %1254
    %vm1256 = vcmp.eq.f32.partialorder %v1253, %v1255
    %v1257 = vsel %vm1256, %v1252, inf
    %1258 = vmin.xlane.f32.xlu0 %v1257
    %v1259 = vpop.xlane.xlu0 %1258
    %v1260 = vcvt.f32.s32 %v1259
    %v1261 = vcvt.f32.s32 %v1255
    %v1262 = vshll.u32 %v1261, 16
    %v1263 = vadd.s32 %v1262, %v1260
    %v1264 = vsel %vm866, %v1130, 2147483647
    %v1265 = vand.u32 %v1264, 65535
    %v1266 = vshra.s32 %v1264, 16
    %v1267 = vcvt.s32.f32 %v1265
    %v1268 = vcvt.s32.f32 %v1266
    %1269 = vmin.xlane.f32.xlu0 %v1268
    %v1270 = vpop.xlane.xlu0 %1269
    %vm1271 = vcmp.eq.f32.partialorder %v1268, %v1270
    %v1272 = vsel %vm1271, %v1267, inf
    %1273 = vmin.xlane.f32.xlu0 %v1272
    %v1274 = vpop.xlane.xlu0 %1273
    %v1275 = vcvt.f32.s32 %v1274
    %v1276 = vcvt.f32.s32 %v1270
    %v1277 = vshll.u32 %v1276, 16
    %v1278 = vadd.s32 %v1277, %v1275
    %v1279 = vsel %vm866, %v1131, 2147483647
    %v1280 = vand.u32 %v1279, 65535
    %v1281 = vshra.s32 %v1279, 16
    %v1282 = vcvt.s32.f32 %v1280
    %v1283 = vcvt.s32.f32 %v1281
    %1284 = vmin.xlane.f32.xlu0 %v1283
    %v1285 = vpop.xlane.xlu0 %1284
    %vm1286 = vcmp.eq.f32.partialorder %v1283, %v1285
    %v1287 = vsel %vm1286, %v1282, inf
    %1288 = vmin.xlane.f32.xlu0 %v1287
    %v1289 = vpop.xlane.xlu0 %1288
    %v1290 = vcvt.f32.s32 %v1289
    %v1291 = vcvt.f32.s32 %v1285
    %v1292 = vshll.u32 %v1291, 16
    %v1293 = vadd.s32 %v1292, %v1290
    %v1294 = vsel %vm866, %v1132, 2147483647
    %v1295 = vand.u32 %v1294, 65535
    %v1296 = vshra.s32 %v1294, 16
    %v1297 = vcvt.s32.f32 %v1295
    %v1298 = vcvt.s32.f32 %v1296
    %1299 = vmin.xlane.f32.xlu0 %v1298
    %v1300 = vpop.xlane.xlu0 %1299
    %vm1301 = vcmp.eq.f32.partialorder %v1298, %v1300
    %v1302 = vsel %vm1301, %v1297, inf
    %1303 = vmin.xlane.f32.xlu0 %v1302
    %v1304 = vpop.xlane.xlu0 %1303
    %v1305 = vcvt.f32.s32 %v1304
    %v1306 = vcvt.f32.s32 %v1300
    %v1307 = vshll.u32 %v1306, 16
    %v1308 = vadd.s32 %v1307, %v1305
    %v1309 = vsel %vm866, %v1133, 2147483647
    %v1310 = vand.u32 %v1309, 65535
    %v1311 = vshra.s32 %v1309, 16
    %v1312 = vcvt.s32.f32 %v1310
    %v1313 = vcvt.s32.f32 %v1311
    %1314 = vmin.xlane.f32.xlu0 %v1313
    %v1315 = vpop.xlane.xlu0 %1314
    %vm1316 = vcmp.eq.f32.partialorder %v1313, %v1315
    %v1317 = vsel %vm1316, %v1312, inf
    %1318 = vmin.xlane.f32.xlu0 %v1317
    %v1319 = vpop.xlane.xlu0 %1318
    %v1320 = vcvt.f32.s32 %v1319
    %v1321 = vcvt.f32.s32 %v1315
    %v1322 = vshll.u32 %v1321, 16
    %v1323 = vadd.s32 %v1322, %v1320
    %v1324 = vsel %vm866, %v1134, 2147483647
    %v1325 = vand.u32 %v1324, 65535
    %v1326 = vshra.s32 %v1324, 16
    %v1327 = vcvt.s32.f32 %v1325
    %v1328 = vcvt.s32.f32 %v1326
    %1329 = vmin.xlane.f32.xlu0 %v1328
    %v1330 = vpop.xlane.xlu0 %1329
    %vm1331 = vcmp.eq.f32.partialorder %v1328, %v1330
    %v1332 = vsel %vm1331, %v1327, inf
    %1333 = vmin.xlane.f32.xlu0 %v1332
    %v1334 = vpop.xlane.xlu0 %1333
    %v1335 = vcvt.f32.s32 %v1334
    %v1336 = vcvt.f32.s32 %v1330
    %v1337 = vshll.u32 %v1336, 16
    %v1338 = vadd.s32 %v1337, %v1335
    %v1339 = vsel %vm866, %v1135, 2147483647
    %v1340 = vand.u32 %v1339, 65535
    %v1341 = vshra.s32 %v1339, 16
    %v1342 = vcvt.s32.f32 %v1340
    %v1343 = vcvt.s32.f32 %v1341
    %1344 = vmin.xlane.f32.xlu0 %v1343
    %v1345 = vpop.xlane.xlu0 %1344
    %vm1346 = vcmp.eq.f32.partialorder %v1343, %v1345
    %v1347 = vsel %vm1346, %v1342, inf
    %1348 = vmin.xlane.f32.xlu0 %v1347
    %v1349 = vpop.xlane.xlu0 %1348
    %v1350 = vcvt.f32.s32 %v1349
    %v1351 = vcvt.f32.s32 %v1345
    %v1352 = vshll.u32 %v1351, 16
    %v1353 = vadd.s32 %v1352, %v1350
    %v1354 = vsel %vm866, %v1136, 2147483647
    %v1355 = vand.u32 %v1354, 65535
    %v1356 = vshra.s32 %v1354, 16
    %v1357 = vcvt.s32.f32 %v1355
    %v1358 = vcvt.s32.f32 %v1356
    %1359 = vmin.xlane.f32.xlu0 %v1358
    %v1360 = vpop.xlane.xlu0 %1359
    %vm1361 = vcmp.eq.f32.partialorder %v1358, %v1360
    %v1362 = vsel %vm1361, %v1357, inf
    %1363 = vmin.xlane.f32.xlu0 %v1362
    %v1364 = vpop.xlane.xlu0 %1363
    %v1365 = vcvt.f32.s32 %v1364
    %v1366 = vcvt.f32.s32 %v1360
    %v1367 = vshll.u32 %v1366, 16
    %v1368 = vadd.s32 %v1367, %v1365
    %v1369 = vsel %vm866, %v1137, 2147483647
    %v1370 = vand.u32 %v1369, 65535
    %v1371 = vshra.s32 %v1369, 16
    %v1372 = vcvt.s32.f32 %v1370
    %v1373 = vcvt.s32.f32 %v1371
    %1374 = vmin.xlane.f32.xlu0 %v1373
    %v1375 = vpop.xlane.xlu0 %1374
    %vm1376 = vcmp.eq.f32.partialorder %v1373, %v1375
    %v1377 = vsel %vm1376, %v1372, inf
    %1378 = vmin.xlane.f32.xlu0 %v1377
    %v1379 = vpop.xlane.xlu0 %1378
    %v1380 = vcvt.f32.s32 %v1379
    %v1381 = vcvt.f32.s32 %v1375
    %v1382 = vshll.u32 %v1381, 16
    %v1383 = vadd.s32 %v1382, %v1380
    %v1384 = vsel %vm866, %v1138, 2147483647
    %v1385 = vand.u32 %v1384, 65535
    %v1386 = vshra.s32 %v1384, 16
    %v1387 = vcvt.s32.f32 %v1385
    %v1388 = vcvt.s32.f32 %v1386
    %1389 = vmin.xlane.f32.xlu0 %v1388
    %v1390 = vpop.xlane.xlu0 %1389
    %vm1391 = vcmp.eq.f32.partialorder %v1388, %v1390
    %v1392 = vsel %vm1391, %v1387, inf
    %1393 = vmin.xlane.f32.xlu0 %v1392
    %v1394 = vpop.xlane.xlu0 %1393
    %v1395 = vcvt.f32.s32 %v1394
    %v1396 = vcvt.f32.s32 %v1390
    %v1397 = vshll.u32 %v1396, 16
    %v1398 = vadd.s32 %v1397, %v1395
    %v1399 = vsel %vm866, %v1139, 2147483647
    %v1400 = vand.u32 %v1399, 65535
    %v1401 = vshra.s32 %v1399, 16
    %v1402 = vcvt.s32.f32 %v1400
    %v1403 = vcvt.s32.f32 %v1401
    %1404 = vmin.xlane.f32.xlu0 %v1403
    %v1405 = vpop.xlane.xlu0 %1404
    %vm1406 = vcmp.eq.f32.partialorder %v1403, %v1405
    %v1407 = vsel %vm1406, %v1402, inf
    %1408 = vmin.xlane.f32.xlu0 %v1407
    %v1409 = vpop.xlane.xlu0 %1408
    %v1410 = vcvt.f32.s32 %v1409
    %v1411 = vcvt.f32.s32 %v1405
    %v1412 = vshll.u32 %v1411, 16
    %v1413 = vadd.s32 %v1412, %v1410
    %v1414 = vsel %vm866, %v1140, 2147483647
    %v1415 = vand.u32 %v1414, 65535
    %v1416 = vshra.s32 %v1414, 16
    %v1417 = vcvt.s32.f32 %v1415
    %v1418 = vcvt.s32.f32 %v1416
    %1419 = vmin.xlane.f32.xlu0 %v1418
    %v1420 = vpop.xlane.xlu0 %1419
    %vm1421 = vcmp.eq.f32.partialorder %v1418, %v1420
    %v1422 = vsel %vm1421, %v1417, inf
    %1423 = vmin.xlane.f32.xlu0 %v1422
    %v1424 = vpop.xlane.xlu0 %1423
    %v1425 = vcvt.f32.s32 %v1424
    %v1426 = vcvt.f32.s32 %v1420
    %v1427 = vshll.u32 %v1426, 16
    %v1428 = vadd.s32 %v1427, %v1425
    %v1429 = vsel %vm866, %v1141, 2147483647
    %v1430 = vand.u32 %v1429, 65535
    %v1431 = vshra.s32 %v1429, 16
    %v1432 = vcvt.s32.f32 %v1430
    %v1433 = vcvt.s32.f32 %v1431
    %1434 = vmin.xlane.f32.xlu0 %v1433
    %v1435 = vpop.xlane.xlu0 %1434
    %vm1436 = vcmp.eq.f32.partialorder %v1433, %v1435
    %v1437 = vsel %vm1436, %v1432, inf
    %1438 = vmin.xlane.f32.xlu0 %v1437
    %v1439 = vpop.xlane.xlu0 %1438
    %v1440 = vcvt.f32.s32 %v1439
    %v1441 = vcvt.f32.s32 %v1435
    %v1442 = vshll.u32 %v1441, 16
    %v1443 = vadd.s32 %v1442, %v1440
    %v1444 = vsel %vm866, %v1142, 2147483647
    %v1445 = vand.u32 %v1444, 65535
    %v1446 = vshra.s32 %v1444, 16
    %v1447 = vcvt.s32.f32 %v1445
    %v1448 = vcvt.s32.f32 %v1446
    %1449 = vmin.xlane.f32.xlu0 %v1448
    %v1450 = vpop.xlane.xlu0 %1449
    %vm1451 = vcmp.eq.f32.partialorder %v1448, %v1450
    %v1452 = vsel %vm1451, %v1447, inf
    %1453 = vmin.xlane.f32.xlu0 %v1452
    %v1454 = vpop.xlane.xlu0 %1453
    %v1455 = vcvt.f32.s32 %v1454
    %v1456 = vcvt.f32.s32 %v1450
    %v1457 = vshll.u32 %v1456, 16
    %v1458 = vadd.s32 %v1457, %v1455
    %v1459 = vsel %vm866, %v1143, 2147483647
    %v1460 = vand.u32 %v1459, 65535
    %v1461 = vshra.s32 %v1459, 16
    %v1462 = vcvt.s32.f32 %v1460
    %v1463 = vcvt.s32.f32 %v1461
    %1464 = vmin.xlane.f32.xlu0 %v1463
    %v1465 = vpop.xlane.xlu0 %1464
    %vm1466 = vcmp.eq.f32.partialorder %v1463, %v1465
    %v1467 = vsel %vm1466, %v1462, inf
    %1468 = vmin.xlane.f32.xlu0 %v1467
    %v1469 = vpop.xlane.xlu0 %1468
    %v1470 = vcvt.f32.s32 %v1469
    %v1471 = vcvt.f32.s32 %v1465
    %v1472 = vshll.u32 %v1471, 16
    %v1473 = vadd.s32 %v1472, %v1470
    %v1474 = vsel %vm866, %v1144, 2147483647
    %v1475 = vand.u32 %v1474, 65535
    %v1476 = vshra.s32 %v1474, 16
    %v1477 = vcvt.s32.f32 %v1475
    %v1478 = vcvt.s32.f32 %v1476
    %1479 = vmin.xlane.f32.xlu0 %v1478
    %v1480 = vpop.xlane.xlu0 %1479
    %vm1481 = vcmp.eq.f32.partialorder %v1478, %v1480
    %v1482 = vsel %vm1481, %v1477, inf
    %1483 = vmin.xlane.f32.xlu0 %v1482
    %v1484 = vpop.xlane.xlu0 %1483
    %v1485 = vcvt.f32.s32 %v1484
    %v1486 = vcvt.f32.s32 %v1480
    %v1487 = vshll.u32 %v1486, 16
    %v1488 = vadd.s32 %v1487, %v1485
    %v1489 = vsel %vm866, %v1145, 2147483647
    %v1490 = vand.u32 %v1489, 65535
    %v1491 = vshra.s32 %v1489, 16
    %v1492 = vcvt.s32.f32 %v1490
    %v1493 = vcvt.s32.f32 %v1491
    %1494 = vmin.xlane.f32.xlu0 %v1493
    %v1495 = vpop.xlane.xlu0 %1494
    %vm1496 = vcmp.eq.f32.partialorder %v1493, %v1495
    %v1497 = vsel %vm1496, %v1492, inf
    %1498 = vmin.xlane.f32.xlu0 %v1497
    %v1499 = vpop.xlane.xlu0 %1498
    %v1500 = vcvt.f32.s32 %v1499
    %v1501 = vcvt.f32.s32 %v1495
    %v1502 = vshll.u32 %v1501, 16
    %v1503 = vadd.s32 %v1502, %v1500
    %v1504 = vsel %vm866, %v1146, 2147483647
    %v1505 = vand.u32 %v1504, 65535
    %v1506 = vshra.s32 %v1504, 16
    %v1507 = vcvt.s32.f32 %v1505
    %v1508 = vcvt.s32.f32 %v1506
    %1509 = vmin.xlane.f32.xlu0 %v1508
    %v1510 = vpop.xlane.xlu0 %1509
    %vm1511 = vcmp.eq.f32.partialorder %v1508, %v1510
    %v1512 = vsel %vm1511, %v1507, inf
    %1513 = vmin.xlane.f32.xlu0 %v1512
    %v1514 = vpop.xlane.xlu0 %1513
    %v1515 = vcvt.f32.s32 %v1514
    %v1516 = vcvt.f32.s32 %v1510
    %v1517 = vshll.u32 %v1516, 16
    %v1518 = vadd.s32 %v1517, %v1515
    %v1519 = vsel %vm866, %v1147, 2147483647
    %v1520 = vand.u32 %v1519, 65535
    %v1521 = vshra.s32 %v1519, 16
    %v1522 = vcvt.s32.f32 %v1520
    %v1523 = vcvt.s32.f32 %v1521
    %1524 = vmin.xlane.f32.xlu0 %v1523
    %v1525 = vpop.xlane.xlu0 %1524
    %vm1526 = vcmp.eq.f32.partialorder %v1523, %v1525
    %v1527 = vsel %vm1526, %v1522, inf
    %1528 = vmin.xlane.f32.xlu0 %v1527
    %v1529 = vpop.xlane.xlu0 %1528
    %v1530 = vcvt.f32.s32 %v1529
    %v1531 = vcvt.f32.s32 %v1525
    %v1532 = vshll.u32 %v1531, 16
    %v1533 = vadd.s32 %v1532, %v1530
    %v1534 = vsel %vm866, %v1148, 2147483647
    %v1535 = vand.u32 %v1534, 65535
    %v1536 = vshra.s32 %v1534, 16
    %v1537 = vcvt.s32.f32 %v1535
    %v1538 = vcvt.s32.f32 %v1536
    %1539 = vmin.xlane.f32.xlu0 %v1538
    %v1540 = vpop.xlane.xlu0 %1539
    %vm1541 = vcmp.eq.f32.partialorder %v1538, %v1540
    %v1542 = vsel %vm1541, %v1537, inf
    %1543 = vmin.xlane.f32.xlu0 %v1542
    %v1544 = vpop.xlane.xlu0 %1543
    %v1545 = vcvt.f32.s32 %v1544
    %v1546 = vcvt.f32.s32 %v1540
    %v1547 = vshll.u32 %v1546, 16
    %v1548 = vadd.s32 %v1547, %v1545
    %v1549 = vsel %vm866, %v1149, 2147483647
    %v1550 = vand.u32 %v1549, 65535
    %v1551 = vshra.s32 %v1549, 16
    %v1552 = vcvt.s32.f32 %v1550
    %v1553 = vcvt.s32.f32 %v1551
    %1554 = vmin.xlane.f32.xlu0 %v1553
    %v1555 = vpop.xlane.xlu0 %1554
    %vm1556 = vcmp.eq.f32.partialorder %v1553, %v1555
    %v1557 = vsel %vm1556, %v1552, inf
    %1558 = vmin.xlane.f32.xlu0 %v1557
    %v1559 = vpop.xlane.xlu0 %1558
    %v1560 = vcvt.f32.s32 %v1559
    %v1561 = vcvt.f32.s32 %v1555
    %v1562 = vshll.u32 %v1561, 16
    %v1563 = vadd.s32 %v1562, %v1560
    %v1564 = vsel %vm866, %v1150, 2147483647
    %v1565 = vand.u32 %v1564, 65535
    %v1566 = vshra.s32 %v1564, 16
    %v1567 = vcvt.s32.f32 %v1565
    %v1568 = vcvt.s32.f32 %v1566
    %1569 = vmin.xlane.f32.xlu0 %v1568
    %v1570 = vpop.xlane.xlu0 %1569
    %vm1571 = vcmp.eq.f32.partialorder %v1568, %v1570
    %v1572 = vsel %vm1571, %v1567, inf
    %1573 = vmin.xlane.f32.xlu0 %v1572
    %v1574 = vpop.xlane.xlu0 %1573
    %v1575 = vcvt.f32.s32 %v1574
    %v1576 = vcvt.f32.s32 %v1570
    %v1577 = vshll.u32 %v1576, 16
    %v1578 = vadd.s32 %v1577, %v1575
    %v1579 = vsel %vm866, %v1151, 2147483647
    %v1580 = vand.u32 %v1579, 65535
    %v1581 = vshra.s32 %v1579, 16
    %v1582 = vcvt.s32.f32 %v1580
    %v1583 = vcvt.s32.f32 %v1581
    %1584 = vmin.xlane.f32.xlu0 %v1583
    %v1585 = vpop.xlane.xlu0 %1584
    %vm1586 = vcmp.eq.f32.partialorder %v1583, %v1585
    %v1587 = vsel %vm1586, %v1582, inf
    %1588 = vmin.xlane.f32.xlu0 %v1587
    %v1589 = vpop.xlane.xlu0 %1588
    %v1590 = vcvt.f32.s32 %v1589
    %v1591 = vcvt.f32.s32 %v1585
    %v1592 = vshll.u32 %v1591, 16
    %v1593 = vadd.s32 %v1592, %v1590
    %v1594 = vsel %vm866, %v1152, 2147483647
    %v1595 = vand.u32 %v1594, 65535
    %v1596 = vshra.s32 %v1594, 16
    %v1597 = vcvt.s32.f32 %v1595
    %v1598 = vcvt.s32.f32 %v1596
    %1599 = vmin.xlane.f32.xlu0 %v1598
    %v1600 = vpop.xlane.xlu0 %1599
    %vm1601 = vcmp.eq.f32.partialorder %v1598, %v1600
    %v1602 = vsel %vm1601, %v1597, inf
    %1603 = vmin.xlane.f32.xlu0 %v1602
    %v1604 = vpop.xlane.xlu0 %1603
    %v1605 = vcvt.f32.s32 %v1604
    %v1606 = vcvt.f32.s32 %v1600
    %v1607 = vshll.u32 %v1606, 16
    %v1608 = vadd.s32 %v1607, %v1605
    %v1609 = vsel %vm866, %v1153, 2147483647
    %v1610 = vand.u32 %v1609, 65535
    %v1611 = vshra.s32 %v1609, 16
    %v1612 = vcvt.s32.f32 %v1610
    %v1613 = vcvt.s32.f32 %v1611
    %1614 = vmin.xlane.f32.xlu0 %v1613
    %v1615 = vpop.xlane.xlu0 %1614
    %vm1616 = vcmp.eq.f32.partialorder %v1613, %v1615
    %v1617 = vsel %vm1616, %v1612, inf
    %1618 = vmin.xlane.f32.xlu0 %v1617
    %v1619 = vpop.xlane.xlu0 %1618
    %v1620 = vcvt.f32.s32 %v1619
    %v1621 = vcvt.f32.s32 %v1615
    %v1622 = vshll.u32 %v1621, 16
    %v1623 = vadd.s32 %v1622, %v1620
    %v1624 = vsel %vm866, %v1154, 2147483647
    %v1625 = vand.u32 %v1624, 65535
    %v1626 = vshra.s32 %v1624, 16
    %v1627 = vcvt.s32.f32 %v1625
    %v1628 = vcvt.s32.f32 %v1626
    %1629 = vmin.xlane.f32.xlu0 %v1628
    %v1630 = vpop.xlane.xlu0 %1629
    %vm1631 = vcmp.eq.f32.partialorder %v1628, %v1630
    %v1632 = vsel %vm1631, %v1627, inf
    %1633 = vmin.xlane.f32.xlu0 %v1632
    %v1634 = vpop.xlane.xlu0 %1633
    %v1635 = vcvt.f32.s32 %v1634
    %v1636 = vcvt.f32.s32 %v1630
    %v1637 = vshll.u32 %v1636, 16
    %v1638 = vadd.s32 %v1637, %v1635
    %v1639 = vsel %vm866, %v1155, 2147483647
    %v1640 = vand.u32 %v1639, 65535
    %v1641 = vshra.s32 %v1639, 16
    %v1642 = vcvt.s32.f32 %v1640
    %v1643 = vcvt.s32.f32 %v1641
    %1644 = vmin.xlane.f32.xlu0 %v1643
    %v1645 = vpop.xlane.xlu0 %1644
    %vm1646 = vcmp.eq.f32.partialorder %v1643, %v1645
    %v1647 = vsel %vm1646, %v1642, inf
    %1648 = vmin.xlane.f32.xlu0 %v1647
    %v1649 = vpop.xlane.xlu0 %1648
    %v1650 = vcvt.f32.s32 %v1649
    %v1651 = vcvt.f32.s32 %v1645
    %v1652 = vshll.u32 %v1651, 16
    %v1653 = vadd.s32 %v1652, %v1650
    %v1654 = vsel %vm866, %v1156, 2147483647
    %v1655 = vand.u32 %v1654, 65535
    %v1656 = vshra.s32 %v1654, 16
    %v1657 = vcvt.s32.f32 %v1655
    %v1658 = vcvt.s32.f32 %v1656
    %1659 = vmin.xlane.f32.xlu0 %v1658
    %v1660 = vpop.xlane.xlu0 %1659
    %vm1661 = vcmp.eq.f32.partialorder %v1658, %v1660
    %v1662 = vsel %vm1661, %v1657, inf
    %1663 = vmin.xlane.f32.xlu0 %v1662
    %v1664 = vpop.xlane.xlu0 %1663
    %v1665 = vcvt.f32.s32 %v1664
    %v1666 = vcvt.f32.s32 %v1660
    %v1667 = vshll.u32 %v1666, 16
    %v1668 = vadd.s32 %v1667, %v1665
    %v1669 = vsel %vm866, %v1157, 2147483647
    %v1670 = vand.u32 %v1669, 65535
    %v1671 = vshra.s32 %v1669, 16
    %v1672 = vcvt.s32.f32 %v1670
    %v1673 = vcvt.s32.f32 %v1671
    %1674 = vmin.xlane.f32.xlu0 %v1673
    %v1675 = vpop.xlane.xlu0 %1674
    %vm1676 = vcmp.eq.f32.partialorder %v1673, %v1675
    %v1677 = vsel %vm1676, %v1672, inf
    %1678 = vmin.xlane.f32.xlu0 %v1677
    %v1679 = vpop.xlane.xlu0 %1678
    %v1680 = vcvt.f32.s32 %v1679
    %v1681 = vcvt.f32.s32 %v1675
    %v1682 = vshll.u32 %v1681, 16
    %v1683 = vadd.s32 %v1682, %v1680
    %v1684 = vsel %vm866, %v1158, 2147483647
    %v1685 = vand.u32 %v1684, 65535
    %v1686 = vshra.s32 %v1684, 16
    %v1687 = vcvt.s32.f32 %v1685
    %v1688 = vcvt.s32.f32 %v1686
    %1689 = vmin.xlane.f32.xlu0 %v1688
    %v1690 = vpop.xlane.xlu0 %1689
    %vm1691 = vcmp.eq.f32.partialorder %v1688, %v1690
    %v1692 = vsel %vm1691, %v1687, inf
    %1693 = vmin.xlane.f32.xlu0 %v1692
    %v1694 = vpop.xlane.xlu0 %1693
    %v1695 = vcvt.f32.s32 %v1694
    %v1696 = vcvt.f32.s32 %v1690
    %v1697 = vshll.u32 %v1696, 16
    %v1698 = vadd.s32 %v1697, %v1695
    %v1699 = vsel %vm866, %v1159, 2147483647
    %v1700 = vand.u32 %v1699, 65535
    %v1701 = vshra.s32 %v1699, 16
    %v1702 = vcvt.s32.f32 %v1700
    %v1703 = vcvt.s32.f32 %v1701
    %1704 = vmin.xlane.f32.xlu0 %v1703
    %v1705 = vpop.xlane.xlu0 %1704
    %vm1706 = vcmp.eq.f32.partialorder %v1703, %v1705
    %v1707 = vsel %vm1706, %v1702, inf
    %1708 = vmin.xlane.f32.xlu0 %v1707
    %v1709 = vpop.xlane.xlu0 %1708
    %v1710 = vcvt.f32.s32 %v1709
    %v1711 = vcvt.f32.s32 %v1705
    %v1712 = vshll.u32 %v1711, 16
    %v1713 = vadd.s32 %v1712, %v1710
    %v1714 = vsel %vm866, %v1160, 2147483647
    %v1715 = vand.u32 %v1714, 65535
    %v1716 = vshra.s32 %v1714, 16
    %v1717 = vcvt.s32.f32 %v1715
    %v1718 = vcvt.s32.f32 %v1716
    %1719 = vmin.xlane.f32.xlu0 %v1718
    %v1720 = vpop.xlane.xlu0 %1719
    %vm1721 = vcmp.eq.f32.partialorder %v1718, %v1720
    %v1722 = vsel %vm1721, %v1717, inf
    %1723 = vmin.xlane.f32.xlu0 %v1722
    %v1724 = vpop.xlane.xlu0 %1723
    %v1725 = vcvt.f32.s32 %v1724
    %v1726 = vcvt.f32.s32 %v1720
    %v1727 = vshll.u32 %v1726, 16
    %v1728 = vadd.s32 %v1727, %v1725
    %v1729 = vsel %vm866, %v1161, 2147483647
    %v1730 = vand.u32 %v1729, 65535
    %v1731 = vshra.s32 %v1729, 16
    %v1732 = vcvt.s32.f32 %v1730
    %v1733 = vcvt.s32.f32 %v1731
    %1734 = vmin.xlane.f32.xlu0 %v1733
    %v1735 = vpop.xlane.xlu0 %1734
    %vm1736 = vcmp.eq.f32.partialorder %v1733, %v1735
    %v1737 = vsel %vm1736, %v1732, inf
    %1738 = vmin.xlane.f32.xlu0 %v1737
    %v1739 = vpop.xlane.xlu0 %1738
    %v1740 = vcvt.f32.s32 %v1739
    %v1741 = vcvt.f32.s32 %v1735
    %v1742 = vshll.u32 %v1741, 16
    %v1743 = vadd.s32 %v1742, %v1740
    %v1744 = vsel %vm866, %v1162, 2147483647
    %v1745 = vand.u32 %v1744, 65535
    %v1746 = vshra.s32 %v1744, 16
    %v1747 = vcvt.s32.f32 %v1745
    %v1748 = vcvt.s32.f32 %v1746
    %1749 = vmin.xlane.f32.xlu0 %v1748
    %v1750 = vpop.xlane.xlu0 %1749
    %vm1751 = vcmp.eq.f32.partialorder %v1748, %v1750
    %v1752 = vsel %vm1751, %v1747, inf
    %1753 = vmin.xlane.f32.xlu0 %v1752
    %v1754 = vpop.xlane.xlu0 %1753
    %v1755 = vcvt.f32.s32 %v1754
    %v1756 = vcvt.f32.s32 %v1750
    %v1757 = vshll.u32 %v1756, 16
    %v1758 = vadd.s32 %v1757, %v1755
    %v1759 = vsel %vm866, %v1163, 2147483647
    %v1760 = vand.u32 %v1759, 65535
    %v1761 = vshra.s32 %v1759, 16
    %v1762 = vcvt.s32.f32 %v1760
    %v1763 = vcvt.s32.f32 %v1761
    %1764 = vmin.xlane.f32.xlu0 %v1763
    %v1765 = vpop.xlane.xlu0 %1764
    %vm1766 = vcmp.eq.f32.partialorder %v1763, %v1765
    %v1767 = vsel %vm1766, %v1762, inf
    %1768 = vmin.xlane.f32.xlu0 %v1767
    %v1769 = vpop.xlane.xlu0 %1768
    %v1770 = vcvt.f32.s32 %v1769
    %v1771 = vcvt.f32.s32 %v1765
    %v1772 = vshll.u32 %v1771, 16
    %v1773 = vadd.s32 %v1772, %v1770
    %v1774 = vsel %vm866, %v1164, 2147483647
    %v1775 = vand.u32 %v1774, 65535
    %v1776 = vshra.s32 %v1774, 16
    %v1777 = vcvt.s32.f32 %v1775
    %v1778 = vcvt.s32.f32 %v1776
    %1779 = vmin.xlane.f32.xlu0 %v1778
    %v1780 = vpop.xlane.xlu0 %1779
    %vm1781 = vcmp.eq.f32.partialorder %v1778, %v1780
    %v1782 = vsel %vm1781, %v1777, inf
    %1783 = vmin.xlane.f32.xlu0 %v1782
    %v1784 = vpop.xlane.xlu0 %1783
    %v1785 = vcvt.f32.s32 %v1784
    %v1786 = vcvt.f32.s32 %v1780
    %v1787 = vshll.u32 %v1786, 16
    %v1788 = vadd.s32 %v1787, %v1785
    %v1789 = vsel %vm866, %v1165, 2147483647
    %v1790 = vand.u32 %v1789, 65535
    %v1791 = vshra.s32 %v1789, 16
    %v1792 = vcvt.s32.f32 %v1790
    %v1793 = vcvt.s32.f32 %v1791
    %1794 = vmin.xlane.f32.xlu0 %v1793
    %v1795 = vpop.xlane.xlu0 %1794
    %vm1796 = vcmp.eq.f32.partialorder %v1793, %v1795
    %v1797 = vsel %vm1796, %v1792, inf
    %1798 = vmin.xlane.f32.xlu0 %v1797
    %v1799 = vpop.xlane.xlu0 %1798
    %v1800 = vcvt.f32.s32 %v1799
    %v1801 = vcvt.f32.s32 %v1795
    %v1802 = vshll.u32 %v1801, 16
    %v1803 = vadd.s32 %v1802, %v1800
    %v1804 = vsel %vm866, %v1166, 2147483647
    %v1805 = vand.u32 %v1804, 65535
    %v1806 = vshra.s32 %v1804, 16
    %v1807 = vcvt.s32.f32 %v1805
    %v1808 = vcvt.s32.f32 %v1806
    %1809 = vmin.xlane.f32.xlu0 %v1808
    %v1810 = vpop.xlane.xlu0 %1809
    %vm1811 = vcmp.eq.f32.partialorder %v1808, %v1810
    %v1812 = vsel %vm1811, %v1807, inf
    %1813 = vmin.xlane.f32.xlu0 %v1812
    %v1814 = vpop.xlane.xlu0 %1813
    %v1815 = vcvt.f32.s32 %v1814
    %v1816 = vcvt.f32.s32 %v1810
    %v1817 = vshll.u32 %v1816, 16
    %v1818 = vadd.s32 %v1817, %v1815
    %v1819 = vsel %vm866, %v1167, 2147483647
    %v1820 = vand.u32 %v1819, 65535
    %v1821 = vshra.s32 %v1819, 16
    %v1822 = vcvt.s32.f32 %v1820
    %v1823 = vcvt.s32.f32 %v1821
    %1824 = vmin.xlane.f32.xlu0 %v1823
    %v1825 = vpop.xlane.xlu0 %1824
    %vm1826 = vcmp.eq.f32.partialorder %v1823, %v1825
    %v1827 = vsel %vm1826, %v1822, inf
    %1828 = vmin.xlane.f32.xlu0 %v1827
    %v1829 = vpop.xlane.xlu0 %1828
    %v1830 = vcvt.f32.s32 %v1829
    %v1831 = vcvt.f32.s32 %v1825
    %v1832 = vshll.u32 %v1831, 16
    %v1833 = vadd.s32 %v1832, %v1830
    %v1834 = vsel %vm866, %v1168, 2147483647
    %v1835 = vand.u32 %v1834, 65535
    %v1836 = vshra.s32 %v1834, 16
    %v1837 = vcvt.s32.f32 %v1835
    %v1838 = vcvt.s32.f32 %v1836
    %1839 = vmin.xlane.f32.xlu0 %v1838
    %v1840 = vpop.xlane.xlu0 %1839
    %vm1841 = vcmp.eq.f32.partialorder %v1838, %v1840
    %v1842 = vsel %vm1841, %v1837, inf
    %1843 = vmin.xlane.f32.xlu0 %v1842
    %v1844 = vpop.xlane.xlu0 %1843
    %v1845 = vcvt.f32.s32 %v1844
    %v1846 = vcvt.f32.s32 %v1840
    %v1847 = vshll.u32 %v1846, 16
    %v1848 = vadd.s32 %v1847, %v1845
    %v1849 = vsel %vm866, %v1169, 2147483647
    %v1850 = vand.u32 %v1849, 65535
    %v1851 = vshra.s32 %v1849, 16
    %v1852 = vcvt.s32.f32 %v1850
    %v1853 = vcvt.s32.f32 %v1851
    %1854 = vmin.xlane.f32.xlu0 %v1853
    %v1855 = vpop.xlane.xlu0 %1854
    %vm1856 = vcmp.eq.f32.partialorder %v1853, %v1855
    %v1857 = vsel %vm1856, %v1852, inf
    %1858 = vmin.xlane.f32.xlu0 %v1857
    %v1859 = vpop.xlane.xlu0 %1858
    %v1860 = vcvt.f32.s32 %v1859
    %v1861 = vcvt.f32.s32 %v1855
    %v1862 = vshll.u32 %v1861, 16
    %v1863 = vadd.s32 %v1862, %v1860
    %v1864 = vsel %vm866, %v1170, 2147483647
    %v1865 = vand.u32 %v1864, 65535
    %v1866 = vshra.s32 %v1864, 16
    %v1867 = vcvt.s32.f32 %v1865
    %v1868 = vcvt.s32.f32 %v1866
    %1869 = vmin.xlane.f32.xlu0 %v1868
    %v1870 = vpop.xlane.xlu0 %1869
    %vm1871 = vcmp.eq.f32.partialorder %v1868, %v1870
    %v1872 = vsel %vm1871, %v1867, inf
    %1873 = vmin.xlane.f32.xlu0 %v1872
    %v1874 = vpop.xlane.xlu0 %1873
    %v1875 = vcvt.f32.s32 %v1874
    %v1876 = vcvt.f32.s32 %v1870
    %v1877 = vshll.u32 %v1876, 16
    %v1878 = vadd.s32 %v1877, %v1875
    %v1879 = vsel %vm866, %v1171, 2147483647
    %v1880 = vand.u32 %v1879, 65535
    %v1881 = vshra.s32 %v1879, 16
    %v1882 = vcvt.s32.f32 %v1880
    %v1883 = vcvt.s32.f32 %v1881
    %1884 = vmin.xlane.f32.xlu0 %v1883
    %v1885 = vpop.xlane.xlu0 %1884
    %vm1886 = vcmp.eq.f32.partialorder %v1883, %v1885
    %v1887 = vsel %vm1886, %v1882, inf
    %1888 = vmin.xlane.f32.xlu0 %v1887
    %v1889 = vpop.xlane.xlu0 %1888
    %v1890 = vcvt.f32.s32 %v1889
    %v1891 = vcvt.f32.s32 %v1885
    %v1892 = vshll.u32 %v1891, 16
    %v1893 = vadd.s32 %v1892, %v1890
    %v1894 = vsel %vm866, %v1172, 2147483647
    %v1895 = vand.u32 %v1894, 65535
    %v1896 = vshra.s32 %v1894, 16
    %v1897 = vcvt.s32.f32 %v1895
    %v1898 = vcvt.s32.f32 %v1896
    %1899 = vmin.xlane.f32.xlu0 %v1898
    %v1900 = vpop.xlane.xlu0 %1899
    %vm1901 = vcmp.eq.f32.partialorder %v1898, %v1900
    %v1902 = vsel %vm1901, %v1897, inf
    %1903 = vmin.xlane.f32.xlu0 %v1902
    %v1904 = vpop.xlane.xlu0 %1903
    %v1905 = vcvt.f32.s32 %v1904
    %v1906 = vcvt.f32.s32 %v1900
    %v1907 = vshll.u32 %v1906, 16
    %v1908 = vadd.s32 %v1907, %v1905
    %v1909 = vsel %vm866, %v1173, 2147483647
    %v1910 = vand.u32 %v1909, 65535
    %v1911 = vshra.s32 %v1909, 16
    %v1912 = vcvt.s32.f32 %v1910
    %v1913 = vcvt.s32.f32 %v1911
    %1914 = vmin.xlane.f32.xlu0 %v1913
    %v1915 = vpop.xlane.xlu0 %1914
    %vm1916 = vcmp.eq.f32.partialorder %v1913, %v1915
    %v1917 = vsel %vm1916, %v1912, inf
    %1918 = vmin.xlane.f32.xlu0 %v1917
    %v1919 = vpop.xlane.xlu0 %1918
    %v1920 = vcvt.f32.s32 %v1919
    %v1921 = vcvt.f32.s32 %v1915
    %v1922 = vshll.u32 %v1921, 16
    %v1923 = vadd.s32 %v1922, %v1920
    %v1924 = vsel %vm866, %v1174, 2147483647
    %v1925 = vand.u32 %v1924, 65535
    %v1926 = vshra.s32 %v1924, 16
    %v1927 = vcvt.s32.f32 %v1925
    %v1928 = vcvt.s32.f32 %v1926
    %1929 = vmin.xlane.f32.xlu0 %v1928
    %v1930 = vpop.xlane.xlu0 %1929
    %vm1931 = vcmp.eq.f32.partialorder %v1928, %v1930
    %v1932 = vsel %vm1931, %v1927, inf
    %1933 = vmin.xlane.f32.xlu0 %v1932
    %v1934 = vpop.xlane.xlu0 %1933
    %v1935 = vcvt.f32.s32 %v1934
    %v1936 = vcvt.f32.s32 %v1930
    %v1937 = vshll.u32 %v1936, 16
    %v1938 = vadd.s32 %v1937, %v1935
    %v1939 = vsel %vm866, %v1175, 2147483647
    %v1940 = vand.u32 %v1939, 65535
    %v1941 = vshra.s32 %v1939, 16
    %v1942 = vcvt.s32.f32 %v1940
    %v1943 = vcvt.s32.f32 %v1941
    %1944 = vmin.xlane.f32.xlu0 %v1943
    %v1945 = vpop.xlane.xlu0 %1944
    %vm1946 = vcmp.eq.f32.partialorder %v1943, %v1945
    %v1947 = vsel %vm1946, %v1942, inf
    %1948 = vmin.xlane.f32.xlu0 %v1947
    %v1949 = vpop.xlane.xlu0 %1948
    %v1950 = vcvt.f32.s32 %v1949
    %v1951 = vcvt.f32.s32 %v1945
    %v1952 = vshll.u32 %v1951, 16
    %v1953 = vadd.s32 %v1952, %v1950
    %v1954 = vsel %vm866, %v1176, 2147483647
    %v1955 = vand.u32 %v1954, 65535
    %v1956 = vshra.s32 %v1954, 16
    %v1957 = vcvt.s32.f32 %v1955
    %v1958 = vcvt.s32.f32 %v1956
    %1959 = vmin.xlane.f32.xlu0 %v1958
    %v1960 = vpop.xlane.xlu0 %1959
    %vm1961 = vcmp.eq.f32.partialorder %v1958, %v1960
    %v1962 = vsel %vm1961, %v1957, inf
    %1963 = vmin.xlane.f32.xlu0 %v1962
    %v1964 = vpop.xlane.xlu0 %1963
    %v1965 = vcvt.f32.s32 %v1964
    %v1966 = vcvt.f32.s32 %v1960
    %v1967 = vshll.u32 %v1966, 16
    %v1968 = vadd.s32 %v1967, %v1965
    %v1969 = vsel %vm866, %v1177, 2147483647
    %v1970 = vand.u32 %v1969, 65535
    %v1971 = vshra.s32 %v1969, 16
    %v1972 = vcvt.s32.f32 %v1970
    %v1973 = vcvt.s32.f32 %v1971
    %1974 = vmin.xlane.f32.xlu0 %v1973
    %v1975 = vpop.xlane.xlu0 %1974
    %vm1976 = vcmp.eq.f32.partialorder %v1973, %v1975
    %v1977 = vsel %vm1976, %v1972, inf
    %1978 = vmin.xlane.f32.xlu0 %v1977
    %v1979 = vpop.xlane.xlu0 %1978
    %v1980 = vcvt.f32.s32 %v1979
    %v1981 = vcvt.f32.s32 %v1975
    %v1982 = vshll.u32 %v1981, 16
    %v1983 = vadd.s32 %v1982, %v1980
    %v1984 = vsel %vm866, %v1178, 2147483647
    %v1985 = vand.u32 %v1984, 65535
    %v1986 = vshra.s32 %v1984, 16
    %v1987 = vcvt.s32.f32 %v1985
    %v1988 = vcvt.s32.f32 %v1986
    %1989 = vmin.xlane.f32.xlu0 %v1988
    %v1990 = vpop.xlane.xlu0 %1989
    %vm1991 = vcmp.eq.f32.partialorder %v1988, %v1990
    %v1992 = vsel %vm1991, %v1987, inf
    %1993 = vmin.xlane.f32.xlu0 %v1992
    %v1994 = vpop.xlane.xlu0 %1993
    %v1995 = vcvt.f32.s32 %v1994
    %v1996 = vcvt.f32.s32 %v1990
    %v1997 = vshll.u32 %v1996, 16
    %v1998 = vadd.s32 %v1997, %v1995
    %v1999 = vsel %vm866, %v1179, 2147483647
    %v2000 = vand.u32 %v1999, 65535
    %v2001 = vshra.s32 %v1999, 16
    %v2002 = vcvt.s32.f32 %v2000
    %v2003 = vcvt.s32.f32 %v2001
    %2004 = vmin.xlane.f32.xlu0 %v2003
    %v2005 = vpop.xlane.xlu0 %2004
    %vm2006 = vcmp.eq.f32.partialorder %v2003, %v2005
    %v2007 = vsel %vm2006, %v2002, inf
    %2008 = vmin.xlane.f32.xlu0 %v2007
    %v2009 = vpop.xlane.xlu0 %2008
    %v2010 = vcvt.f32.s32 %v2009
    %v2011 = vcvt.f32.s32 %v2005
    %v2012 = vshll.u32 %v2011, 16
    %v2013 = vadd.s32 %v2012, %v2010
    %v2014 = vsel %vm866, %v1180, 2147483647
    %v2015 = vand.u32 %v2014, 65535
    %v2016 = vshra.s32 %v2014, 16
    %v2017 = vcvt.s32.f32 %v2015
    %v2018 = vcvt.s32.f32 %v2016
    %2019 = vmin.xlane.f32.xlu0 %v2018
    %v2020 = vpop.xlane.xlu0 %2019
    %vm2021 = vcmp.eq.f32.partialorder %v2018, %v2020
    %v2022 = vsel %vm2021, %v2017, inf
    %2023 = vmin.xlane.f32.xlu0 %v2022
    %v2024 = vpop.xlane.xlu0 %2023
    %v2025 = vcvt.f32.s32 %v2024
    %v2026 = vcvt.f32.s32 %v2020
    %v2027 = vshll.u32 %v2026, 16
    %v2028 = vadd.s32 %v2027, %v2025
    %v2029 = vsel %vm866, %v1181, 2147483647
    %v2030 = vand.u32 %v2029, 65535
    %v2031 = vshra.s32 %v2029, 16
    %v2032 = vcvt.s32.f32 %v2030
    %v2033 = vcvt.s32.f32 %v2031
    %2034 = vmin.xlane.f32.xlu0 %v2033
    %v2035 = vpop.xlane.xlu0 %2034
    %vm2036 = vcmp.eq.f32.partialorder %v2033, %v2035
    %v2037 = vsel %vm2036, %v2032, inf
    %2038 = vmin.xlane.f32.xlu0 %v2037
    %v2039 = vpop.xlane.xlu0 %2038
    %v2040 = vcvt.f32.s32 %v2039
    %v2041 = vcvt.f32.s32 %v2035
    %v2042 = vshll.u32 %v2041, 16
    %v2043 = vadd.s32 %v2042, %v2040
    %v2044 = vsel %vm866, %v1182, 2147483647
    %v2045 = vand.u32 %v2044, 65535
    %v2046 = vshra.s32 %v2044, 16
    %v2047 = vcvt.s32.f32 %v2045
    %v2048 = vcvt.s32.f32 %v2046
    %2049 = vmin.xlane.f32.xlu0 %v2048
    %v2050 = vpop.xlane.xlu0 %2049
    %vm2051 = vcmp.eq.f32.partialorder %v2048, %v2050
    %v2052 = vsel %vm2051, %v2047, inf
    %2053 = vmin.xlane.f32.xlu0 %v2052
    %v2054 = vpop.xlane.xlu0 %2053
    %v2055 = vcvt.f32.s32 %v2054
    %v2056 = vcvt.f32.s32 %v2050
    %v2057 = vshll.u32 %v2056, 16
    %v2058 = vadd.s32 %v2057, %v2055
    %v2059 = vsel %vm866, %v1183, 2147483647
    %v2060 = vand.u32 %v2059, 65535
    %v2061 = vshra.s32 %v2059, 16
    %v2062 = vcvt.s32.f32 %v2060
    %v2063 = vcvt.s32.f32 %v2061
    %2064 = vmin.xlane.f32.xlu0 %v2063
    %v2065 = vpop.xlane.xlu0 %2064
    %vm2066 = vcmp.eq.f32.partialorder %v2063, %v2065
    %v2067 = vsel %vm2066, %v2062, inf
    %2068 = vmin.xlane.f32.xlu0 %v2067
    %v2069 = vpop.xlane.xlu0 %2068
    %v2070 = vcvt.f32.s32 %v2069
    %v2071 = vcvt.f32.s32 %v2065
    %v2072 = vshll.u32 %v2071, 16
    %v2073 = vadd.s32 %v2072, %v2070
    %v2074 = vsel %vm866, %v1184, 2147483647
    %v2075 = vand.u32 %v2074, 65535
    %v2076 = vshra.s32 %v2074, 16
    %v2077 = vcvt.s32.f32 %v2075
    %v2078 = vcvt.s32.f32 %v2076
    %2079 = vmin.xlane.f32.xlu0 %v2078
    %v2080 = vpop.xlane.xlu0 %2079
    %vm2081 = vcmp.eq.f32.partialorder %v2078, %v2080
    %v2082 = vsel %vm2081, %v2077, inf
    %2083 = vmin.xlane.f32.xlu0 %v2082
    %v2084 = vpop.xlane.xlu0 %2083
    %v2085 = vcvt.f32.s32 %v2084
    %v2086 = vcvt.f32.s32 %v2080
    %v2087 = vshll.u32 %v2086, 16
    %v2088 = vadd.s32 %v2087, %v2085
    %v2089 = vsel %vm866, %v1185, 2147483647
    %v2090 = vand.u32 %v2089, 65535
    %v2091 = vshra.s32 %v2089, 16
    %v2092 = vcvt.s32.f32 %v2090
    %v2093 = vcvt.s32.f32 %v2091
    %2094 = vmin.xlane.f32.xlu0 %v2093
    %v2095 = vpop.xlane.xlu0 %2094
    %vm2096 = vcmp.eq.f32.partialorder %v2093, %v2095
    %v2097 = vsel %vm2096, %v2092, inf
    %2098 = vmin.xlane.f32.xlu0 %v2097
    %v2099 = vpop.xlane.xlu0 %2098
    %v2100 = vcvt.f32.s32 %v2099
    %v2101 = vcvt.f32.s32 %v2095
    %v2102 = vshll.u32 %v2101, 16
    %v2103 = vadd.s32 %v2102, %v2100
    %v2104 = vsel %vm866, %v1186, 2147483647
    %v2105 = vand.u32 %v2104, 65535
    %v2106 = vshra.s32 %v2104, 16
    %v2107 = vcvt.s32.f32 %v2105
    %v2108 = vcvt.s32.f32 %v2106
    %2109 = vmin.xlane.f32.xlu0 %v2108
    %v2110 = vpop.xlane.xlu0 %2109
    %vm2111 = vcmp.eq.f32.partialorder %v2108, %v2110
    %v2112 = vsel %vm2111, %v2107, inf
    %2113 = vmin.xlane.f32.xlu0 %v2112
    %v2114 = vpop.xlane.xlu0 %2113
    %v2115 = vcvt.f32.s32 %v2114
    %v2116 = vcvt.f32.s32 %v2110
    %v2117 = vshll.u32 %v2116, 16
    %v2118 = vadd.s32 %v2117, %v2115
    %v2119 = vsel %vm866, %v1187, 2147483647
    %v2120 = vand.u32 %v2119, 65535
    %v2121 = vshra.s32 %v2119, 16
    %v2122 = vcvt.s32.f32 %v2120
    %v2123 = vcvt.s32.f32 %v2121
    %2124 = vmin.xlane.f32.xlu0 %v2123
    %v2125 = vpop.xlane.xlu0 %2124
    %vm2126 = vcmp.eq.f32.partialorder %v2123, %v2125
    %v2127 = vsel %vm2126, %v2122, inf
    %2128 = vmin.xlane.f32.xlu0 %v2127
    %v2129 = vpop.xlane.xlu0 %2128
    %v2130 = vcvt.f32.s32 %v2129
    %v2131 = vcvt.f32.s32 %v2125
    %v2132 = vshll.u32 %v2131, 16
    %v2133 = vadd.s32 %v2132, %v2130
    %v2134 = vsel %vm866, %v1188, 2147483647
    %v2135 = vand.u32 %v2134, 65535
    %v2136 = vshra.s32 %v2134, 16
    %v2137 = vcvt.s32.f32 %v2135
    %v2138 = vcvt.s32.f32 %v2136
    %2139 = vmin.xlane.f32.xlu0 %v2138
    %v2140 = vpop.xlane.xlu0 %2139
    %vm2141 = vcmp.eq.f32.partialorder %v2138, %v2140
    %v2142 = vsel %vm2141, %v2137, inf
    %2143 = vmin.xlane.f32.xlu0 %v2142
    %v2144 = vpop.xlane.xlu0 %2143
    %v2145 = vcvt.f32.s32 %v2144
    %v2146 = vcvt.f32.s32 %v2140
    %v2147 = vshll.u32 %v2146, 16
    %v2148 = vadd.s32 %v2147, %v2145
    %s2149 = sadd.s32 0, 0
    %v2150 = vlaneseq
    %v2151 = vshrl.u32 %v2150, 7
    %v2152 = vadd.s32 %v2151, 8
    %v2153 = vadd.s32 %v2151, 16
    %v2154 = vadd.s32 %v2151, 24
    %v2155 = vadd.s32 %v2151, 32
    %v2156 = vadd.s32 %v2151, 40
    %v2157 = vadd.s32 %v2151, 48
    %v2158 = vadd.s32 %v2151, 56
    %v2159 = vadd.s32 %v2151, 64
    %v2160 = vadd.s32 %v2151, 72
    %v2161 = vadd.s32 %v2151, 80
    %v2162 = vadd.s32 %v2151, 88
    %v2163 = vadd.s32 %v2151, 96
    %v2164 = vadd.s32 %v2151, 104
    %v2165 = vadd.s32 %v2151, 112
    %v2166 = vadd.s32 %v2151, 120
    %v2167 = vadd.s32 %v2151, 128
    %v2168 = vadd.s32 %v2151, 136
    %v2169 = vadd.s32 %v2151, 144
    %v2170 = vadd.s32 %v2151, 152
    %v2171 = vadd.s32 %v2151, 160
    %v2172 = vadd.s32 %v2151, 168
    %v2173 = vadd.s32 %v2151, 176
    %v2174 = vadd.s32 %v2151, 184
    %v2175 = vadd.s32 %v2151, 192
    %v2176 = vadd.s32 %v2151, 200
    %v2177 = vadd.s32 %v2151, 208
    %v2178 = vadd.s32 %v2151, 216
    %v2179 = vadd.s32 %v2151, 224
    %v2180 = vadd.s32 %v2151, 232
    %v2181 = vadd.s32 %v2151, 240
    %v2182 = vadd.s32 %v2151, 248
    %v2183 = vadd.s32 %v2151, 256
    %v2184 = vadd.s32 %v2151, 264
    %v2185 = vadd.s32 %v2151, 272
    %v2186 = vadd.s32 %v2151, 280
    %v2187 = vadd.s32 %v2151, 288
    %v2188 = vadd.s32 %v2151, 296
    %v2189 = vadd.s32 %v2151, 304
    %v2190 = vadd.s32 %v2151, 312
    %v2191 = vadd.s32 %v2151, 320
    %v2192 = vadd.s32 %v2151, 328
    %v2193 = vadd.s32 %v2151, 336
    %v2194 = vadd.s32 %v2151, 344
    %v2195 = vadd.s32 %v2151, 352
    %v2196 = vadd.s32 %v2151, 360
    %v2197 = vadd.s32 %v2151, 368
    %v2198 = vadd.s32 %v2151, 376
    %v2199 = vadd.s32 %v2151, 384
    %v2200 = vadd.s32 %v2151, 392
    %v2201 = vadd.s32 %v2151, 400
    %v2202 = vadd.s32 %v2151, 408
    %v2203 = vadd.s32 %v2151, 416
    %v2204 = vadd.s32 %v2151, 424
    %v2205 = vadd.s32 %v2151, 432
    %v2206 = vadd.s32 %v2151, 440
    %v2207 = vadd.s32 %v2151, 448
    %v2208 = vadd.s32 %v2151, 456
    %v2209 = vadd.s32 %v2151, 464
    %v2210 = vadd.s32 %v2151, 472
    %v2211 = vadd.s32 %v2151, 480
    %v2212 = vadd.s32 %v2151, 488
    %v2213 = vadd.s32 %v2151, 496
    %v2214 = vadd.s32 %v2151, 504
    %s2215 = smul.u32 %s2149, 512
    %v2216 = vstv %s2215
    %v2217 = vadd.s32 %v2151, %v2216
    %v2218 = vadd.s32 %v2152, %v2216
    %v2219 = vadd.s32 %v2153, %v2216
    %v2220 = vadd.s32 %v2154, %v2216
    %v2221 = vadd.s32 %v2155, %v2216
    %v2222 = vadd.s32 %v2156, %v2216
    %v2223 = vadd.s32 %v2157, %v2216
    %v2224 = vadd.s32 %v2158, %v2216
    %v2225 = vadd.s32 %v2159, %v2216
    %v2226 = vadd.s32 %v2160, %v2216
    %v2227 = vadd.s32 %v2161, %v2216
    %v2228 = vadd.s32 %v2162, %v2216
    %v2229 = vadd.s32 %v2163, %v2216
    %v2230 = vadd.s32 %v2164, %v2216
    %v2231 = vadd.s32 %v2165, %v2216
    %v2232 = vadd.s32 %v2166, %v2216
    %v2233 = vadd.s32 %v2167, %v2216
    %v2234 = vadd.s32 %v2168, %v2216
    %v2235 = vadd.s32 %v2169, %v2216
    %v2236 = vadd.s32 %v2170, %v2216
    %v2237 = vadd.s32 %v2171, %v2216
    %v2238 = vadd.s32 %v2172, %v2216
    %v2239 = vadd.s32 %v2173, %v2216
    %v2240 = vadd.s32 %v2174, %v2216
    %v2241 = vadd.s32 %v2175, %v2216
    %v2242 = vadd.s32 %v2176, %v2216
    %v2243 = vadd.s32 %v2177, %v2216
    %v2244 = vadd.s32 %v2178, %v2216
    %v2245 = vadd.s32 %v2179, %v2216
    %v2246 = vadd.s32 %v2180, %v2216
    %v2247 = vadd.s32 %v2181, %v2216
    %v2248 = vadd.s32 %v2182, %v2216
    %v2249 = vadd.s32 %v2183, %v2216
    %v2250 = vadd.s32 %v2184, %v2216
    %v2251 = vadd.s32 %v2185, %v2216
    %v2252 = vadd.s32 %v2186, %v2216
    %v2253 = vadd.s32 %v2187, %v2216
    %v2254 = vadd.s32 %v2188, %v2216
    %v2255 = vadd.s32 %v2189, %v2216
    %v2256 = vadd.s32 %v2190, %v2216
    %v2257 = vadd.s32 %v2191, %v2216
    %v2258 = vadd.s32 %v2192, %v2216
    %v2259 = vadd.s32 %v2193, %v2216
    %v2260 = vadd.s32 %v2194, %v2216
    %v2261 = vadd.s32 %v2195, %v2216
    %v2262 = vadd.s32 %v2196, %v2216
    %v2263 = vadd.s32 %v2197, %v2216
    %v2264 = vadd.s32 %v2198, %v2216
    %v2265 = vadd.s32 %v2199, %v2216
    %v2266 = vadd.s32 %v2200, %v2216
    %v2267 = vadd.s32 %v2201, %v2216
    %v2268 = vadd.s32 %v2202, %v2216
    %v2269 = vadd.s32 %v2203, %v2216
    %v2270 = vadd.s32 %v2204, %v2216
    %v2271 = vadd.s32 %v2205, %v2216
    %v2272 = vadd.s32 %v2206, %v2216
    %v2273 = vadd.s32 %v2207, %v2216
    %v2274 = vadd.s32 %v2208, %v2216
    %v2275 = vadd.s32 %v2209, %v2216
    %v2276 = vadd.s32 %v2210, %v2216
    %v2277 = vadd.s32 %v2211, %v2216
    %v2278 = vadd.s32 %v2212, %v2216
    %v2279 = vadd.s32 %v2213, %v2216
    %v2280 = vadd.s32 %v2214, %v2216
    %vm2281 = vcmp.lt.s32.totalorder %v2217, 512
    %vm2282 = vcmp.lt.s32.totalorder %v2218, 512
    %vm2283 = vcmp.lt.s32.totalorder %v2219, 512
    %vm2284 = vcmp.lt.s32.totalorder %v2220, 512
    %vm2285 = vcmp.lt.s32.totalorder %v2221, 512
    %vm2286 = vcmp.lt.s32.totalorder %v2222, 512
    %vm2287 = vcmp.lt.s32.totalorder %v2223, 512
    %vm2288 = vcmp.lt.s32.totalorder %v2224, 512
    %vm2289 = vcmp.lt.s32.totalorder %v2225, 512
    %vm2290 = vcmp.lt.s32.totalorder %v2226, 512
    %vm2291 = vcmp.lt.s32.totalorder %v2227, 512
    %vm2292 = vcmp.lt.s32.totalorder %v2228, 512
    %vm2293 = vcmp.lt.s32.totalorder %v2229, 512
    %vm2294 = vcmp.lt.s32.totalorder %v2230, 512
    %vm2295 = vcmp.lt.s32.totalorder %v2231, 512
    %vm2296 = vcmp.lt.s32.totalorder %v2232, 512
    %vm2297 = vcmp.lt.s32.totalorder %v2233, 512
    %vm2298 = vcmp.lt.s32.totalorder %v2234, 512
    %vm2299 = vcmp.lt.s32.totalorder %v2235, 512
    %vm2300 = vcmp.lt.s32.totalorder %v2236, 512
    %vm2301 = vcmp.lt.s32.totalorder %v2237, 512
    %vm2302 = vcmp.lt.s32.totalorder %v2238, 512
    %vm2303 = vcmp.lt.s32.totalorder %v2239, 512
    %vm2304 = vcmp.lt.s32.totalorder %v2240, 512
    %vm2305 = vcmp.lt.s32.totalorder %v2241, 512
    %vm2306 = vcmp.lt.s32.totalorder %v2242, 512
    %vm2307 = vcmp.lt.s32.totalorder %v2243, 512
    %vm2308 = vcmp.lt.s32.totalorder %v2244, 512
    %vm2309 = vcmp.lt.s32.totalorder %v2245, 512
    %vm2310 = vcmp.lt.s32.totalorder %v2246, 512
    %vm2311 = vcmp.lt.s32.totalorder %v2247, 512
    %vm2312 = vcmp.lt.s32.totalorder %v2248, 512
    %vm2313 = vcmp.lt.s32.totalorder %v2249, 512
    %vm2314 = vcmp.lt.s32.totalorder %v2250, 512
    %vm2315 = vcmp.lt.s32.totalorder %v2251, 512
    %vm2316 = vcmp.lt.s32.totalorder %v2252, 512
    %vm2317 = vcmp.lt.s32.totalorder %v2253, 512
    %vm2318 = vcmp.lt.s32.totalorder %v2254, 512
    %vm2319 = vcmp.lt.s32.totalorder %v2255, 512
    %vm2320 = vcmp.lt.s32.totalorder %v2256, 512
    %vm2321 = vcmp.lt.s32.totalorder %v2257, 512
    %vm2322 = vcmp.lt.s32.totalorder %v2258, 512
    %vm2323 = vcmp.lt.s32.totalorder %v2259, 512
    %vm2324 = vcmp.lt.s32.totalorder %v2260, 512
    %vm2325 = vcmp.lt.s32.totalorder %v2261, 512
    %vm2326 = vcmp.lt.s32.totalorder %v2262, 512
    %vm2327 = vcmp.lt.s32.totalorder %v2263, 512
    %vm2328 = vcmp.lt.s32.totalorder %v2264, 512
    %vm2329 = vcmp.lt.s32.totalorder %v2265, 512
    %vm2330 = vcmp.lt.s32.totalorder %v2266, 512
    %vm2331 = vcmp.lt.s32.totalorder %v2267, 512
    %vm2332 = vcmp.lt.s32.totalorder %v2268, 512
    %vm2333 = vcmp.lt.s32.totalorder %v2269, 512
    %vm2334 = vcmp.lt.s32.totalorder %v2270, 512
    %vm2335 = vcmp.lt.s32.totalorder %v2271, 512
    %vm2336 = vcmp.lt.s32.totalorder %v2272, 512
    %vm2337 = vcmp.lt.s32.totalorder %v2273, 512
    %vm2338 = vcmp.lt.s32.totalorder %v2274, 512
    %vm2339 = vcmp.lt.s32.totalorder %v2275, 512
    %vm2340 = vcmp.lt.s32.totalorder %v2276, 512
    %vm2341 = vcmp.lt.s32.totalorder %v2277, 512
    %vm2342 = vcmp.lt.s32.totalorder %v2278, 512
    %vm2343 = vcmp.lt.s32.totalorder %v2279, 512
    %vm2344 = vcmp.lt.s32.totalorder %v2280, 512
    %vm2345 = vcmp.eq.s32.totalorder %v1060, %v1203
    %vm2346 = vcmp.eq.s32.totalorder %v1060, %v1218
    %vm2347 = vcmp.eq.s32.totalorder %v1060, %v1233
    %vm2348 = vcmp.eq.s32.totalorder %v1060, %v1248
    %vm2349 = vcmp.eq.s32.totalorder %v1060, %v1263
    %vm2350 = vcmp.eq.s32.totalorder %v1060, %v1278
    %vm2351 = vcmp.eq.s32.totalorder %v1060, %v1293
    %vm2352 = vcmp.eq.s32.totalorder %v1060, %v1308
    %vm2353 = vcmp.eq.s32.totalorder %v1060, %v1323
    %vm2354 = vcmp.eq.s32.totalorder %v1060, %v1338
    %vm2355 = vcmp.eq.s32.totalorder %v1060, %v1353
    %vm2356 = vcmp.eq.s32.totalorder %v1060, %v1368
    %vm2357 = vcmp.eq.s32.totalorder %v1060, %v1383
    %vm2358 = vcmp.eq.s32.totalorder %v1060, %v1398
    %vm2359 = vcmp.eq.s32.totalorder %v1060, %v1413
    %vm2360 = vcmp.eq.s32.totalorder %v1060, %v1428
    %vm2361 = vcmp.eq.s32.totalorder %v1060, %v1443
    %vm2362 = vcmp.eq.s32.totalorder %v1060, %v1458
    %vm2363 = vcmp.eq.s32.totalorder %v1060, %v1473
    %vm2364 = vcmp.eq.s32.totalorder %v1060, %v1488
    %vm2365 = vcmp.eq.s32.totalorder %v1060, %v1503
    %vm2366 = vcmp.eq.s32.totalorder %v1060, %v1518
    %vm2367 = vcmp.eq.s32.totalorder %v1060, %v1533
    %vm2368 = vcmp.eq.s32.totalorder %v1060, %v1548
    %vm2369 = vcmp.eq.s32.totalorder %v1060, %v1563
    %vm2370 = vcmp.eq.s32.totalorder %v1060, %v1578
    %vm2371 = vcmp.eq.s32.totalorder %v1060, %v1593
    %vm2372 = vcmp.eq.s32.totalorder %v1060, %v1608
    %vm2373 = vcmp.eq.s32.totalorder %v1060, %v1623
    %vm2374 = vcmp.eq.s32.totalorder %v1060, %v1638
    %vm2375 = vcmp.eq.s32.totalorder %v1060, %v1653
    %vm2376 = vcmp.eq.s32.totalorder %v1060, %v1668
    %vm2377 = vcmp.eq.s32.totalorder %v1060, %v1683
    %vm2378 = vcmp.eq.s32.totalorder %v1060, %v1698
    %vm2379 = vcmp.eq.s32.totalorder %v1060, %v1713
    %vm2380 = vcmp.eq.s32.totalorder %v1060, %v1728
    %vm2381 = vcmp.eq.s32.totalorder %v1060, %v1743
    %vm2382 = vcmp.eq.s32.totalorder %v1060, %v1758
    %vm2383 = vcmp.eq.s32.totalorder %v1060, %v1773
    %vm2384 = vcmp.eq.s32.totalorder %v1060, %v1788
    %vm2385 = vcmp.eq.s32.totalorder %v1060, %v1803
    %vm2386 = vcmp.eq.s32.totalorder %v1060, %v1818
    %vm2387 = vcmp.eq.s32.totalorder %v1060, %v1833
    %vm2388 = vcmp.eq.s32.totalorder %v1060, %v1848
    %vm2389 = vcmp.eq.s32.totalorder %v1060, %v1863
    %vm2390 = vcmp.eq.s32.totalorder %v1060, %v1878
    %vm2391 = vcmp.eq.s32.totalorder %v1060, %v1893
    %vm2392 = vcmp.eq.s32.totalorder %v1060, %v1908
    %vm2393 = vcmp.eq.s32.totalorder %v1060, %v1923
    %vm2394 = vcmp.eq.s32.totalorder %v1060, %v1938
    %vm2395 = vcmp.eq.s32.totalorder %v1060, %v1953
    %vm2396 = vcmp.eq.s32.totalorder %v1060, %v1968
    %vm2397 = vcmp.eq.s32.totalorder %v1060, %v1983
    %vm2398 = vcmp.eq.s32.totalorder %v1060, %v1998
    %vm2399 = vcmp.eq.s32.totalorder %v1060, %v2013
    %vm2400 = vcmp.eq.s32.totalorder %v1060, %v2028
    %vm2401 = vcmp.eq.s32.totalorder %v1060, %v2043
    %vm2402 = vcmp.eq.s32.totalorder %v1060, %v2058
    %vm2403 = vcmp.eq.s32.totalorder %v1060, %v2073
    %vm2404 = vcmp.eq.s32.totalorder %v1060, %v2088
    %vm2405 = vcmp.eq.s32.totalorder %v1060, %v2103
    %vm2406 = vcmp.eq.s32.totalorder %v1060, %v2118
    %vm2407 = vcmp.eq.s32.totalorder %v1060, %v2133
    %vm2408 = vcmp.eq.s32.totalorder %v1060, %v2148
    %v2409 = vsel %vm2281, 1, 0
    %v2410 = vsel %vm2282, 1, 0
    %v2411 = vsel %vm2283, 1, 0
    %v2412 = vsel %vm2284, 1, 0
    %v2413 = vsel %vm2285, 1, 0
    %v2414 = vsel %vm2286, 1, 0
    %v2415 = vsel %vm2287, 1, 0
    %v2416 = vsel %vm2288, 1, 0
    %v2417 = vsel %vm2289, 1, 0
    %v2418 = vsel %vm2290, 1, 0
    %v2419 = vsel %vm2291, 1, 0
    %v2420 = vsel %vm2292, 1, 0
    %v2421 = vsel %vm2293, 1, 0
    %v2422 = vsel %vm2294, 1, 0
    %v2423 = vsel %vm2295, 1, 0
    %v2424 = vsel %vm2296, 1, 0
    %v2425 = vsel %vm2297, 1, 0
    %v2426 = vsel %vm2298, 1, 0
    %v2427 = vsel %vm2299, 1, 0
    %v2428 = vsel %vm2300, 1, 0
    %v2429 = vsel %vm2301, 1, 0
    %v2430 = vsel %vm2302, 1, 0
    %v2431 = vsel %vm2303, 1, 0
    %v2432 = vsel %vm2304, 1, 0
    %v2433 = vsel %vm2305, 1, 0
    %v2434 = vsel %vm2306, 1, 0
    %v2435 = vsel %vm2307, 1, 0
    %v2436 = vsel %vm2308, 1, 0
    %v2437 = vsel %vm2309, 1, 0
    %v2438 = vsel %vm2310, 1, 0
    %v2439 = vsel %vm2311, 1, 0
    %v2440 = vsel %vm2312, 1, 0
    %v2441 = vsel %vm2313, 1, 0
    %v2442 = vsel %vm2314, 1, 0
    %v2443 = vsel %vm2315, 1, 0
    %v2444 = vsel %vm2316, 1, 0
    %v2445 = vsel %vm2317, 1, 0
    %v2446 = vsel %vm2318, 1, 0
    %v2447 = vsel %vm2319, 1, 0
    %v2448 = vsel %vm2320, 1, 0
    %v2449 = vsel %vm2321, 1, 0
    %v2450 = vsel %vm2322, 1, 0
    %v2451 = vsel %vm2323, 1, 0
    %v2452 = vsel %vm2324, 1, 0
    %v2453 = vsel %vm2325, 1, 0
    %v2454 = vsel %vm2326, 1, 0
    %v2455 = vsel %vm2327, 1, 0
    %v2456 = vsel %vm2328, 1, 0
    %v2457 = vsel %vm2329, 1, 0
    %v2458 = vsel %vm2330, 1, 0
    %v2459 = vsel %vm2331, 1, 0
    %v2460 = vsel %vm2332, 1, 0
    %v2461 = vsel %vm2333, 1, 0
    %v2462 = vsel %vm2334, 1, 0
    %v2463 = vsel %vm2335, 1, 0
    %v2464 = vsel %vm2336, 1, 0
    %v2465 = vsel %vm2337, 1, 0
    %v2466 = vsel %vm2338, 1, 0
    %v2467 = vsel %vm2339, 1, 0
    %v2468 = vsel %vm2340, 1, 0
    %v2469 = vsel %vm2341, 1, 0
    %v2470 = vsel %vm2342, 1, 0
    %v2471 = vsel %vm2343, 1, 0
    %v2472 = vsel %vm2344, 1, 0
    %vm2473 = vcmp.eq.s32.totalorder %v2409, 1
    %vm2474 = vcmp.eq.s32.totalorder %v2410, 1
    %vm2475 = vcmp.eq.s32.totalorder %v2411, 1
    %vm2476 = vcmp.eq.s32.totalorder %v2412, 1
    %vm2477 = vcmp.eq.s32.totalorder %v2413, 1
    %vm2478 = vcmp.eq.s32.totalorder %v2414, 1
    %vm2479 = vcmp.eq.s32.totalorder %v2415, 1
    %vm2480 = vcmp.eq.s32.totalorder %v2416, 1
    %vm2481 = vcmp.eq.s32.totalorder %v2417, 1
    %vm2482 = vcmp.eq.s32.totalorder %v2418, 1
    %vm2483 = vcmp.eq.s32.totalorder %v2419, 1
    %vm2484 = vcmp.eq.s32.totalorder %v2420, 1
    %vm2485 = vcmp.eq.s32.totalorder %v2421, 1
    %vm2486 = vcmp.eq.s32.totalorder %v2422, 1
    %vm2487 = vcmp.eq.s32.totalorder %v2423, 1
    %vm2488 = vcmp.eq.s32.totalorder %v2424, 1
    %vm2489 = vcmp.eq.s32.totalorder %v2425, 1
    %vm2490 = vcmp.eq.s32.totalorder %v2426, 1
    %vm2491 = vcmp.eq.s32.totalorder %v2427, 1
    %vm2492 = vcmp.eq.s32.totalorder %v2428, 1
    %vm2493 = vcmp.eq.s32.totalorder %v2429, 1
    %vm2494 = vcmp.eq.s32.totalorder %v2430, 1
    %vm2495 = vcmp.eq.s32.totalorder %v2431, 1
    %vm2496 = vcmp.eq.s32.totalorder %v2432, 1
    %vm2497 = vcmp.eq.s32.totalorder %v2433, 1
    %vm2498 = vcmp.eq.s32.totalorder %v2434, 1
    %vm2499 = vcmp.eq.s32.totalorder %v2435, 1
    %vm2500 = vcmp.eq.s32.totalorder %v2436, 1
    %vm2501 = vcmp.eq.s32.totalorder %v2437, 1
    %vm2502 = vcmp.eq.s32.totalorder %v2438, 1
    %vm2503 = vcmp.eq.s32.totalorder %v2439, 1
    %vm2504 = vcmp.eq.s32.totalorder %v2440, 1
    %vm2505 = vcmp.eq.s32.totalorder %v2441, 1
    %vm2506 = vcmp.eq.s32.totalorder %v2442, 1
    %vm2507 = vcmp.eq.s32.totalorder %v2443, 1
    %vm2508 = vcmp.eq.s32.totalorder %v2444, 1
    %vm2509 = vcmp.eq.s32.totalorder %v2445, 1
    %vm2510 = vcmp.eq.s32.totalorder %v2446, 1
    %vm2511 = vcmp.eq.s32.totalorder %v2447, 1
    %vm2512 = vcmp.eq.s32.totalorder %v2448, 1
    %vm2513 = vcmp.eq.s32.totalorder %v2449, 1
    %vm2514 = vcmp.eq.s32.totalorder %v2450, 1
    %vm2515 = vcmp.eq.s32.totalorder %v2451, 1
    %vm2516 = vcmp.eq.s32.totalorder %v2452, 1
    %vm2517 = vcmp.eq.s32.totalorder %v2453, 1
    %vm2518 = vcmp.eq.s32.totalorder %v2454, 1
    %vm2519 = vcmp.eq.s32.totalorder %v2455, 1
    %vm2520 = vcmp.eq.s32.totalorder %v2456, 1
    %vm2521 = vcmp.eq.s32.totalorder %v2457, 1
    %vm2522 = vcmp.eq.s32.totalorder %v2458, 1
    %vm2523 = vcmp.eq.s32.totalorder %v2459, 1
    %vm2524 = vcmp.eq.s32.totalorder %v2460, 1
    %vm2525 = vcmp.eq.s32.totalorder %v2461, 1
    %vm2526 = vcmp.eq.s32.totalorder %v2462, 1
    %vm2527 = vcmp.eq.s32.totalorder %v2463, 1
    %vm2528 = vcmp.eq.s32.totalorder %v2464, 1
    %vm2529 = vcmp.eq.s32.totalorder %v2465, 1
    %vm2530 = vcmp.eq.s32.totalorder %v2466, 1
    %vm2531 = vcmp.eq.s32.totalorder %v2467, 1
    %vm2532 = vcmp.eq.s32.totalorder %v2468, 1
    %vm2533 = vcmp.eq.s32.totalorder %v2469, 1
    %vm2534 = vcmp.eq.s32.totalorder %v2470, 1
    %vm2535 = vcmp.eq.s32.totalorder %v2471, 1
    %vm2536 = vcmp.eq.s32.totalorder %v2472, 1
    %vm2537 = vmand %vm2345, %vm2473
    %vm2538 = vmand %vm2346, %vm2474
    %vm2539 = vmand %vm2347, %vm2475
    %vm2540 = vmand %vm2348, %vm2476
    %vm2541 = vmand %vm2349, %vm2477
    %vm2542 = vmand %vm2350, %vm2478
    %vm2543 = vmand %vm2351, %vm2479
    %vm2544 = vmand %vm2352, %vm2480
    %vm2545 = vmand %vm2353, %vm2481
    %vm2546 = vmand %vm2354, %vm2482
    %vm2547 = vmand %vm2355, %vm2483
    %vm2548 = vmand %vm2356, %vm2484
    %vm2549 = vmand %vm2357, %vm2485
    %vm2550 = vmand %vm2358, %vm2486
    %vm2551 = vmand %vm2359, %vm2487
    %vm2552 = vmand %vm2360, %vm2488
    %vm2553 = vmand %vm2361, %vm2489
    %vm2554 = vmand %vm2362, %vm2490
    %vm2555 = vmand %vm2363, %vm2491
    %vm2556 = vmand %vm2364, %vm2492
    %vm2557 = vmand %vm2365, %vm2493
    %vm2558 = vmand %vm2366, %vm2494
    %vm2559 = vmand %vm2367, %vm2495
    %vm2560 = vmand %vm2368, %vm2496
    %vm2561 = vmand %vm2369, %vm2497
    %vm2562 = vmand %vm2370, %vm2498
    %vm2563 = vmand %vm2371, %vm2499
    %vm2564 = vmand %vm2372, %vm2500
    %vm2565 = vmand %vm2373, %vm2501
    %vm2566 = vmand %vm2374, %vm2502
    %vm2567 = vmand %vm2375, %vm2503
    %vm2568 = vmand %vm2376, %vm2504
    %vm2569 = vmand %vm2377, %vm2505
    %vm2570 = vmand %vm2378, %vm2506
    %vm2571 = vmand %vm2379, %vm2507
    %vm2572 = vmand %vm2380, %vm2508
    %vm2573 = vmand %vm2381, %vm2509
    %vm2574 = vmand %vm2382, %vm2510
    %vm2575 = vmand %vm2383, %vm2511
    %vm2576 = vmand %vm2384, %vm2512
    %vm2577 = vmand %vm2385, %vm2513
    %vm2578 = vmand %vm2386, %vm2514
    %vm2579 = vmand %vm2387, %vm2515
    %vm2580 = vmand %vm2388, %vm2516
    %vm2581 = vmand %vm2389, %vm2517
    %vm2582 = vmand %vm2390, %vm2518
    %vm2583 = vmand %vm2391, %vm2519
    %vm2584 = vmand %vm2392, %vm2520
    %vm2585 = vmand %vm2393, %vm2521
    %vm2586 = vmand %vm2394, %vm2522
    %vm2587 = vmand %vm2395, %vm2523
    %vm2588 = vmand %vm2396, %vm2524
    %vm2589 = vmand %vm2397, %vm2525
    %vm2590 = vmand %vm2398, %vm2526
    %vm2591 = vmand %vm2399, %vm2527
    %vm2592 = vmand %vm2400, %vm2528
    %vm2593 = vmand %vm2401, %vm2529
    %vm2594 = vmand %vm2402, %vm2530
    %vm2595 = vmand %vm2403, %vm2531
    %vm2596 = vmand %vm2404, %vm2532
    %vm2597 = vmand %vm2405, %vm2533
    %vm2598 = vmand %vm2406, %vm2534
    %vm2599 = vmand %vm2407, %vm2535
    %vm2600 = vmand %vm2408, %vm2536
    %v2601 = vsel %vm2537, 1.0, 0.0
    %v2602 = vsel %vm2538, 1.0, 0.0
    %v2603 = vsel %vm2539, 1.0, 0.0
    %v2604 = vsel %vm2540, 1.0, 0.0
    %v2605 = vsel %vm2541, 1.0, 0.0
    %v2606 = vsel %vm2542, 1.0, 0.0
    %v2607 = vsel %vm2543, 1.0, 0.0
    %v2608 = vsel %vm2544, 1.0, 0.0
    %v2609 = vsel %vm2545, 1.0, 0.0
    %v2610 = vsel %vm2546, 1.0, 0.0
    %v2611 = vsel %vm2547, 1.0, 0.0
    %v2612 = vsel %vm2548, 1.0, 0.0
    %v2613 = vsel %vm2549, 1.0, 0.0
    %v2614 = vsel %vm2550, 1.0, 0.0
    %v2615 = vsel %vm2551, 1.0, 0.0
    %v2616 = vsel %vm2552, 1.0, 0.0
    %v2617 = vsel %vm2553, 1.0, 0.0
    %v2618 = vsel %vm2554, 1.0, 0.0
    %v2619 = vsel %vm2555, 1.0, 0.0
    %v2620 = vsel %vm2556, 1.0, 0.0
    %v2621 = vsel %vm2557, 1.0, 0.0
    %v2622 = vsel %vm2558, 1.0, 0.0
    %v2623 = vsel %vm2559, 1.0, 0.0
    %v2624 = vsel %vm2560, 1.0, 0.0
    %v2625 = vsel %vm2561, 1.0, 0.0
    %v2626 = vsel %vm2562, 1.0, 0.0
    %v2627 = vsel %vm2563, 1.0, 0.0
    %v2628 = vsel %vm2564, 1.0, 0.0
    %v2629 = vsel %vm2565, 1.0, 0.0
    %v2630 = vsel %vm2566, 1.0, 0.0
    %v2631 = vsel %vm2567, 1.0, 0.0
    %v2632 = vsel %vm2568, 1.0, 0.0
    %v2633 = vsel %vm2569, 1.0, 0.0
    %v2634 = vsel %vm2570, 1.0, 0.0
    %v2635 = vsel %vm2571, 1.0, 0.0
    %v2636 = vsel %vm2572, 1.0, 0.0
    %v2637 = vsel %vm2573, 1.0, 0.0
    %v2638 = vsel %vm2574, 1.0, 0.0
    %v2639 = vsel %vm2575, 1.0, 0.0
    %v2640 = vsel %vm2576, 1.0, 0.0
    %v2641 = vsel %vm2577, 1.0, 0.0
    %v2642 = vsel %vm2578, 1.0, 0.0
    %v2643 = vsel %vm2579, 1.0, 0.0
    %v2644 = vsel %vm2580, 1.0, 0.0
    %v2645 = vsel %vm2581, 1.0, 0.0
    %v2646 = vsel %vm2582, 1.0, 0.0
    %v2647 = vsel %vm2583, 1.0, 0.0
    %v2648 = vsel %vm2584, 1.0, 0.0
    %v2649 = vsel %vm2585, 1.0, 0.0
    %v2650 = vsel %vm2586, 1.0, 0.0
    %v2651 = vsel %vm2587, 1.0, 0.0
    %v2652 = vsel %vm2588, 1.0, 0.0
    %v2653 = vsel %vm2589, 1.0, 0.0
    %v2654 = vsel %vm2590, 1.0, 0.0
    %v2655 = vsel %vm2591, 1.0, 0.0
    %v2656 = vsel %vm2592, 1.0, 0.0
    %v2657 = vsel %vm2593, 1.0, 0.0
    %v2658 = vsel %vm2594, 1.0, 0.0
    %v2659 = vsel %vm2595, 1.0, 0.0
    %v2660 = vsel %vm2596, 1.0, 0.0
    %v2661 = vsel %vm2597, 1.0, 0.0
    %v2662 = vsel %vm2598, 1.0, 0.0
    %v2663 = vsel %vm2599, 1.0, 0.0
    %v2664 = vsel %vm2600, 1.0, 0.0
    %v2665 = vld [vmem:[%s1] sm:$0xff]
    %v2666 = vld [vmem:[%s1 + $0x8] sm:$0xff]
    %v2667 = vld [vmem:[%s1 + $0x10] sm:$0xff]
    %v2668 = vld [vmem:[%s1 + $0x18] sm:$0xff]
    %v2670 = vsel %vm866, %v2601, 0
    %v2673 = vsel %vm866, %v2602, 0
    %v2676 = vsel %vm866, %v2603, 0
    %v2679 = vsel %vm866, %v2604, 0
    %v2682 = vsel %vm866, %v2605, 0
    %v2685 = vsel %vm866, %v2606, 0
    %v2688 = vsel %vm866, %v2607, 0
    %v2691 = vsel %vm866, %v2608, 0
    %v2694 = vsel %vm866, %v2609, 0
    %v2697 = vsel %vm866, %v2610, 0
    %v2700 = vsel %vm866, %v2611, 0
    %v2703 = vsel %vm866, %v2612, 0
    %v2706 = vsel %vm866, %v2613, 0
    %v2709 = vsel %vm866, %v2614, 0
    %v2712 = vsel %vm866, %v2615, 0
    %v2715 = vsel %vm866, %v2616, 0
    %v2718 = vsel %vm866, %v2617, 0
    %v2721 = vsel %vm866, %v2618, 0
    %v2724 = vsel %vm866, %v2619, 0
    %v2727 = vsel %vm866, %v2620, 0
    %v2730 = vsel %vm866, %v2621, 0
    %v2733 = vsel %vm866, %v2622, 0
    %v2736 = vsel %vm866, %v2623, 0
    %v2739 = vsel %vm866, %v2624, 0
    %v2742 = vsel %vm866, %v2625, 0
    %v2745 = vsel %vm866, %v2626, 0
    %v2748 = vsel %vm866, %v2627, 0
    %v2751 = vsel %vm866, %v2628, 0
    %v2754 = vsel %vm866, %v2629, 0
    %v2757 = vsel %vm866, %v2630, 0
    %v2760 = vsel %vm866, %v2631, 0
    %v2763 = vsel %vm866, %v2632, 0
    %v2766 = vsel %vm866, %v2633, 0
    %v2769 = vsel %vm866, %v2634, 0
    %v2772 = vsel %vm866, %v2635, 0
    %v2775 = vsel %vm866, %v2636, 0
    %v2778 = vsel %vm866, %v2637, 0
    %v2781 = vsel %vm866, %v2638, 0
    %v2784 = vsel %vm866, %v2639, 0
    %v2787 = vsel %vm866, %v2640, 0
    %v2790 = vsel %vm866, %v2641, 0
    %v2793 = vsel %vm866, %v2642, 0
    %v2796 = vsel %vm866, %v2643, 0
    %v2799 = vsel %vm866, %v2644, 0
    %v2802 = vsel %vm866, %v2645, 0
    %v2805 = vsel %vm866, %v2646, 0
    %v2808 = vsel %vm866, %v2647, 0
    %v2811 = vsel %vm866, %v2648, 0
    %v2814 = vsel %vm866, %v2649, 0
    %v2817 = vsel %vm866, %v2650, 0
    %v2820 = vsel %vm866, %v2651, 0
    %v2823 = vsel %vm866, %v2652, 0
    %v2826 = vsel %vm866, %v2653, 0
    %v2829 = vsel %vm866, %v2654, 0
    %v2832 = vsel %vm866, %v2655, 0
    %v2835 = vsel %vm866, %v2656, 0
    %v2838 = vsel %vm866, %v2657, 0
    %v2841 = vsel %vm866, %v2658, 0
    %v2844 = vsel %vm866, %v2659, 0
    %v2847 = vsel %vm866, %v2660, 0
    %v2850 = vsel %vm866, %v2661, 0
    %v2853 = vsel %vm866, %v2662, 0
    %v2856 = vsel %vm866, %v2663, 0
    %v2859 = vsel %vm866, %v2664, 0
    %2861 = vmatprep.subr.mxu0 0.0
    %2862 = vmatpush1.msra.mxu0 %v2665
    %2863 = vmatprep.subr.mxu0 0.0
    %2864 = vmatpush1.msra.mxu0 %v2666
    %2865 = vmatprep.subr.mxu0 0.0
    %2866 = vmatpush1.msra.mxu0 %v2667
    %2867 = vmatprep.subr.mxu0 0.0
    %2868 = vmatpush1.msra.mxu0 %v2668
    %2869 = vmatprep.subr.mxu0 0.0
    %2870 = vmatpush1.msra.mxu0 0.0
    %2871 = vmatprep.subr.mxu0 0.0
    %2872 = vmatpush1.msra.mxu0 0.0
    %2873 = vmatprep.subr.mxu0 0.0
    %2874 = vmatpush1.msra.mxu0 0.0
    %2875 = vmatprep.subr.mxu0 0.0
    %2876 = vmatpush1.msra.mxu0 0.0
    %2877 = vmatprep.subr.mxu0 0.0
    %2878 = vmatpush1.msra.mxu0 0.0
    %2879 = vmatprep.subr.mxu0 0.0
    %2880 = vmatpush1.msra.mxu0 0.0
    %2881 = vmatprep.subr.mxu0 0.0
    %2882 = vmatpush1.msra.mxu0 0.0
    %2883 = vmatprep.subr.mxu0 0.0
    %2884 = vmatpush1.msra.mxu0 0.0
    %2885 = vmatprep.subr.mxu0 0.0
    %2886 = vmatpush1.msra.mxu0 0.0
    %2887 = vmatprep.subr.mxu0 0.0
    %2888 = vmatpush1.msra.mxu0 0.0
    %2889 = vmatprep.subr.mxu0 0.0
    %2890 = vmatpush1.msra.mxu0 0.0
    %2891 = vmatprep.subr.mxu0 0.0
    %2892 = vmatpush1.msra.mxu0 0.0
    %2893 = vmatprep.subr.mxu0 0.0
    %2894 = vmatpush1.msra.mxu0 0.0
    %2895 = vmatprep.subr.mxu0 0.0
    %2896 = vmatpush1.msra.mxu0 0.0
    %2897 = vmatprep.subr.mxu0 0.0
    %2898 = vmatpush1.msra.mxu0 0.0
    %2899 = vmatprep.subr.mxu0 0.0
    %2900 = vmatpush1.msra.mxu0 0.0
    %2901 = vmatprep.subr.mxu0 0.0
    %2902 = vmatpush1.msra.mxu0 0.0
    %2903 = vmatprep.subr.mxu0 0.0
    %2904 = vmatpush1.msra.mxu0 0.0
    %2905 = vmatprep.subr.mxu0 0.0
    %2906 = vmatpush1.msra.mxu0 0.0
    %2907 = vmatprep.subr.mxu0 0.0
    %2908 = vmatpush1.msra.mxu0 0.0
    %2909 = vmatprep.subr.mxu0 0.0
    %2910 = vmatpush1.msra.mxu0 0.0
    %2911 = vmatprep.subr.mxu0 0.0
    %2912 = vmatpush1.msra.mxu0 0.0
    %2913 = vmatprep.subr.mxu0 0.0
    %2914 = vmatpush1.msra.mxu0 0.0
    %2915 = vmatprep.subr.mxu0 0.0
    %2916 = vmatpush1.msra.mxu0 0.0
    %2917 = vmatprep.subr.mxu0 0.0
    %2918 = vmatpush1.msra.mxu0 0.0
    %2919 = vmatprep.subr.mxu0 0.0
    %2920 = vmatpush1.msra.mxu0 0.0
    %2921 = vmatprep.subr.mxu0 0.0
    %2922 = vmatpush1.msra.mxu0 0.0
    %2923 = vmatprep.subr.mxu0 0.0
    %2924 = vmatpush1.msra.mxu0 0.0
    %2925 = vmatprep.mubr.f32.mxu0 0.0
    %2926 = vmatmul.mubr.f32.gmra.mrb[0].mxu0 %v2670
    %v2927 = vpop.f32.mrb[0].mxu0
    %v2928 = vadd.f32 0.0, %v2927
    %v2929 = vpop.f32.mrb[0].mxu0
    %2930 = vmatprep.mubr.f32.mxu0 0.0
    %2931 = vmatmul.mubr.f32.gmra.mrb[0].mxu0 %v2673
    %v2932 = vpop.f32.mrb[0].mxu0
    %v2933 = vadd.f32 0.0, %v2932
    %v2934 = vpop.f32.mrb[0].mxu0
    %2935 = vmatprep.mubr.f32.mxu0 0.0
    %2936 = vmatmul.mubr.f32.gmra.mrb[0].mxu0 %v2676
    %v2937 = vpop.f32.mrb[0].mxu0
    %v2938 = vadd.f32 0.0, %v2937
    %v2939 = vpop.f32.mrb[0].mxu0
    %2940 = vmatprep.mubr.f32.mxu0 0.0
    %2941 = vmatmul.mubr.f32.gmra.mrb[0].mxu0 %v2679
    %v2942 = vpop.f32.mrb[0].mxu0
    %v2943 = vadd.f32 0.0, %v2942
    %v2944 = vpop.f32.mrb[0].mxu0
    %2945 = vmatprep.mubr.f32.mxu0 0.0
    %2946 = vmatmul.mubr.f32.gmra.mrb[0].mxu0 %v2682
    %v2947 = vpop.f32.mrb[0].mxu0
    %v2948 = vadd.f32 0.0, %v2947
    %v2949 = vpop.f32.mrb[0].mxu0
    %2950 = vmatprep.mubr.f32.mxu0 0.0
    %2951 = vmatmul.mubr.f32.gmra.mrb[0].mxu0 %v2685
    %v2952 = vpop.f32.mrb[0].mxu0
    %v2953 = vadd.f32 0.0, %v2952
    %v2954 = vpop.f32.mrb[0].mxu0
    %2955 = vmatprep.mubr.f32.mxu0 0.0
    %2956 = vmatmul.mubr.f32.gmra.mrb[0].mxu0 %v2688
    %v2957 = vpop.f32.mrb[0].mxu0
    %v2958 = vadd.f32 0.0, %v2957
    %v2959 = vpop.f32.mrb[0].mxu0
    %2960 = vmatprep.mubr.f32.mxu0 0.0
    %2961 = vmatmul.mubr.f32.gmra.mrb[0].mxu0 %v2691
    %v2962 = vpop.f32.mrb[0].mxu0
    %v2963 = vadd.f32 0.0, %v2962
    %v2964 = vpop.f32.mrb[0].mxu0
    %2965 = vmatprep.mubr.f32.mxu0 0.0
    %2966 = vmatmul.mubr.f32.gmra.mrb[0].mxu0 %v2694
    %v2967 = vpop.f32.mrb[0].mxu0
    %v2968 = vadd.f32 0.0, %v2967
    %v2969 = vpop.f32.mrb[0].mxu0
    %2970 = vmatprep.mubr.f32.mxu0 0.0
    %2971 = vmatmul.mubr.f32.gmra.mrb[0].mxu0 %v2697
    %v2972 = vpop.f32.mrb[0].mxu0
    %v2973 = vadd.f32 0.0, %v2972
    %v2974 = vpop.f32.mrb[0].mxu0
    %2975 = vmatprep.mubr.f32.mxu0 0.0
    %2976 = vmatmul.mubr.f32.gmra.mrb[0].mxu0 %v2700
    %v2977 = vpop.f32.mrb[0].mxu0
    %v2978 = vadd.f32 0.0, %v2977
    %v2979 = vpop.f32.mrb[0].mxu0
    %2980 = vmatprep.mubr.f32.mxu0 0.0
    %2981 = vmatmul.mubr.f32.gmra.mrb[0].mxu0 %v2703
    %v2982 = vpop.f32.mrb[0].mxu0
    %v2983 = vadd.f32 0.0, %v2982
    %v2984 = vpop.f32.mrb[0].mxu0
    %2985 = vmatprep.mubr.f32.mxu0 0.0
    %2986 = vmatmul.mubr.f32.gmra.mrb[0].mxu0 %v2706
    %v2987 = vpop.f32.mrb[0].mxu0
    %v2988 = vadd.f32 0.0, %v2987
    %v2989 = vpop.f32.mrb[0].mxu0
    %2990 = vmatprep.mubr.f32.mxu0 0.0
    %2991 = vmatmul.mubr.f32.gmra.mrb[0].mxu0 %v2709
    %v2992 = vpop.f32.mrb[0].mxu0
    %v2993 = vadd.f32 0.0, %v2992
    %v2994 = vpop.f32.mrb[0].mxu0
    %2995 = vmatprep.mubr.f32.mxu0 0.0
    %2996 = vmatmul.mubr.f32.gmra.mrb[0].mxu0 %v2712
    %v2997 = vpop.f32.mrb[0].mxu0
    %v2998 = vadd.f32 0.0, %v2997
    %v2999 = vpop.f32.mrb[0].mxu0
    %3000 = vmatprep.mubr.f32.mxu0 0.0
    %3001 = vmatmul.mubr.f32.gmra.mrb[0].mxu0 %v2715
    %v3002 = vpop.f32.mrb[0].mxu0
    %v3003 = vadd.f32 0.0, %v3002
    %v3004 = vpop.f32.mrb[0].mxu0
    %3005 = vmatprep.mubr.f32.mxu0 0.0
    %3006 = vmatmul.mubr.f32.gmra.mrb[0].mxu0 %v2718
    %v3007 = vpop.f32.mrb[0].mxu0
    %v3008 = vadd.f32 0.0, %v3007
    %v3009 = vpop.f32.mrb[0].mxu0
    %3010 = vmatprep.mubr.f32.mxu0 0.0
    %3011 = vmatmul.mubr.f32.gmra.mrb[0].mxu0 %v2721
    %v3012 = vpop.f32.mrb[0].mxu0
    %v3013 = vadd.f32 0.0, %v3012
    %v3014 = vpop.f32.mrb[0].mxu0
    %3015 = vmatprep.mubr.f32.mxu0 0.0
    %3016 = vmatmul.mubr.f32.gmra.mrb[0].mxu0 %v2724
    %v3017 = vpop.f32.mrb[0].mxu0
    %v3018 = vadd.f32 0.0, %v3017
    %v3019 = vpop.f32.mrb[0].mxu0
    %3020 = vmatprep.mubr.f32.mxu0 0.0
    %3021 = vmatmul.mubr.f32.gmra.mrb[0].mxu0 %v2727
    %v3022 = vpop.f32.mrb[0].mxu0
    %v3023 = vadd.f32 0.0, %v3022
    %v3024 = vpop.f32.mrb[0].mxu0
    %3025 = vmatprep.mubr.f32.mxu0 0.0
    %3026 = vmatmul.mubr.f32.gmra.mrb[0].mxu0 %v2730
    %v3027 = vpop.f32.mrb[0].mxu0
    %v3028 = vadd.f32 0.0, %v3027
    %v3029 = vpop.f32.mrb[0].mxu0
    %3030 = vmatprep.mubr.f32.mxu0 0.0
    %3031 = vmatmul.mubr.f32.gmra.mrb[0].mxu0 %v2733
    %v3032 = vpop.f32.mrb[0].mxu0
    %v3033 = vadd.f32 0.0, %v3032
    %v3034 = vpop.f32.mrb[0].mxu0
    %3035 = vmatprep.mubr.f32.mxu0 0.0
    %3036 = vmatmul.mubr.f32.gmra.mrb[0].mxu0 %v2736
    %v3037 = vpop.f32.mrb[0].mxu0
    %v3038 = vadd.f32 0.0, %v3037
    %v3039 = vpop.f32.mrb[0].mxu0
    %3040 = vmatprep.mubr.f32.mxu0 0.0
    %3041 = vmatmul.mubr.f32.gmra.mrb[0].mxu0 %v2739
    %v3042 = vpop.f32.mrb[0].mxu0
    %v3043 = vadd.f32 0.0, %v3042
    %v3044 = vpop.f32.mrb[0].mxu0
    %3045 = vmatprep.mubr.f32.mxu0 0.0
    %3046 = vmatmul.mubr.f32.gmra.mrb[0].mxu0 %v2742
    %v3047 = vpop.f32.mrb[0].mxu0
    %v3048 = vadd.f32 0.0, %v3047
    %v3049 = vpop.f32.mrb[0].mxu0
    %3050 = vmatprep.mubr.f32.mxu0 0.0
    %3051 = vmatmul.mubr.f32.gmra.mrb[0].mxu0 %v2745
    %v3052 = vpop.f32.mrb[0].mxu0
    %v3053 = vadd.f32 0.0, %v3052
    %v3054 = vpop.f32.mrb[0].mxu0
    %3055 = vmatprep.mubr.f32.mxu0 0.0
    %3056 = vmatmul.mubr.f32.gmra.mrb[0].mxu0 %v2748
    %v3057 = vpop.f32.mrb[0].mxu0
    %v3058 = vadd.f32 0.0, %v3057
    %v3059 = vpop.f32.mrb[0].mxu0
    %3060 = vmatprep.mubr.f32.mxu0 0.0
    %3061 = vmatmul.mubr.f32.gmra.mrb[0].mxu0 %v2751
    %v3062 = vpop.f32.mrb[0].mxu0
    %v3063 = vadd.f32 0.0, %v3062
    %v3064 = vpop.f32.mrb[0].mxu0
    %3065 = vmatprep.mubr.f32.mxu0 0.0
    %3066 = vmatmul.mubr.f32.gmra.mrb[0].mxu0 %v2754
    %v3067 = vpop.f32.mrb[0].mxu0
    %v3068 = vadd.f32 0.0, %v3067
    %v3069 = vpop.f32.mrb[0].mxu0
    %3070 = vmatprep.mubr.f32.mxu0 0.0
    %3071 = vmatmul.mubr.f32.gmra.mrb[0].mxu0 %v2757
    %v3072 = vpop.f32.mrb[0].mxu0
    %v3073 = vadd.f32 0.0, %v3072
    %v3074 = vpop.f32.mrb[0].mxu0
    %3075 = vmatprep.mubr.f32.mxu0 0.0
    %3076 = vmatmul.mubr.f32.gmra.mrb[0].mxu0 %v2760
    %v3077 = vpop.f32.mrb[0].mxu0
    %v3078 = vadd.f32 0.0, %v3077
    %v3079 = vpop.f32.mrb[0].mxu0
    %3080 = vmatprep.mubr.f32.mxu0 0.0
    %3081 = vmatmul.mubr.f32.gmra.mrb[0].mxu0 %v2763
    %v3082 = vpop.f32.mrb[0].mxu0
    %v3083 = vadd.f32 0.0, %v3082
    %v3084 = vpop.f32.mrb[0].mxu0
    %3085 = vmatprep.mubr.f32.mxu0 0.0
    %3086 = vmatmul.mubr.f32.gmra.mrb[0].mxu0 %v2766
    %v3087 = vpop.f32.mrb[0].mxu0
    %v3088 = vadd.f32 0.0, %v3087
    %v3089 = vpop.f32.mrb[0].mxu0
    %3090 = vmatprep.mubr.f32.mxu0 0.0
    %3091 = vmatmul.mubr.f32.gmra.mrb[0].mxu0 %v2769
    %v3092 = vpop.f32.mrb[0].mxu0
    %v3093 = vadd.f32 0.0, %v3092
    %v3094 = vpop.f32.mrb[0].mxu0
    %3095 = vmatprep.mubr.f32.mxu0 0.0
    %3096 = vmatmul.mubr.f32.gmra.mrb[0].mxu0 %v2772
    %v3097 = vpop.f32.mrb[0].mxu0
    %v3098 = vadd.f32 0.0, %v3097
    %v3099 = vpop.f32.mrb[0].mxu0
    %3100 = vmatprep.mubr.f32.mxu0 0.0
    %3101 = vmatmul.mubr.f32.gmra.mrb[0].mxu0 %v2775
    %v3102 = vpop.f32.mrb[0].mxu0
    %v3103 = vadd.f32 0.0, %v3102
    %v3104 = vpop.f32.mrb[0].mxu0
    %3105 = vmatprep.mubr.f32.mxu0 0.0
    %3106 = vmatmul.mubr.f32.gmra.mrb[0].mxu0 %v2778
    %v3107 = vpop.f32.mrb[0].mxu0
    %v3108 = vadd.f32 0.0, %v3107
    %v3109 = vpop.f32.mrb[0].mxu0
    %3110 = vmatprep.mubr.f32.mxu0 0.0
    %3111 = vmatmul.mubr.f32.gmra.mrb[0].mxu0 %v2781
    %v3112 = vpop.f32.mrb[0].mxu0
    %v3113 = vadd.f32 0.0, %v3112
    %v3114 = vpop.f32.mrb[0].mxu0
    %3115 = vmatprep.mubr.f32.mxu0 0.0
    %3116 = vmatmul.mubr.f32.gmra.mrb[0].mxu0 %v2784
    %v3117 = vpop.f32.mrb[0].mxu0
    %v3118 = vadd.f32 0.0, %v3117
    %v3119 = vpop.f32.mrb[0].mxu0
    %3120 = vmatprep.mubr.f32.mxu0 0.0
    %3121 = vmatmul.mubr.f32.gmra.mrb[0].mxu0 %v2787
    %v3122 = vpop.f32.mrb[0].mxu0
    %v3123 = vadd.f32 0.0, %v3122
    %v3124 = vpop.f32.mrb[0].mxu0
    %3125 = vmatprep.mubr.f32.mxu0 0.0
    %3126 = vmatmul.mubr.f32.gmra.mrb[0].mxu0 %v2790
    %v3127 = vpop.f32.mrb[0].mxu0
    %v3128 = vadd.f32 0.0, %v3127
    %v3129 = vpop.f32.mrb[0].mxu0
    %3130 = vmatprep.mubr.f32.mxu0 0.0
    %3131 = vmatmul.mubr.f32.gmra.mrb[0].mxu0 %v2793
    %v3132 = vpop.f32.mrb[0].mxu0
    %v3133 = vadd.f32 0.0, %v3132
    %v3134 = vpop.f32.mrb[0].mxu0
    %3135 = vmatprep.mubr.f32.mxu0 0.0
    %3136 = vmatmul.mubr.f32.gmra.mrb[0].mxu0 %v2796
    %v3137 = vpop.f32.mrb[0].mxu0
    %v3138 = vadd.f32 0.0, %v3137
    %v3139 = vpop.f32.mrb[0].mxu0
    %3140 = vmatprep.mubr.f32.mxu0 0.0
    %3141 = vmatmul.mubr.f32.gmra.mrb[0].mxu0 %v2799
    %v3142 = vpop.f32.mrb[0].mxu0
    %v3143 = vadd.f32 0.0, %v3142
    %v3144 = vpop.f32.mrb[0].mxu0
    %3145 = vmatprep.mubr.f32.mxu0 0.0
    %3146 = vmatmul.mubr.f32.gmra.mrb[0].mxu0 %v2802
    %v3147 = vpop.f32.mrb[0].mxu0
    %v3148 = vadd.f32 0.0, %v3147
    %v3149 = vpop.f32.mrb[0].mxu0
    %3150 = vmatprep.mubr.f32.mxu0 0.0
    %3151 = vmatmul.mubr.f32.gmra.mrb[0].mxu0 %v2805
    %v3152 = vpop.f32.mrb[0].mxu0
    %v3153 = vadd.f32 0.0, %v3152
    %v3154 = vpop.f32.mrb[0].mxu0
    %3155 = vmatprep.mubr.f32.mxu0 0.0
    %3156 = vmatmul.mubr.f32.gmra.mrb[0].mxu0 %v2808
    %v3157 = vpop.f32.mrb[0].mxu0
    %v3158 = vadd.f32 0.0, %v3157
    %v3159 = vpop.f32.mrb[0].mxu0
    %3160 = vmatprep.mubr.f32.mxu0 0.0
    %3161 = vmatmul.mubr.f32.gmra.mrb[0].mxu0 %v2811
    %v3162 = vpop.f32.mrb[0].mxu0
    %v3163 = vadd.f32 0.0, %v3162
    %v3164 = vpop.f32.mrb[0].mxu0
    %3165 = vmatprep.mubr.f32.mxu0 0.0
    %3166 = vmatmul.mubr.f32.gmra.mrb[0].mxu0 %v2814
    %v3167 = vpop.f32.mrb[0].mxu0
    %v3168 = vadd.f32 0.0, %v3167
    %v3169 = vpop.f32.mrb[0].mxu0
    %3170 = vmatprep.mubr.f32.mxu0 0.0
    %3171 = vmatmul.mubr.f32.gmra.mrb[0].mxu0 %v2817
    %v3172 = vpop.f32.mrb[0].mxu0
    %v3173 = vadd.f32 0.0, %v3172
    %v3174 = vpop.f32.mrb[0].mxu0
    %3175 = vmatprep.mubr.f32.mxu0 0.0
    %3176 = vmatmul.mubr.f32.gmra.mrb[0].mxu0 %v2820
    %v3177 = vpop.f32.mrb[0].mxu0
    %v3178 = vadd.f32 0.0, %v3177
    %v3179 = vpop.f32.mrb[0].mxu0
    %3180 = vmatprep.mubr.f32.mxu0 0.0
    %3181 = vmatmul.mubr.f32.gmra.mrb[0].mxu0 %v2823
    %v3182 = vpop.f32.mrb[0].mxu0
    %v3183 = vadd.f32 0.0, %v3182
    %v3184 = vpop.f32.mrb[0].mxu0
    %3185 = vmatprep.mubr.f32.mxu0 0.0
    %3186 = vmatmul.mubr.f32.gmra.mrb[0].mxu0 %v2826
    %v3187 = vpop.f32.mrb[0].mxu0
    %v3188 = vadd.f32 0.0, %v3187
    %v3189 = vpop.f32.mrb[0].mxu0
    %3190 = vmatprep.mubr.f32.mxu0 0.0
    %3191 = vmatmul.mubr.f32.gmra.mrb[0].mxu0 %v2829
    %v3192 = vpop.f32.mrb[0].mxu0
    %v3193 = vadd.f32 0.0, %v3192
    %v3194 = vpop.f32.mrb[0].mxu0
    %3195 = vmatprep.mubr.f32.mxu0 0.0
    %3196 = vmatmul.mubr.f32.gmra.mrb[0].mxu0 %v2832
    %v3197 = vpop.f32.mrb[0].mxu0
    %v3198 = vadd.f32 0.0, %v3197
    %v3199 = vpop.f32.mrb[0].mxu0
    %3200 = vmatprep.mubr.f32.mxu0 0.0
    %3201 = vmatmul.mubr.f32.gmra.mrb[0].mxu0 %v2835
    %v3202 = vpop.f32.mrb[0].mxu0
    %v3203 = vadd.f32 0.0, %v3202
    %v3204 = vpop.f32.mrb[0].mxu0
    %3205 = vmatprep.mubr.f32.mxu0 0.0
    %3206 = vmatmul.mubr.f32.gmra.mrb[0].mxu0 %v2838
    %v3207 = vpop.f32.mrb[0].mxu0
    %v3208 = vadd.f32 0.0, %v3207
    %v3209 = vpop.f32.mrb[0].mxu0
    %3210 = vmatprep.mubr.f32.mxu0 0.0
    %3211 = vmatmul.mubr.f32.gmra.mrb[0].mxu0 %v2841
    %v3212 = vpop.f32.mrb[0].mxu0
    %v3213 = vadd.f32 0.0, %v3212
    %v3214 = vpop.f32.mrb[0].mxu0
    %3215 = vmatprep.mubr.f32.mxu0 0.0
    %3216 = vmatmul.mubr.f32.gmra.mrb[0].mxu0 %v2844
    %v3217 = vpop.f32.mrb[0].mxu0
    %v3218 = vadd.f32 0.0, %v3217
    %v3219 = vpop.f32.mrb[0].mxu0
    %3220 = vmatprep.mubr.f32.mxu0 0.0
    %3221 = vmatmul.mubr.f32.gmra.mrb[0].mxu0 %v2847
    %v3222 = vpop.f32.mrb[0].mxu0
    %v3223 = vadd.f32 0.0, %v3222
    %v3224 = vpop.f32.mrb[0].mxu0
    %3225 = vmatprep.mubr.f32.mxu0 0.0
    %3226 = vmatmul.mubr.f32.gmra.mrb[0].mxu0 %v2850
    %v3227 = vpop.f32.mrb[0].mxu0
    %v3228 = vadd.f32 0.0, %v3227
    %v3229 = vpop.f32.mrb[0].mxu0
    %3230 = vmatprep.mubr.f32.mxu0 0.0
    %3231 = vmatmul.mubr.f32.gmra.mrb[0].mxu0 %v2853
    %v3232 = vpop.f32.mrb[0].mxu0
    %v3233 = vadd.f32 0.0, %v3232
    %v3234 = vpop.f32.mrb[0].mxu0
    %3235 = vmatprep.mubr.f32.mxu0 0.0
    %3236 = vmatmul.mubr.f32.gmra.mrb[0].mxu0 %v2856
    %v3237 = vpop.f32.mrb[0].mxu0
    %v3238 = vadd.f32 0.0, %v3237
    %v3239 = vpop.f32.mrb[0].mxu0
    %3240 = vmatprep.mubr.f32.mxu0 0.0
    %3241 = vmatmul.mubr.f32.gmra.mrb[0].mxu0 %v2859
    %v3242 = vpop.f32.mrb[0].mxu0
    %v3243 = vadd.f32 0.0, %v3242
    %v3244 = vpop.f32.mrb[0].mxu0
    %3245 = vdwg.mxu0
    %3246 = vst.msk [vmem:[%s63] sm:$0xff] %vm153, %v2928
    %3247 = vst.msk [vmem:[%s63 + $0x8] sm:$0xff] %vm153, %v2933
    %3248 = vst.msk [vmem:[%s63 + $0x10] sm:$0xff] %vm153, %v2938
    %3249 = vst.msk [vmem:[%s63 + $0x18] sm:$0xff] %vm153, %v2943
    %3250 = vst.msk [vmem:[%s63 + $0x20] sm:$0xff] %vm153, %v2948
    %3251 = vst.msk [vmem:[%s63 + $0x28] sm:$0xff] %vm153, %v2953
    %3252 = vst.msk [vmem:[%s63 + $0x30] sm:$0xff] %vm153, %v2958
    %3253 = vst.msk [vmem:[%s63 + $0x38] sm:$0xff] %vm153, %v2963
    %3254 = vst.msk [vmem:[%s63 + $0x40] sm:$0xff] %vm153, %v2968
    %3255 = vst.msk [vmem:[%s63 + $0x48] sm:$0xff] %vm153, %v2973
    %3256 = vst.msk [vmem:[%s63 + $0x50] sm:$0xff] %vm153, %v2978
    %3257 = vst.msk [vmem:[%s63 + $0x58] sm:$0xff] %vm153, %v2983
    %3258 = vst.msk [vmem:[%s63 + $0x60] sm:$0xff] %vm153, %v2988
    %3259 = vst.msk [vmem:[%s63 + $0x68] sm:$0xff] %vm153, %v2993
    %3260 = vst.msk [vmem:[%s63 + $0x70] sm:$0xff] %vm153, %v2998
    %3261 = vst.msk [vmem:[%s63 + $0x78] sm:$0xff] %vm153, %v3003
    %3262 = vst.msk [vmem:[%s63 + $0x80] sm:$0xff] %vm153, %v3008
    %3263 = vst.msk [vmem:[%s63 + $0x88] sm:$0xff] %vm153, %v3013
    %3264 = vst.msk [vmem:[%s63 + $0x90] sm:$0xff] %vm153, %v3018
    %3265 = vst.msk [vmem:[%s63 + $0x98] sm:$0xff] %vm153, %v3023
    %3266 = vst.msk [vmem:[%s63 + $0xa0] sm:$0xff] %vm153, %v3028
    %3267 = vst.msk [vmem:[%s63 + $0xa8] sm:$0xff] %vm153, %v3033
    %3268 = vst.msk [vmem:[%s63 + $0xb0] sm:$0xff] %vm153, %v3038
    %3269 = vst.msk [vmem:[%s63 + $0xb8] sm:$0xff] %vm153, %v3043
    %3270 = vst.msk [vmem:[%s63 + $0xc0] sm:$0xff] %vm153, %v3048
    %3271 = vst.msk [vmem:[%s63 + $0xc8] sm:$0xff] %vm153, %v3053
    %3272 = vst.msk [vmem:[%s63 + $0xd0] sm:$0xff] %vm153, %v3058
    %3273 = vst.msk [vmem:[%s63 + $0xd8] sm:$0xff] %vm153, %v3063
    %3274 = vst.msk [vmem:[%s63 + $0xe0] sm:$0xff] %vm153, %v3068
    %3275 = vst.msk [vmem:[%s63 + $0xe8] sm:$0xff] %vm153, %v3073
    %3276 = vst.msk [vmem:[%s63 + $0xf0] sm:$0xff] %vm153, %v3078
    %3277 = vst.msk [vmem:[%s63 + $0xf8] sm:$0xff] %vm153, %v3083
    %3278 = vst.msk [vmem:[%s63 + $0x100] sm:$0xff] %vm153, %v3088
    %3279 = vst.msk [vmem:[%s63 + $0x108] sm:$0xff] %vm153, %v3093
    %3280 = vst.msk [vmem:[%s63 + $0x110] sm:$0xff] %vm153, %v3098
    %3281 = vst.msk [vmem:[%s63 + $0x118] sm:$0xff] %vm153, %v3103
    %3282 = vst.msk [vmem:[%s63 + $0x120] sm:$0xff] %vm153, %v3108
    %3283 = vst.msk [vmem:[%s63 + $0x128] sm:$0xff] %vm153, %v3113
    %3284 = vst.msk [vmem:[%s63 + $0x130] sm:$0xff] %vm153, %v3118
    %3285 = vst.msk [vmem:[%s63 + $0x138] sm:$0xff] %vm153, %v3123
    %3286 = vst.msk [vmem:[%s63 + $0x140] sm:$0xff] %vm153, %v3128
    %3287 = vst.msk [vmem:[%s63 + $0x148] sm:$0xff] %vm153, %v3133
    %3288 = vst.msk [vmem:[%s63 + $0x150] sm:$0xff] %vm153, %v3138
    %3289 = vst.msk [vmem:[%s63 + $0x158] sm:$0xff] %vm153, %v3143
    %3290 = vst.msk [vmem:[%s63 + $0x160] sm:$0xff] %vm153, %v3148
    %3291 = vst.msk [vmem:[%s63 + $0x168] sm:$0xff] %vm153, %v3153
    %3292 = vst.msk [vmem:[%s63 + $0x170] sm:$0xff] %vm153, %v3158
    %3293 = vst.msk [vmem:[%s63 + $0x178] sm:$0xff] %vm153, %v3163
    %3294 = vst.msk [vmem:[%s63 + $0x180] sm:$0xff] %vm153, %v3168
    %3295 = vst.msk [vmem:[%s63 + $0x188] sm:$0xff] %vm153, %v3173
    %3296 = vst.msk [vmem:[%s63 + $0x190] sm:$0xff] %vm153, %v3178
    %3297 = vst.msk [vmem:[%s63 + $0x198] sm:$0xff] %vm153, %v3183
    %3298 = vst.msk [vmem:[%s63 + $0x1a0] sm:$0xff] %vm153, %v3188
    %3299 = vst.msk [vmem:[%s63 + $0x1a8] sm:$0xff] %vm153, %v3193
    %3300 = vst.msk [vmem:[%s63 + $0x1b0] sm:$0xff] %vm153, %v3198
    %3301 = vst.msk [vmem:[%s63 + $0x1b8] sm:$0xff] %vm153, %v3203
    %3302 = vst.msk [vmem:[%s63 + $0x1c0] sm:$0xff] %vm153, %v3208
    %3303 = vst.msk [vmem:[%s63 + $0x1c8] sm:$0xff] %vm153, %v3213
    %3304 = vst.msk [vmem:[%s63 + $0x1d0] sm:$0xff] %vm153, %v3218
    %3305 = vst.msk [vmem:[%s63 + $0x1d8] sm:$0xff] %vm153, %v3223
    %3306 = vst.msk [vmem:[%s63 + $0x1e0] sm:$0xff] %vm153, %v3228
    %3307 = vst.msk [vmem:[%s63 + $0x1e8] sm:$0xff] %vm153, %v3233
    %3308 = vst.msk [vmem:[%s63 + $0x1f0] sm:$0xff] %vm153, %v3238
    %3309 = vst.msk [vmem:[%s63 + $0x1f8] sm:$0xff] %vm153, %v3243
    %vm3310 = vcmask 7168
    %3311 = vst.msk [vmem:[%s71] sm:$0xff] %vm3310, %v1203
    %3312 = vst.msk [vmem:[%s71 + $0x8] sm:$0xff] %vm3310, %v1218
    %3313 = vst.msk [vmem:[%s71 + $0x10] sm:$0xff] %vm3310, %v1233
    %3314 = vst.msk [vmem:[%s71 + $0x18] sm:$0xff] %vm3310, %v1248
    %3315 = vst.msk [vmem:[%s71 + $0x20] sm:$0xff] %vm3310, %v1263
    %3316 = vst.msk [vmem:[%s71 + $0x28] sm:$0xff] %vm3310, %v1278
    %3317 = vst.msk [vmem:[%s71 + $0x30] sm:$0xff] %vm3310, %v1293
    %3318 = vst.msk [vmem:[%s71 + $0x38] sm:$0xff] %vm3310, %v1308
    %3319 = vst.msk [vmem:[%s71 + $0x40] sm:$0xff] %vm3310, %v1323
    %3320 = vst.msk [vmem:[%s71 + $0x48] sm:$0xff] %vm3310, %v1338
    %3321 = vst.msk [vmem:[%s71 + $0x50] sm:$0xff] %vm3310, %v1353
    %3322 = vst.msk [vmem:[%s71 + $0x58] sm:$0xff] %vm3310, %v1368
    %3323 = vst.msk [vmem:[%s71 + $0x60] sm:$0xff] %vm3310, %v1383
    %3324 = vst.msk [vmem:[%s71 + $0x68] sm:$0xff] %vm3310, %v1398
    %3325 = vst.msk [vmem:[%s71 + $0x70] sm:$0xff] %vm3310, %v1413
    %3326 = vst.msk [vmem:[%s71 + $0x78] sm:$0xff] %vm3310, %v1428
    %3327 = vst.msk [vmem:[%s71 + $0x80] sm:$0xff] %vm3310, %v1443
    %3328 = vst.msk [vmem:[%s71 + $0x88] sm:$0xff] %vm3310, %v1458
    %3329 = vst.msk [vmem:[%s71 + $0x90] sm:$0xff] %vm3310, %v1473
    %3330 = vst.msk [vmem:[%s71 + $0x98] sm:$0xff] %vm3310, %v1488
    %3331 = vst.msk [vmem:[%s71 + $0xa0] sm:$0xff] %vm3310, %v1503
    %3332 = vst.msk [vmem:[%s71 + $0xa8] sm:$0xff] %vm3310, %v1518
    %3333 = vst.msk [vmem:[%s71 + $0xb0] sm:$0xff] %vm3310, %v1533
    %3334 = vst.msk [vmem:[%s71 + $0xb8] sm:$0xff] %vm3310, %v1548
    %3335 = vst.msk [vmem:[%s71 + $0xc0] sm:$0xff] %vm3310, %v1563
    %3336 = vst.msk [vmem:[%s71 + $0xc8] sm:$0xff] %vm3310, %v1578
    %3337 = vst.msk [vmem:[%s71 + $0xd0] sm:$0xff] %vm3310, %v1593
    %3338 = vst.msk [vmem:[%s71 + $0xd8] sm:$0xff] %vm3310, %v1608
    %3339 = vst.msk [vmem:[%s71 + $0xe0] sm:$0xff] %vm3310, %v1623
    %3340 = vst.msk [vmem:[%s71 + $0xe8] sm:$0xff] %vm3310, %v1638
    %3341 = vst.msk [vmem:[%s71 + $0xf0] sm:$0xff] %vm3310, %v1653
    %3342 = vst.msk [vmem:[%s71 + $0xf8] sm:$0xff] %vm3310, %v1668
    %3343 = vst.msk [vmem:[%s71 + $0x100] sm:$0xff] %vm3310, %v1683
    %3344 = vst.msk [vmem:[%s71 + $0x108] sm:$0xff] %vm3310, %v1698
    %3345 = vst.msk [vmem:[%s71 + $0x110] sm:$0xff] %vm3310, %v1713
    %3346 = vst.msk [vmem:[%s71 + $0x118] sm:$0xff] %vm3310, %v1728
    %3347 = vst.msk [vmem:[%s71 + $0x120] sm:$0xff] %vm3310, %v1743
    %3348 = vst.msk [vmem:[%s71 + $0x128] sm:$0xff] %vm3310, %v1758
    %3349 = vst.msk [vmem:[%s71 + $0x130] sm:$0xff] %vm3310, %v1773
    %3350 = vst.msk [vmem:[%s71 + $0x138] sm:$0xff] %vm3310, %v1788
    %3351 = vst.msk [vmem:[%s71 + $0x140] sm:$0xff] %vm3310, %v1803
    %3352 = vst.msk [vmem:[%s71 + $0x148] sm:$0xff] %vm3310, %v1818
    %3353 = vst.msk [vmem:[%s71 + $0x150] sm:$0xff] %vm3310, %v1833
    %3354 = vst.msk [vmem:[%s71 + $0x158] sm:$0xff] %vm3310, %v1848
    %3355 = vst.msk [vmem:[%s71 + $0x160] sm:$0xff] %vm3310, %v1863
    %3356 = vst.msk [vmem:[%s71 + $0x168] sm:$0xff] %vm3310, %v1878
    %3357 = vst.msk [vmem:[%s71 + $0x170] sm:$0xff] %vm3310, %v1893
    %3358 = vst.msk [vmem:[%s71 + $0x178] sm:$0xff] %vm3310, %v1908
    %3359 = vst.msk [vmem:[%s71 + $0x180] sm:$0xff] %vm3310, %v1923
    %3360 = vst.msk [vmem:[%s71 + $0x188] sm:$0xff] %vm3310, %v1938
    %3361 = vst.msk [vmem:[%s71 + $0x190] sm:$0xff] %vm3310, %v1953
    %3362 = vst.msk [vmem:[%s71 + $0x198] sm:$0xff] %vm3310, %v1968
    %3363 = vst.msk [vmem:[%s71 + $0x1a0] sm:$0xff] %vm3310, %v1983
    %3364 = vst.msk [vmem:[%s71 + $0x1a8] sm:$0xff] %vm3310, %v1998
    %3365 = vst.msk [vmem:[%s71 + $0x1b0] sm:$0xff] %vm3310, %v2013
    %3366 = vst.msk [vmem:[%s71 + $0x1b8] sm:$0xff] %vm3310, %v2028
    %3367 = vst.msk [vmem:[%s71 + $0x1c0] sm:$0xff] %vm3310, %v2043
    %3368 = vst.msk [vmem:[%s71 + $0x1c8] sm:$0xff] %vm3310, %v2058
    %3369 = vst.msk [vmem:[%s71 + $0x1d0] sm:$0xff] %vm3310, %v2073
    %3370 = vst.msk [vmem:[%s71 + $0x1d8] sm:$0xff] %vm3310, %v2088
    %3371 = vst.msk [vmem:[%s71 + $0x1e0] sm:$0xff] %vm3310, %v2103
    %3372 = vst.msk [vmem:[%s71 + $0x1e8] sm:$0xff] %vm3310, %v2118
    %3373 = vst.msk [vmem:[%s71 + $0x1f0] sm:$0xff] %vm3310, %v2133
    %3374 = vst.msk [vmem:[%s71 + $0x1f8] sm:$0xff] %vm3310, %v2148
    %v3375 = vsub.f32 %v2928, %v87
    %v3376 = vsub.f32 %v2933, %v88
    %v3377 = vsub.f32 %v2938, %v89
    %v3378 = vsub.f32 %v2943, %v90
    %v3379 = vsub.f32 %v2948, %v91
    %v3380 = vsub.f32 %v2953, %v92
    %v3381 = vsub.f32 %v2958, %v93
    %v3382 = vsub.f32 %v2963, %v94
    %v3383 = vsub.f32 %v2968, %v95
    %v3384 = vsub.f32 %v2973, %v96
    %v3385 = vsub.f32 %v2978, %v97
    %v3386 = vsub.f32 %v2983, %v98
    %v3387 = vsub.f32 %v2988, %v99
    %v3388 = vsub.f32 %v2993, %v100
    %v3389 = vsub.f32 %v2998, %v101
    %v3390 = vsub.f32 %v3003, %v102
    %v3391 = vsub.f32 %v3008, %v103
    %v3392 = vsub.f32 %v3013, %v104
    %v3393 = vsub.f32 %v3018, %v105
    %v3394 = vsub.f32 %v3023, %v106
    %v3395 = vsub.f32 %v3028, %v107
    %v3396 = vsub.f32 %v3033, %v108
    %v3397 = vsub.f32 %v3038, %v109
    %v3398 = vsub.f32 %v3043, %v110
    %v3399 = vsub.f32 %v3048, %v111
    %v3400 = vsub.f32 %v3053, %v112
    %v3401 = vsub.f32 %v3058, %v113
    %v3402 = vsub.f32 %v3063, %v114
    %v3403 = vsub.f32 %v3068, %v115
    %v3404 = vsub.f32 %v3073, %v116
    %v3405 = vsub.f32 %v3078, %v117
    %v3406 = vsub.f32 %v3083, %v118
    %v3407 = vsub.f32 %v3088, %v119
    %v3408 = vsub.f32 %v3093, %v120
    %v3409 = vsub.f32 %v3098, %v121
    %v3410 = vsub.f32 %v3103, %v122
    %v3411 = vsub.f32 %v3108, %v123
    %v3412 = vsub.f32 %v3113, %v124
    %v3413 = vsub.f32 %v3118, %v125
    %v3414 = vsub.f32 %v3123, %v126
    %v3415 = vsub.f32 %v3128, %v127
    %v3416 = vsub.f32 %v3133, %v128
    %v3417 = vsub.f32 %v3138, %v129
    %v3418 = vsub.f32 %v3143, %v130
    %v3419 = vsub.f32 %v3148, %v131
    %v3420 = vsub.f32 %v3153, %v132
    %v3421 = vsub.f32 %v3158, %v133
    %v3422 = vsub.f32 %v3163, %v134
    %v3423 = vsub.f32 %v3168, %v135
    %v3424 = vsub.f32 %v3173, %v136
    %v3425 = vsub.f32 %v3178, %v137
    %v3426 = vsub.f32 %v3183, %v138
    %v3427 = vsub.f32 %v3188, %v139
    %v3428 = vsub.f32 %v3193, %v140
    %v3429 = vsub.f32 %v3198, %v141
    %v3430 = vsub.f32 %v3203, %v142
    %v3431 = vsub.f32 %v3208, %v143
    %v3432 = vsub.f32 %v3213, %v144
    %v3433 = vsub.f32 %v3218, %v145
    %v3434 = vsub.f32 %v3223, %v146
    %v3435 = vsub.f32 %v3228, %v147
    %v3436 = vsub.f32 %v3233, %v148
    %v3437 = vsub.f32 %v3238, %v149
    %v3438 = vsub.f32 %v3243, %v150
    %v3439 = vsel %vm2473, %v3375, 0.0
    %v3440 = vsel %vm2474, %v3376, 0.0
    %v3441 = vsel %vm2475, %v3377, 0.0
    %v3442 = vsel %vm2476, %v3378, 0.0
    %v3443 = vsel %vm2477, %v3379, 0.0
    %v3444 = vsel %vm2478, %v3380, 0.0
    %v3445 = vsel %vm2479, %v3381, 0.0
    %v3446 = vsel %vm2480, %v3382, 0.0
    %v3447 = vsel %vm2481, %v3383, 0.0
    %v3448 = vsel %vm2482, %v3384, 0.0
    %v3449 = vsel %vm2483, %v3385, 0.0
    %v3450 = vsel %vm2484, %v3386, 0.0
    %v3451 = vsel %vm2485, %v3387, 0.0
    %v3452 = vsel %vm2486, %v3388, 0.0
    %v3453 = vsel %vm2487, %v3389, 0.0
    %v3454 = vsel %vm2488, %v3390, 0.0
    %v3455 = vsel %vm2489, %v3391, 0.0
    %v3456 = vsel %vm2490, %v3392, 0.0
    %v3457 = vsel %vm2491, %v3393, 0.0
    %v3458 = vsel %vm2492, %v3394, 0.0
    %v3459 = vsel %vm2493, %v3395, 0.0
    %v3460 = vsel %vm2494, %v3396, 0.0
    %v3461 = vsel %vm2495, %v3397, 0.0
    %v3462 = vsel %vm2496, %v3398, 0.0
    %v3463 = vsel %vm2497, %v3399, 0.0
    %v3464 = vsel %vm2498, %v3400, 0.0
    %v3465 = vsel %vm2499, %v3401, 0.0
    %v3466 = vsel %vm2500, %v3402, 0.0
    %v3467 = vsel %vm2501, %v3403, 0.0
    %v3468 = vsel %vm2502, %v3404, 0.0
    %v3469 = vsel %vm2503, %v3405, 0.0
    %v3470 = vsel %vm2504, %v3406, 0.0
    %v3471 = vsel %vm2505, %v3407, 0.0
    %v3472 = vsel %vm2506, %v3408, 0.0
    %v3473 = vsel %vm2507, %v3409, 0.0
    %v3474 = vsel %vm2508, %v3410, 0.0
    %v3475 = vsel %vm2509, %v3411, 0.0
    %v3476 = vsel %vm2510, %v3412, 0.0
    %v3477 = vsel %vm2511, %v3413, 0.0
    %v3478 = vsel %vm2512, %v3414, 0.0
    %v3479 = vsel %vm2513, %v3415, 0.0
    %v3480 = vsel %vm2514, %v3416, 0.0
    %v3481 = vsel %vm2515, %v3417, 0.0
    %v3482 = vsel %vm2516, %v3418, 0.0
    %v3483 = vsel %vm2517, %v3419, 0.0
    %v3484 = vsel %vm2518, %v3420, 0.0
    %v3485 = vsel %vm2519, %v3421, 0.0
    %v3486 = vsel %vm2520, %v3422, 0.0
    %v3487 = vsel %vm2521, %v3423, 0.0
    %v3488 = vsel %vm2522, %v3424, 0.0
    %v3489 = vsel %vm2523, %v3425, 0.0
    %v3490 = vsel %vm2524, %v3426, 0.0
    %v3491 = vsel %vm2525, %v3427, 0.0
    %v3492 = vsel %vm2526, %v3428, 0.0
    %v3493 = vsel %vm2527, %v3429, 0.0
    %v3494 = vsel %vm2528, %v3430, 0.0
    %v3495 = vsel %vm2529, %v3431, 0.0
    %v3496 = vsel %vm2530, %v3432, 0.0
    %v3497 = vsel %vm2531, %v3433, 0.0
    %v3498 = vsel %vm2532, %v3434, 0.0
    %v3499 = vsel %vm2533, %v3435, 0.0
    %v3500 = vsel %vm2534, %v3436, 0.0
    %v3501 = vsel %vm2535, %v3437, 0.0
    %v3502 = vsel %vm2536, %v3438, 0.0
    %v3503 = vld [vmem:[#allocation2] sm:$0x1]
    %v3504 = vmul.f32 %v3439, %v3439
    %v3505 = vmul.f32 %v3440, %v3440
    %v3506 = vmul.f32 %v3441, %v3441
    %v3507 = vmul.f32 %v3442, %v3442
    %v3508 = vmul.f32 %v3443, %v3443
    %v3509 = vmul.f32 %v3444, %v3444
    %v3510 = vmul.f32 %v3445, %v3445
    %v3511 = vmul.f32 %v3446, %v3446
    %v3512 = vmul.f32 %v3447, %v3447
    %v3513 = vmul.f32 %v3448, %v3448
    %v3514 = vmul.f32 %v3449, %v3449
    %v3515 = vmul.f32 %v3450, %v3450
    %v3516 = vmul.f32 %v3451, %v3451
    %v3517 = vmul.f32 %v3452, %v3452
    %v3518 = vmul.f32 %v3453, %v3453
    %v3519 = vmul.f32 %v3454, %v3454
    %v3520 = vmul.f32 %v3455, %v3455
    %v3521 = vmul.f32 %v3456, %v3456
    %v3522 = vmul.f32 %v3457, %v3457
    %v3523 = vmul.f32 %v3458, %v3458
    %v3524 = vmul.f32 %v3459, %v3459
    %v3525 = vmul.f32 %v3460, %v3460
    %v3526 = vmul.f32 %v3461, %v3461
    %v3527 = vmul.f32 %v3462, %v3462
    %v3528 = vmul.f32 %v3463, %v3463
    %v3529 = vmul.f32 %v3464, %v3464
    %v3530 = vmul.f32 %v3465, %v3465
    %v3531 = vmul.f32 %v3466, %v3466
    %v3532 = vmul.f32 %v3467, %v3467
    %v3533 = vmul.f32 %v3468, %v3468
    %v3534 = vmul.f32 %v3469, %v3469
    %v3535 = vmul.f32 %v3470, %v3470
    %v3536 = vmul.f32 %v3471, %v3471
    %v3537 = vmul.f32 %v3472, %v3472
    %v3538 = vmul.f32 %v3473, %v3473
    %v3539 = vmul.f32 %v3474, %v3474
    %v3540 = vmul.f32 %v3475, %v3475
    %v3541 = vmul.f32 %v3476, %v3476
    %v3542 = vmul.f32 %v3477, %v3477
    %v3543 = vmul.f32 %v3478, %v3478
    %v3544 = vmul.f32 %v3479, %v3479
    %v3545 = vmul.f32 %v3480, %v3480
    %v3546 = vmul.f32 %v3481, %v3481
    %v3547 = vmul.f32 %v3482, %v3482
    %v3548 = vmul.f32 %v3483, %v3483
    %v3549 = vmul.f32 %v3484, %v3484
    %v3550 = vmul.f32 %v3485, %v3485
    %v3551 = vmul.f32 %v3486, %v3486
    %v3552 = vmul.f32 %v3487, %v3487
    %v3553 = vmul.f32 %v3488, %v3488
    %v3554 = vmul.f32 %v3489, %v3489
    %v3555 = vmul.f32 %v3490, %v3490
    %v3556 = vmul.f32 %v3491, %v3491
    %v3557 = vmul.f32 %v3492, %v3492
    %v3558 = vmul.f32 %v3493, %v3493
    %v3559 = vmul.f32 %v3494, %v3494
    %v3560 = vmul.f32 %v3495, %v3495
    %v3561 = vmul.f32 %v3496, %v3496
    %v3562 = vmul.f32 %v3497, %v3497
    %v3563 = vmul.f32 %v3498, %v3498
    %v3564 = vmul.f32 %v3499, %v3499
    %v3565 = vmul.f32 %v3500, %v3500
    %v3566 = vmul.f32 %v3501, %v3501
    %v3567 = vmul.f32 %v3502, %v3502
    %v3568 = vsel %vm153, %v3504, 0.0
    %v3569 = vsel %vm153, %v3505, 0.0
    %v3570 = vadd.f32 %v3568, %v3569
    %v3571 = vsel %vm153, %v3506, 0.0
    %v3572 = vadd.f32 %v3570, %v3571
    %v3573 = vsel %vm153, %v3507, 0.0
    %v3574 = vadd.f32 %v3572, %v3573
    %v3575 = vsel %vm153, %v3508, 0.0
    %v3576 = vadd.f32 %v3574, %v3575
    %v3577 = vsel %vm153, %v3509, 0.0
    %v3578 = vadd.f32 %v3576, %v3577
    %v3579 = vsel %vm153, %v3510, 0.0
    %v3580 = vadd.f32 %v3578, %v3579
    %v3581 = vsel %vm153, %v3511, 0.0
    %v3582 = vadd.f32 %v3580, %v3581
    %v3583 = vsel %vm153, %v3512, 0.0
    %v3584 = vadd.f32 %v3582, %v3583
    %v3585 = vsel %vm153, %v3513, 0.0
    %v3586 = vadd.f32 %v3584, %v3585
    %v3587 = vsel %vm153, %v3514, 0.0
    %v3588 = vadd.f32 %v3586, %v3587
    %v3589 = vsel %vm153, %v3515, 0.0
    %v3590 = vadd.f32 %v3588, %v3589
    %v3591 = vsel %vm153, %v3516, 0.0
    %v3592 = vadd.f32 %v3590, %v3591
    %v3593 = vsel %vm153, %v3517, 0.0
    %v3594 = vadd.f32 %v3592, %v3593
    %v3595 = vsel %vm153, %v3518, 0.0
    %v3596 = vadd.f32 %v3594, %v3595
    %v3597 = vsel %vm153, %v3519, 0.0
    %v3598 = vadd.f32 %v3596, %v3597
    %v3599 = vsel %vm153, %v3520, 0.0
    %v3600 = vadd.f32 %v3598, %v3599
    %v3601 = vsel %vm153, %v3521, 0.0
    %v3602 = vadd.f32 %v3600, %v3601
    %v3603 = vsel %vm153, %v3522, 0.0
    %v3604 = vadd.f32 %v3602, %v3603
    %v3605 = vsel %vm153, %v3523, 0.0
    %v3606 = vadd.f32 %v3604, %v3605
    %v3607 = vsel %vm153, %v3524, 0.0
    %v3608 = vadd.f32 %v3606, %v3607
    %v3609 = vsel %vm153, %v3525, 0.0
    %v3610 = vadd.f32 %v3608, %v3609
    %v3611 = vsel %vm153, %v3526, 0.0
    %v3612 = vadd.f32 %v3610, %v3611
    %v3613 = vsel %vm153, %v3527, 0.0
    %v3614 = vadd.f32 %v3612, %v3613
    %v3615 = vsel %vm153, %v3528, 0.0
    %v3616 = vadd.f32 %v3614, %v3615
    %v3617 = vsel %vm153, %v3529, 0.0
    %v3618 = vadd.f32 %v3616, %v3617
    %v3619 = vsel %vm153, %v3530, 0.0
    %v3620 = vadd.f32 %v3618, %v3619
    %v3621 = vsel %vm153, %v3531, 0.0
    %v3622 = vadd.f32 %v3620, %v3621
    %v3623 = vsel %vm153, %v3532, 0.0
    %v3624 = vadd.f32 %v3622, %v3623
    %v3625 = vsel %vm153, %v3533, 0.0
    %v3626 = vadd.f32 %v3624, %v3625
    %v3627 = vsel %vm153, %v3534, 0.0
    %v3628 = vadd.f32 %v3626, %v3627
    %v3629 = vsel %vm153, %v3535, 0.0
    %v3630 = vadd.f32 %v3628, %v3629
    %v3631 = vsel %vm153, %v3536, 0.0
    %v3632 = vadd.f32 %v3630, %v3631
    %v3633 = vsel %vm153, %v3537, 0.0
    %v3634 = vadd.f32 %v3632, %v3633
    %v3635 = vsel %vm153, %v3538, 0.0
    %v3636 = vadd.f32 %v3634, %v3635
    %v3637 = vsel %vm153, %v3539, 0.0
    %v3638 = vadd.f32 %v3636, %v3637
    %v3639 = vsel %vm153, %v3540, 0.0
    %v3640 = vadd.f32 %v3638, %v3639
    %v3641 = vsel %vm153, %v3541, 0.0
    %v3642 = vadd.f32 %v3640, %v3641
    %v3643 = vsel %vm153, %v3542, 0.0
    %v3644 = vadd.f32 %v3642, %v3643
    %v3645 = vsel %vm153, %v3543, 0.0
    %v3646 = vadd.f32 %v3644, %v3645
    %v3647 = vsel %vm153, %v3544, 0.0
    %v3648 = vadd.f32 %v3646, %v3647
    %v3649 = vsel %vm153, %v3545, 0.0
    %v3650 = vadd.f32 %v3648, %v3649
    %v3651 = vsel %vm153, %v3546, 0.0
    %v3652 = vadd.f32 %v3650, %v3651
    %v3653 = vsel %vm153, %v3547, 0.0
    %v3654 = vadd.f32 %v3652, %v3653
    %v3655 = vsel %vm153, %v3548, 0.0
    %v3656 = vadd.f32 %v3654, %v3655
    %v3657 = vsel %vm153, %v3549, 0.0
    %v3658 = vadd.f32 %v3656, %v3657
    %v3659 = vsel %vm153, %v3550, 0.0
    %v3660 = vadd.f32 %v3658, %v3659
    %v3661 = vsel %vm153, %v3551, 0.0
    %v3662 = vadd.f32 %v3660, %v3661
    %v3663 = vsel %vm153, %v3552, 0.0
    %v3664 = vadd.f32 %v3662, %v3663
    %v3665 = vsel %vm153, %v3553, 0.0
    %v3666 = vadd.f32 %v3664, %v3665
    %v3667 = vsel %vm153, %v3554, 0.0
    %v3668 = vadd.f32 %v3666, %v3667
    %v3669 = vsel %vm153, %v3555, 0.0
    %v3670 = vadd.f32 %v3668, %v3669
    %v3671 = vsel %vm153, %v3556, 0.0
    %v3672 = vadd.f32 %v3670, %v3671
    %v3673 = vsel %vm153, %v3557, 0.0
    %v3674 = vadd.f32 %v3672, %v3673
    %v3675 = vsel %vm153, %v3558, 0.0
    %v3676 = vadd.f32 %v3674, %v3675
    %v3677 = vsel %vm153, %v3559, 0.0
    %v3678 = vadd.f32 %v3676, %v3677
    %v3679 = vsel %vm153, %v3560, 0.0
    %v3680 = vadd.f32 %v3678, %v3679
    %v3681 = vsel %vm153, %v3561, 0.0
    %v3682 = vadd.f32 %v3680, %v3681
    %v3683 = vsel %vm153, %v3562, 0.0
    %v3684 = vadd.f32 %v3682, %v3683
    %v3685 = vsel %vm153, %v3563, 0.0
    %v3686 = vadd.f32 %v3684, %v3685
    %v3687 = vsel %vm153, %v3564, 0.0
    %v3688 = vadd.f32 %v3686, %v3687
    %v3689 = vsel %vm153, %v3565, 0.0
    %v3690 = vadd.f32 %v3688, %v3689
    %v3691 = vsel %vm153, %v3566, 0.0
    %v3692 = vadd.f32 %v3690, %v3691
    %v3693 = vsel %vm153, %v3567, 0.0
    %v3694 = vadd.f32 %v3692, %v3693
    %v3695 = vrot.slane %v3694, 4
    %v3696 = vadd.f32 %v3694, %v3695
    %v3697 = vrot.slane %v3696, 2
    %v3698 = vadd.f32 %v3696, %v3697
    %v3699 = vrot.slane %v3698, 1
    %v3700 = vadd.f32 %v3698, %v3699
    %v3701 = vadd.f32 %v3503, %v3700
    %vm3702 = vcmask 122880
    %3703 = vst.msk [vmem:[#allocation2] sm:$0x1] %vm3702, %v3701
    %v3704 = vld [vmem:[#allocation4] sm:$0x1]
    %v3705 = vsel %vm866, %v2601, 0.0
    %v3706 = vsel %vm866, %v2602, 0.0
    %v3707 = vadd.f32 %v3705, %v3706
    %v3708 = vsel %vm866, %v2603, 0.0
    %v3709 = vadd.f32 %v3707, %v3708
    %v3710 = vsel %vm866, %v2604, 0.0
    %v3711 = vadd.f32 %v3709, %v3710
    %v3712 = vsel %vm866, %v2605, 0.0
    %v3713 = vadd.f32 %v3711, %v3712
    %v3714 = vsel %vm866, %v2606, 0.0
    %v3715 = vadd.f32 %v3713, %v3714
    %v3716 = vsel %vm866, %v2607, 0.0
    %v3717 = vadd.f32 %v3715, %v3716
    %v3718 = vsel %vm866, %v2608, 0.0
    %v3719 = vadd.f32 %v3717, %v3718
    %v3720 = vsel %vm866, %v2609, 0.0
    %v3721 = vadd.f32 %v3719, %v3720
    %v3722 = vsel %vm866, %v2610, 0.0
    %v3723 = vadd.f32 %v3721, %v3722
    %v3724 = vsel %vm866, %v2611, 0.0
    %v3725 = vadd.f32 %v3723, %v3724
    %v3726 = vsel %vm866, %v2612, 0.0
    %v3727 = vadd.f32 %v3725, %v3726
    %v3728 = vsel %vm866, %v2613, 0.0
    %v3729 = vadd.f32 %v3727, %v3728
    %v3730 = vsel %vm866, %v2614, 0.0
    %v3731 = vadd.f32 %v3729, %v3730
    %v3732 = vsel %vm866, %v2615, 0.0
    %v3733 = vadd.f32 %v3731, %v3732
    %v3734 = vsel %vm866, %v2616, 0.0
    %v3735 = vadd.f32 %v3733, %v3734
    %v3736 = vsel %vm866, %v2617, 0.0
    %v3737 = vadd.f32 %v3735, %v3736
    %v3738 = vsel %vm866, %v2618, 0.0
    %v3739 = vadd.f32 %v3737, %v3738
    %v3740 = vsel %vm866, %v2619, 0.0
    %v3741 = vadd.f32 %v3739, %v3740
    %v3742 = vsel %vm866, %v2620, 0.0
    %v3743 = vadd.f32 %v3741, %v3742
    %v3744 = vsel %vm866, %v2621, 0.0
    %v3745 = vadd.f32 %v3743, %v3744
    %v3746 = vsel %vm866, %v2622, 0.0
    %v3747 = vadd.f32 %v3745, %v3746
    %v3748 = vsel %vm866, %v2623, 0.0
    %v3749 = vadd.f32 %v3747, %v3748
    %v3750 = vsel %vm866, %v2624, 0.0
    %v3751 = vadd.f32 %v3749, %v3750
    %v3752 = vsel %vm866, %v2625, 0.0
    %v3753 = vadd.f32 %v3751, %v3752
    %v3754 = vsel %vm866, %v2626, 0.0
    %v3755 = vadd.f32 %v3753, %v3754
    %v3756 = vsel %vm866, %v2627, 0.0
    %v3757 = vadd.f32 %v3755, %v3756
    %v3758 = vsel %vm866, %v2628, 0.0
    %v3759 = vadd.f32 %v3757, %v3758
    %v3760 = vsel %vm866, %v2629, 0.0
    %v3761 = vadd.f32 %v3759, %v3760
    %v3762 = vsel %vm866, %v2630, 0.0
    %v3763 = vadd.f32 %v3761, %v3762
    %v3764 = vsel %vm866, %v2631, 0.0
    %v3765 = vadd.f32 %v3763, %v3764
    %v3766 = vsel %vm866, %v2632, 0.0
    %v3767 = vadd.f32 %v3765, %v3766
    %v3768 = vsel %vm866, %v2633, 0.0
    %v3769 = vadd.f32 %v3767, %v3768
    %v3770 = vsel %vm866, %v2634, 0.0
    %v3771 = vadd.f32 %v3769, %v3770
    %v3772 = vsel %vm866, %v2635, 0.0
    %v3773 = vadd.f32 %v3771, %v3772
    %v3774 = vsel %vm866, %v2636, 0.0
    %v3775 = vadd.f32 %v3773, %v3774
    %v3776 = vsel %vm866, %v2637, 0.0
    %v3777 = vadd.f32 %v3775, %v3776
    %v3778 = vsel %vm866, %v2638, 0.0
    %v3779 = vadd.f32 %v3777, %v3778
    %v3780 = vsel %vm866, %v2639, 0.0
    %v3781 = vadd.f32 %v3779, %v3780
    %v3782 = vsel %vm866, %v2640, 0.0
    %v3783 = vadd.f32 %v3781, %v3782
    %v3784 = vsel %vm866, %v2641, 0.0
    %v3785 = vadd.f32 %v3783, %v3784
    %v3786 = vsel %vm866, %v2642, 0.0
    %v3787 = vadd.f32 %v3785, %v3786
    %v3788 = vsel %vm866, %v2643, 0.0
    %v3789 = vadd.f32 %v3787, %v3788
    %v3790 = vsel %vm866, %v2644, 0.0
    %v3791 = vadd.f32 %v3789, %v3790
    %v3792 = vsel %vm866, %v2645, 0.0
    %v3793 = vadd.f32 %v3791, %v3792
    %v3794 = vsel %vm866, %v2646, 0.0
    %v3795 = vadd.f32 %v3793, %v3794
    %v3796 = vsel %vm866, %v2647, 0.0
    %v3797 = vadd.f32 %v3795, %v3796
    %v3798 = vsel %vm866, %v2648, 0.0
    %v3799 = vadd.f32 %v3797, %v3798
    %v3800 = vsel %vm866, %v2649, 0.0
    %v3801 = vadd.f32 %v3799, %v3800
    %v3802 = vsel %vm866, %v2650, 0.0
    %v3803 = vadd.f32 %v3801, %v3802
    %v3804 = vsel %vm866, %v2651, 0.0
    %v3805 = vadd.f32 %v3803, %v3804
    %v3806 = vsel %vm866, %v2652, 0.0
    %v3807 = vadd.f32 %v3805, %v3806
    %v3808 = vsel %vm866, %v2653, 0.0
    %v3809 = vadd.f32 %v3807, %v3808
    %v3810 = vsel %vm866, %v2654, 0.0
    %v3811 = vadd.f32 %v3809, %v3810
    %v3812 = vsel %vm866, %v2655, 0.0
    %v3813 = vadd.f32 %v3811, %v3812
    %v3814 = vsel %vm866, %v2656, 0.0
    %v3815 = vadd.f32 %v3813, %v3814
    %v3816 = vsel %vm866, %v2657, 0.0
    %v3817 = vadd.f32 %v3815, %v3816
    %v3818 = vsel %vm866, %v2658, 0.0
    %v3819 = vadd.f32 %v3817, %v3818
    %v3820 = vsel %vm866, %v2659, 0.0
    %v3821 = vadd.f32 %v3819, %v3820
    %v3822 = vsel %vm866, %v2660, 0.0
    %v3823 = vadd.f32 %v3821, %v3822
    %v3824 = vsel %vm866, %v2661, 0.0
    %v3825 = vadd.f32 %v3823, %v3824
    %v3826 = vsel %vm866, %v2662, 0.0
    %v3827 = vadd.f32 %v3825, %v3826
    %v3828 = vsel %vm866, %v2663, 0.0
    %v3829 = vadd.f32 %v3827, %v3828
    %v3830 = vsel %vm866, %v2664, 0.0
    %v3831 = vadd.f32 %v3829, %v3830
    %v3832 = vrot.slane %v3831, 4
    %v3833 = vadd.f32 %v3831, %v3832
    %v3834 = vrot.slane %v3833, 2
    %v3835 = vadd.f32 %v3833, %v3834
    %v3836 = vrot.slane %v3835, 1
    %v3837 = vadd.f32 %v3835, %v3836
    %v3838 = vadd.f32 %v3704, %v3837
    %vm3839 = vcmask 253952
    %3840 = vst.msk [vmem:[#allocation4] sm:$0x1] %vm3839, %v3838
    %v3841 = vld [vmem:[%s8] sm:$0xff]
    %v3842 = vld [vmem:[%s8 + $0x8] sm:$0xff]
    %v3843 = vld [vmem:[%s8 + $0x10] sm:$0xff]
    %v3844 = vld [vmem:[%s8 + $0x18] sm:$0xff]
    %3845 = vxpose.xlu0.b32.start [1/16] %v2601, 128
    %3846 = vxpose.xlu0.b32.cont [2/16] %v2602, 128
    %3847 = vxpose.xlu0.b32.cont [3/16] %v2603, 128
    %3848 = vxpose.xlu0.b32.cont [4/16] %v2604, 128
    %3849 = vxpose.xlu0.b32.cont [5/16] %v2605, 128
    %3850 = vxpose.xlu0.b32.cont [6/16] %v2606, 128
    %3851 = vxpose.xlu0.b32.cont [7/16] %v2607, 128
    %3852 = vxpose.xlu0.b32.cont [8/16] %v2608, 128
    %3853 = vxpose.xlu0.b32.cont [9/16] %v2609, 128
    %3854 = vxpose.xlu0.b32.cont [10/16] %v2610, 128
    %3855 = vxpose.xlu0.b32.cont [11/16] %v2611, 128
    %3856 = vxpose.xlu0.b32.cont [12/16] %v2612, 128
    %3857 = vxpose.xlu0.b32.cont [13/16] %v2613, 128
    %3858 = vxpose.xlu0.b32.cont [14/16] %v2614, 128
    %3859 = vxpose.xlu0.b32.cont [15/16] %v2615, 128
    %3860 = vxpose.xlu0.b32.end [16/16] %v2616, 128
    %v3861 = vpop.trf.xlu0
    %v3862 = vpop.trf.xlu0
    %v3863 = vpop.trf.xlu0
    %v3864 = vpop.trf.xlu0
    %v3865 = vpop.trf.xlu0
    %v3866 = vpop.trf.xlu0
    %v3867 = vpop.trf.xlu0
    %v3868 = vpop.trf.xlu0
    %v3869 = vpop.trf.xlu0
    %v3870 = vpop.trf.xlu0
    %v3871 = vpop.trf.xlu0
    %v3872 = vpop.trf.xlu0
    %v3873 = vpop.trf.xlu0
    %v3874 = vpop.trf.xlu0
    %v3875 = vpop.trf.xlu0
    %v3876 = vpop.trf.xlu0
    %3877 = vxpose.xlu0.b32.start [1/16] %v2617, 128
    %3878 = vxpose.xlu0.b32.cont [2/16] %v2618, 128
    %3879 = vxpose.xlu0.b32.cont [3/16] %v2619, 128
    %3880 = vxpose.xlu0.b32.cont [4/16] %v2620, 128
    %3881 = vxpose.xlu0.b32.cont [5/16] %v2621, 128
    %3882 = vxpose.xlu0.b32.cont [6/16] %v2622, 128
    %3883 = vxpose.xlu0.b32.cont [7/16] %v2623, 128
    %3884 = vxpose.xlu0.b32.cont [8/16] %v2624, 128
    %3885 = vxpose.xlu0.b32.cont [9/16] %v2625, 128
    %3886 = vxpose.xlu0.b32.cont [10/16] %v2626, 128
    %3887 = vxpose.xlu0.b32.cont [11/16] %v2627, 128
    %3888 = vxpose.xlu0.b32.cont [12/16] %v2628, 128
    %3889 = vxpose.xlu0.b32.cont [13/16] %v2629, 128
    %3890 = vxpose.xlu0.b32.cont [14/16] %v2630, 128
    %3891 = vxpose.xlu0.b32.cont [15/16] %v2631, 128
    %3892 = vxpose.xlu0.b32.end [16/16] %v2632, 128
    %v3893 = vpop.trf.xlu0
    %v3894 = vpop.trf.xlu0
    %v3895 = vpop.trf.xlu0
    %v3896 = vpop.trf.xlu0
    %v3897 = vpop.trf.xlu0
    %v3898 = vpop.trf.xlu0
    %v3899 = vpop.trf.xlu0
    %v3900 = vpop.trf.xlu0
    %v3901 = vpop.trf.xlu0
    %v3902 = vpop.trf.xlu0
    %v3903 = vpop.trf.xlu0
    %v3904 = vpop.trf.xlu0
    %v3905 = vpop.trf.xlu0
    %v3906 = vpop.trf.xlu0
    %v3907 = vpop.trf.xlu0
    %v3908 = vpop.trf.xlu0
    %3909 = vxpose.xlu0.b32.start [1/16] %v2633, 128
    %3910 = vxpose.xlu0.b32.cont [2/16] %v2634, 128
    %3911 = vxpose.xlu0.b32.cont [3/16] %v2635, 128
    %3912 = vxpose.xlu0.b32.cont [4/16] %v2636, 128
    %3913 = vxpose.xlu0.b32.cont [5/16] %v2637, 128
    %3914 = vxpose.xlu0.b32.cont [6/16] %v2638, 128
    %3915 = vxpose.xlu0.b32.cont [7/16] %v2639, 128
    %3916 = vxpose.xlu0.b32.cont [8/16] %v2640, 128
    %3917 = vxpose.xlu0.b32.cont [9/16] %v2641, 128
    %3918 = vxpose.xlu0.b32.cont [10/16] %v2642, 128
    %3919 = vxpose.xlu0.b32.cont [11/16] %v2643, 128
    %3920 = vxpose.xlu0.b32.cont [12/16] %v2644, 128
    %3921 = vxpose.xlu0.b32.cont [13/16] %v2645, 128
    %3922 = vxpose.xlu0.b32.cont [14/16] %v2646, 128
    %3923 = vxpose.xlu0.b32.cont [15/16] %v2647, 128
    %3924 = vxpose.xlu0.b32.end [16/16] %v2648, 128
    %v3925 = vpop.trf.xlu0
    %v3926 = vpop.trf.xlu0
    %v3927 = vpop.trf.xlu0
    %v3928 = vpop.trf.xlu0
    %v3929 = vpop.trf.xlu0
    %v3930 = vpop.trf.xlu0
    %v3931 = vpop.trf.xlu0
    %v3932 = vpop.trf.xlu0
    %v3933 = vpop.trf.xlu0
    %v3934 = vpop.trf.xlu0
    %v3935 = vpop.trf.xlu0
    %v3936 = vpop.trf.xlu0
    %v3937 = vpop.trf.xlu0
    %v3938 = vpop.trf.xlu0
    %v3939 = vpop.trf.xlu0
    %v3940 = vpop.trf.xlu0
    %3941 = vxpose.xlu0.b32.start [1/16] %v2649, 128
    %3942 = vxpose.xlu0.b32.cont [2/16] %v2650, 128
    %3943 = vxpose.xlu0.b32.cont [3/16] %v2651, 128
    %3944 = vxpose.xlu0.b32.cont [4/16] %v2652, 128
    %3945 = vxpose.xlu0.b32.cont [5/16] %v2653, 128
    %3946 = vxpose.xlu0.b32.cont [6/16] %v2654, 128
    %3947 = vxpose.xlu0.b32.cont [7/16] %v2655, 128
    %3948 = vxpose.xlu0.b32.cont [8/16] %v2656, 128
    %3949 = vxpose.xlu0.b32.cont [9/16] %v2657, 128
    %3950 = vxpose.xlu0.b32.cont [10/16] %v2658, 128
    %3951 = vxpose.xlu0.b32.cont [11/16] %v2659, 128
    %3952 = vxpose.xlu0.b32.cont [12/16] %v2660, 128
    %3953 = vxpose.xlu0.b32.cont [13/16] %v2661, 128
    %3954 = vxpose.xlu0.b32.cont [14/16] %v2662, 128
    %3955 = vxpose.xlu0.b32.cont [15/16] %v2663, 128
    %3956 = vxpose.xlu0.b32.end [16/16] %v2664, 128
    %v3957 = vpop.trf.xlu0
    %v3958 = vpop.trf.xlu0
    %v3959 = vpop.trf.xlu0
    %v3960 = vpop.trf.xlu0
    %v3961 = vpop.trf.xlu0
    %v3962 = vpop.trf.xlu0
    %v3963 = vpop.trf.xlu0
    %v3964 = vpop.trf.xlu0
    %v3965 = vpop.trf.xlu0
    %v3966 = vpop.trf.xlu0
    %v3967 = vpop.trf.xlu0
    %v3968 = vpop.trf.xlu0
    %v3969 = vpop.trf.xlu0
    %v3970 = vpop.trf.xlu0
    %v3971 = vpop.trf.xlu0
    %v3972 = vpop.trf.xlu0
    %3973 = vmatprep.subr.mxu0 0.0
    %3974 = vmatpush1.msra.mxu0 %v87
    %3975 = vmatprep.subr.mxu0 0.0
    %3976 = vmatpush1.msra.mxu0 %v88
    %3977 = vmatprep.subr.mxu0 0.0
    %3978 = vmatpush1.msra.mxu0 %v89
    %3979 = vmatprep.subr.mxu0 0.0
    %3980 = vmatpush1.msra.mxu0 %v90
    %3981 = vmatprep.subr.mxu0 0.0
    %3982 = vmatpush1.msra.mxu0 %v91
    %3983 = vmatprep.subr.mxu0 0.0
    %3984 = vmatpush1.msra.mxu0 %v92
    %3985 = vmatprep.subr.mxu0 0.0
    %3986 = vmatpush1.msra.mxu0 %v93
    %3987 = vmatprep.subr.mxu0 0.0
    %3988 = vmatpush1.msra.mxu0 %v94
    %3989 = vmatprep.subr.mxu0 0.0
    %3990 = vmatpush1.msra.mxu0 %v95
    %3991 = vmatprep.subr.mxu0 0.0
    %3992 = vmatpush1.msra.mxu0 %v96
    %3993 = vmatprep.subr.mxu0 0.0
    %3994 = vmatpush1.msra.mxu0 %v97
    %3995 = vmatprep.subr.mxu0 0.0
    %3996 = vmatpush1.msra.mxu0 %v98
    %3997 = vmatprep.subr.mxu0 0.0
    %3998 = vmatpush1.msra.mxu0 %v99
    %3999 = vmatprep.subr.mxu0 0.0
    %4000 = vmatpush1.msra.mxu0 %v100
    %4001 = vmatprep.subr.mxu0 0.0
    %4002 = vmatpush1.msra.mxu0 %v101
    %4003 = vmatprep.subr.mxu0 0.0
    %4004 = vmatpush1.msra.mxu0 %v102
    %4005 = vmatprep.subr.mxu0 0.0
    %4006 = vmatpush1.msra.mxu0 %v103
    %4007 = vmatprep.subr.mxu0 0.0
    %4008 = vmatpush1.msra.mxu0 %v104
    %4009 = vmatprep.subr.mxu0 0.0
    %4010 = vmatpush1.msra.mxu0 %v105
    %4011 = vmatprep.subr.mxu0 0.0
    %4012 = vmatpush1.msra.mxu0 %v106
    %4013 = vmatprep.subr.mxu0 0.0
    %4014 = vmatpush1.msra.mxu0 %v107
    %4015 = vmatprep.subr.mxu0 0.0
    %4016 = vmatpush1.msra.mxu0 %v108
    %4017 = vmatprep.subr.mxu0 0.0
    %4018 = vmatpush1.msra.mxu0 %v109
    %4019 = vmatprep.subr.mxu0 0.0
    %4020 = vmatpush1.msra.mxu0 %v110
    %4021 = vmatprep.subr.mxu0 0.0
    %4022 = vmatpush1.msra.mxu0 %v111
    %4023 = vmatprep.subr.mxu0 0.0
    %4024 = vmatpush1.msra.mxu0 %v112
    %4025 = vmatprep.subr.mxu0 0.0
    %4026 = vmatpush1.msra.mxu0 %v113
    %4027 = vmatprep.subr.mxu0 0.0
    %4028 = vmatpush1.msra.mxu0 %v114
    %4029 = vmatprep.subr.mxu0 0.0
    %4030 = vmatpush1.msra.mxu0 %v115
    %4031 = vmatprep.subr.mxu0 0.0
    %4032 = vmatpush1.msra.mxu0 %v116
    %4033 = vmatprep.subr.mxu0 0.0
    %4034 = vmatpush1.msra.mxu0 %v117
    %4035 = vmatprep.subr.mxu0 0.0
    %4036 = vmatpush1.msra.mxu0 %v118
    %4037 = vmatprep.mubr.f32.mxu0 %v3893
    %4038 = vmatmul.mubr.f32.gmra.mrb[0].mxu0 %v3861
    %v4039 = vpop.f32.mrb[0].mxu0
    %v4040 = vadd.f32 0.0, %v4039
    %v4041 = vpop.f32.mrb[0].mxu0
    %4042 = vmatprep.mubr.f32.mxu0 %v3894
    %4043 = vmatmul.mubr.f32.gmra.mrb[0].mxu0 %v3862
    %v4044 = vpop.f32.mrb[0].mxu0
    %v4045 = vadd.f32 0.0, %v4044
    %v4046 = vpop.f32.mrb[0].mxu0
    %4047 = vmatprep.mubr.f32.mxu0 %v3895
    %4048 = vmatmul.mubr.f32.gmra.mrb[0].mxu0 %v3863
    %v4049 = vpop.f32.mrb[0].mxu0
    %v4050 = vadd.f32 0.0, %v4049
    %v4051 = vpop.f32.mrb[0].mxu0
    %4052 = vmatprep.mubr.f32.mxu0 %v3896
    %4053 = vmatmul.mubr.f32.gmra.mrb[0].mxu0 %v3864
    %v4054 = vpop.f32.mrb[0].mxu0
    %v4055 = vadd.f32 0.0, %v4054
    %v4056 = vpop.f32.mrb[0].mxu0
    %4057 = vdwg.mxu0
    %4058 = vmatprep.subr.mxu0 0.0
    %4059 = vmatpush1.msra.mxu0 %v119
    %4060 = vmatprep.subr.mxu0 0.0
    %4061 = vmatpush1.msra.mxu0 %v120
    %4062 = vmatprep.subr.mxu0 0.0
    %4063 = vmatpush1.msra.mxu0 %v121
    %4064 = vmatprep.subr.mxu0 0.0
    %4065 = vmatpush1.msra.mxu0 %v122
    %4066 = vmatprep.subr.mxu0 0.0
    %4067 = vmatpush1.msra.mxu0 %v123
    %4068 = vmatprep.subr.mxu0 0.0
    %4069 = vmatpush1.msra.mxu0 %v124
    %4070 = vmatprep.subr.mxu0 0.0
    %4071 = vmatpush1.msra.mxu0 %v125
    %4072 = vmatprep.subr.mxu0 0.0
    %4073 = vmatpush1.msra.mxu0 %v126
    %4074 = vmatprep.subr.mxu0 0.0
    %4075 = vmatpush1.msra.mxu0 %v127
    %4076 = vmatprep.subr.mxu0 0.0
    %4077 = vmatpush1.msra.mxu0 %v128
    %4078 = vmatprep.subr.mxu0 0.0
    %4079 = vmatpush1.msra.mxu0 %v129
    %4080 = vmatprep.subr.mxu0 0.0
    %4081 = vmatpush1.msra.mxu0 %v130
    %4082 = vmatprep.subr.mxu0 0.0
    %4083 = vmatpush1.msra.mxu0 %v131
    %4084 = vmatprep.subr.mxu0 0.0
    %4085 = vmatpush1.msra.mxu0 %v132
    %4086 = vmatprep.subr.mxu0 0.0
    %4087 = vmatpush1.msra.mxu0 %v133
    %4088 = vmatprep.subr.mxu0 0.0
    %4089 = vmatpush1.msra.mxu0 %v134
    %4090 = vmatprep.subr.mxu0 0.0
    %4091 = vmatpush1.msra.mxu0 %v135
    %4092 = vmatprep.subr.mxu0 0.0
    %4093 = vmatpush1.msra.mxu0 %v136
    %4094 = vmatprep.subr.mxu0 0.0
    %4095 = vmatpush1.msra.mxu0 %v137
    %4096 = vmatprep.subr.mxu0 0.0
    %4097 = vmatpush1.msra.mxu0 %v138
    %4098 = vmatprep.subr.mxu0 0.0
    %4099 = vmatpush1.msra.mxu0 %v139
    %4100 = vmatprep.subr.mxu0 0.0
    %4101 = vmatpush1.msra.mxu0 %v140
    %4102 = vmatprep.subr.mxu0 0.0
    %4103 = vmatpush1.msra.mxu0 %v141
    %4104 = vmatprep.subr.mxu0 0.0
    %4105 = vmatpush1.msra.mxu0 %v142
    %4106 = vmatprep.subr.mxu0 0.0
    %4107 = vmatpush1.msra.mxu0 %v143
    %4108 = vmatprep.subr.mxu0 0.0
    %4109 = vmatpush1.msra.mxu0 %v144
    %4110 = vmatprep.subr.mxu0 0.0
    %4111 = vmatpush1.msra.mxu0 %v145
    %4112 = vmatprep.subr.mxu0 0.0
    %4113 = vmatpush1.msra.mxu0 %v146
    %4114 = vmatprep.subr.mxu0 0.0
    %4115 = vmatpush1.msra.mxu0 %v147
    %4116 = vmatprep.subr.mxu0 0.0
    %4117 = vmatpush1.msra.mxu0 %v148
    %4118 = vmatprep.subr.mxu0 0.0
    %4119 = vmatpush1.msra.mxu0 %v149
    %4120 = vmatprep.subr.mxu0 0.0
    %4121 = vmatpush1.msra.mxu0 %v150
    %4122 = vmatprep.mubr.f32.mxu0 %v3957
    %4123 = vmatmul.mubr.f32.gmra.mrb[0].mxu0 %v3925
    %v4124 = vpop.f32.mrb[0].mxu0
    %v4125 = vadd.f32 %v4040, %v4124
    %v4126 = vpop.f32.mrb[0].mxu0
    %4127 = vmatprep.mubr.f32.mxu0 %v3958
    %4128 = vmatmul.mubr.f32.gmra.mrb[0].mxu0 %v3926
    %v4129 = vpop.f32.mrb[0].mxu0
    %v4130 = vadd.f32 %v4045, %v4129
    %v4131 = vpop.f32.mrb[0].mxu0
    %4132 = vmatprep.mubr.f32.mxu0 %v3959
    %4133 = vmatmul.mubr.f32.gmra.mrb[0].mxu0 %v3927
    %v4134 = vpop.f32.mrb[0].mxu0
    %v4135 = vadd.f32 %v4050, %v4134
    %v4136 = vpop.f32.mrb[0].mxu0
    %4137 = vmatprep.mubr.f32.mxu0 %v3960
    %4138 = vmatmul.mubr.f32.gmra.mrb[0].mxu0 %v3928
    %v4139 = vpop.f32.mrb[0].mxu0
    %v4140 = vadd.f32 %v4055, %v4139
    %v4141 = vpop.f32.mrb[0].mxu0
    %4142 = vdwg.mxu0
    %v4143 = vadd.f32 %v3841, %v4125
    %v4144 = vadd.f32 %v3842, %v4130
    %v4145 = vadd.f32 %v3843, %v4135
    %v4146 = vadd.f32 %v3844, %v4140
    %4147 = vst.msk [vmem:[%s8] sm:$0xff] %vm153, %v4143
    %4148 = vst.msk [vmem:[%s8 + $0x8] sm:$0xff] %vm153, %v4144
    %4149 = vst.msk [vmem:[%s8 + $0x10] sm:$0xff] %vm153, %v4145
    %4150 = vst.msk [vmem:[%s8 + $0x18] sm:$0xff] %vm153, %v4146
    %s4151 = sadd.s32 0, 0
    %s4152 = smul.u32 64, %s4151
    %p4153 = scmp.lt.s32.totalorder %s4152, 63
    %s4154 = scalar_select %p4153, %s4152, 63
    %s4155 = smul.addr %s4154, 8
    %s4156 = scalar_lea.vmem %s4, %s4155
    %s4157 = sadd.s32 0, 0
    %s4158 = smul.u32 64, %s4157
    %p4159 = scmp.lt.s32.totalorder %s4158, 63
    %s4160 = scalar_select %p4159, %s4158, 63
    %s4161 = smul.addr %s4160, 8
    %s4162 = scalar_lea.vmem %s5, %s4161
    // Predicated region
    $region22: #{tpu_custom_call.1} parent=1 // pred_check
      _
    $region23: #{tpu_custom_call.1} parent=1 // pred_check_branch
      %4164 = sbr.rel (0) target = $region25
    $region24: #{tpu_custom_call.1} parent=1 // pred_region
      %s4165 = sadd.s32 0, 0
      %s4166 = smul.u32 64, %s4165
    $region25: #{tpu_custom_call.1} parent=1 // pred_fallthru
      _
    // Predicated region
    $region26: #{tpu_custom_call.1} parent=1 // pred_check
      _
    $region27: #{tpu_custom_call.1} parent=1 // pred_check_branch
      %4168 = sbr.rel (0) target = $region29
    $region28: #{tpu_custom_call.1} parent=1 // pred_region
      %s4169 = sadd.s32 0, 0
      %s4170 = smul.u32 64, %s4169
    $region29: #{tpu_custom_call.1} parent=1 // pred_fallthru
      _
    // Predicated region
    $region30: #{tpu_custom_call.1} parent=1 // pred_check
      _
    $region31: #{tpu_custom_call.1} parent=1 // pred_check_branch
      %4172 = sbr.rel (0) target = $region33
    $region32: #{tpu_custom_call.1} parent=1 // pred_region
      %s4174 = ssub.s32 16, 16
      %4175 = vsyncadd [#allocation3], %s4174
      %s4177 = sshll.u32 [#allocation2], 4
      %s4178 = int_to_ptr.vmem [resolvable:$true] %s4177
      %4180 = dma.vmem_to_hbm [thread:$0]  %s4178, 16, %s6, [#allocation3]
    $region33: #{tpu_custom_call.1} parent=1 // pred_fallthru
      _
    // Predicated region
    $region34: #{tpu_custom_call.1} parent=1 // pred_check
      _
    $region35: #{tpu_custom_call.1} parent=1 // pred_check_branch
      %4182 = sbr.rel (0) target = $region37
    $region36: #{tpu_custom_call.1} parent=1 // pred_region
      %s4184 = ssub.s32 16, 16
      %4185 = vsyncadd [#allocation5], %s4184
      %s4187 = sshll.u32 [#allocation4], 4
      %s4188 = int_to_ptr.vmem [resolvable:$true] %s4187
      %4190 = dma.vmem_to_hbm [thread:$0]  %s4188, 16, %s7, [#allocation5]
    $region37: #{tpu_custom_call.1} parent=1 // pred_fallthru
      _
    // Predicated region
    $region38: #{tpu_custom_call.1} parent=1 // pred_check
      _
    $region39: #{tpu_custom_call.1} parent=1 // pred_check_branch
      %4192 = sbr.rel (0) target = $region41
    $region40: #{tpu_custom_call.1} parent=1 // pred_region
      _
    $region41: #{tpu_custom_call.1} parent=1 // pred_fallthru
      _
    // Predicated region
    $region42: #{tpu_custom_call.1} parent=1 // pred_check
      _
    $region43: #{tpu_custom_call.1} parent=1 // pred_check_branch
      %4194 = sbr.rel (0) target = $region45
    $region44: #{tpu_custom_call.1} parent=1 // pred_region
      %s4195 = sadd.s32 0, 0
      %s4196 = smul.u32 64, %s4195
      %p4197 = scmp.lt.s32.totalorder %s4196, 63
      %s4198 = scalar_select %p4197, %s4196, 63
      %s4199 = smul.addr %s4198, 8
      %s4200 = scalar_lea.vmem %s4, %s4199
    $region45: #{tpu_custom_call.1} parent=1 // pred_fallthru
      _
    // Predicated region
    $region46: #{tpu_custom_call.1} parent=1 // pred_check
      _
    $region47: #{tpu_custom_call.1} parent=1 // pred_check_branch
      %4202 = sbr.rel (0) target = $region49
    $region48: #{tpu_custom_call.1} parent=1 // pred_region
      %s4203 = sadd.s32 0, 0
      %s4204 = smul.u32 64, %s4203
      %p4205 = scmp.lt.s32.totalorder %s4204, 63
      %s4206 = scalar_select %p4205, %s4204, 63
      %s4207 = smul.addr %s4206, 8
      %s4208 = scalar_lea.vmem %s5, %s4207
    $region49: #{tpu_custom_call.1} parent=1 // pred_fallthru
      _
    // Predicated region
    $region50: #{tpu_custom_call.1} parent=1 // pred_check
      _
    $region51: #{tpu_custom_call.1} parent=1 // pred_check_branch
      %4210 = sbr.rel (0) target = $region53
    $region52: #{tpu_custom_call.1} parent=1 // pred_region
      %4211 = dma.done [#allocation3], 16
    $region53: #{tpu_custom_call.1} parent=1 // pred_fallthru
      _
    // Predicated region
    $region54: #{tpu_custom_call.1} parent=1 // pred_check
      _
    $region55: #{tpu_custom_call.1} parent=1 // pred_check_branch
      %4213 = sbr.rel (0) target = $region57
    $region56: #{tpu_custom_call.1} parent=1 // pred_region
      %4214 = dma.done [#allocation5], 16
    $region57: #{tpu_custom_call.1} parent=1 // pred_fallthru
      _
    // Predicated region
    $region58: #{tpu_custom_call.1} parent=1 // pred_check
      _
    $region59: #{tpu_custom_call.1} parent=1 // pred_check_branch
      %4216 = sbr.rel (0) target = $region61
    $region60: #{tpu_custom_call.1} parent=1 // pred_region
      _
    $region61: #{tpu_custom_call.1} parent=1 // pred_fallthru
      _
    %4217 = vsyncpa [#allocation3], 1
    %4218 = vsyncpa [#allocation5], 1

</llo_original>
